<compile_context>
chip_gen: v6e
topology: v6e:2x2x1
jax: 0.10.0
libtpu: 0.0.40
codegen_flags: <defaults>
</compile_context>

<pallas_src>
import jax
import jax.numpy as jnp
from jax import lax
from jax.experimental import pallas as pl
from jax.experimental.pallas import tpu as pltpu

H = 128
W = 128
CIN = 3
CIN_PAD = 8              # channels padded to a full f32 sublane tile
COUT = 16
K = 3
HP = H + 2               # height padded for the 3x3 halo (conv padding=1)
LP = HP * W              # flattened padded plane length (16640 lanes)
HW = H * W               # 16384
KDIM = K * K * CIN_PAD   # 72 -- im2col contraction rows
TILE = 2048              # HW-tile width (16 image rows); conv tile = 32 vregs
TILE_H = TILE + 2 * W    # 2304 -- tile slice incl. the dy = +/-1 halo rows
NT = HW // TILE          # 8 tiles per image

assert W == 128, "roll+mask halo trick assumes full-lane-width rows (W == 128)"
assert TILE % W == 0 and HW % TILE == 0


def simple_cnn_kernel(wmat_ref, convb_ref, fcb_ref, x_ref, fcw_ref, out_ref,
                      patches_ref):
    # wmat_ref    : VMEM (COUT, KDIM)   bf16  conv weights, col = dx*24+dy*8+ci
    # convb_ref   : VMEM (COUT, 1)      f32   conv bias
    # fcb_ref     : SMEM (1,)           f32   fc bias
    # x_ref       : VMEM (B, 8, LP)     f32   H-padded, channel-padded images
    # fcw_ref     : VMEM (COUT, HW)     bf16  fc weight, (C, H*W) flatten order
    # out_ref     : VMEM (B, 1, W)      f32   per-image scalar, lane-broadcast
    # patches_ref : VMEM (KDIM, TILE)   bf16  per-tile im2col scratch
    n_imgs = x_ref.shape[0]

    # ---- hoisted once per grid step (shared by all B images / all tiles) ----
    col = lax.broadcasted_iota(jnp.int32, (CIN_PAD, TILE_H), 1) % W
    mask_l = col == 0          # invalid source column for dx = 0 (w-1 < 0)
    mask_r = col == W - 1      # invalid source column for dx = 2 (w+1 >= W)
    wmat = wmat_ref[...]       # (16, 72) bf16, lives in vregs
    convb = convb_ref[...]     # (16, 1) f32

    for img in range(n_imgs):

        def tile_body(t, acc):
            base = pl.multiple_of(t * TILE, TILE)          # lane-aligned start
            # Tile slice incl. dy halo: padded rows [base/W, base/W + 18).
            xs = x_ref[img, :, pl.ds(base, TILE_H)]        # (8, 2304) f32

            # --- build the 9 (dx, dy) slabs.  dx shift = lane roll + border
            # mask (the circular wrap lands exactly on the masked border
            # column, tile edges included, since TILE is a multiple of W);
            # dy offsets are static lane-aligned slices.
            slabs = []
            for dx in range(K):
                if dx == 1:
                    shifted = xs
                else:
                    shifted = jnp.roll(xs, 1 - dx, axis=1)
                    shifted = jnp.where(mask_l if dx == 0 else mask_r,
                                        0.0, shifted)
                for dy in range(K):
                    slabs.append(shifted[:, dy * W:dy * W + TILE])  # (8, TILE)

            # --- paired full-tile bf16 stores into the im2col scratch:
            # concat two 8-row f32 slabs (f32-native aligned) -> cast once ->
            # one unmasked (16, TILE) store.  4 pairs + 1 trailing half store.
            for p in range(4):
                pair = jnp.concatenate([slabs[2 * p], slabs[2 * p + 1]], axis=0)
                patches_ref[2 * p * CIN_PAD:(2 * p + 2) * CIN_PAD, :] = (
                    pair.astype(jnp.bfloat16))
            patches_ref[8 * CIN_PAD:9 * CIN_PAD, :] = (
                slabs[8].astype(jnp.bfloat16))

            # --- all 16 output channels for this tile in one MXU matmul
            conv = jnp.dot(wmat, patches_ref[...],
                           preferred_element_type=jnp.float32)  # (16, TILE) f32
            conv = jnp.maximum(conv + convb, 0.0)                # bias + ReLU

            # --- fused FC for this tile: bf16 weights upcast, f32 accumulate
            fcw_t = fcw_ref[:, pl.ds(base, TILE)].astype(jnp.float32)
            return acc + jnp.sum(conv * fcw_t, axis=1, keepdims=True)  # (16,1)

        acc = lax.fori_loop(0, NT, tile_body,
                            jnp.zeros((COUT, 1), jnp.float32))
        total = jnp.sum(acc, axis=0, keepdims=True) + fcb_ref[0]      # (1, 1)
        out_ref[img] = jnp.broadcast_to(total, (1, W))


def simple_cnn_forward(x, conv_w, conv_b, fc_w, fc_b):
    """x: (N, 3, 128, 128) f32. Returns (N, 1) f32, matching PyTorch forward."""
    n = x.shape[0]

    # Batch block: largest divisor of n among {4, 2, 1} (cap 4 for v7x's
    # 64 MiB VMEM; per-step working set stays ~7 MiB either way).
    B = 1
    for cand in (4, 2):
        if n % cand == 0:
            B = cand
            break

    # Pad H by 1 (conv padding) and channels 3 -> 8 (full f32 sublane tile),
    # then flatten (H+2, W) onto the lane axis.  W is NOT padded, so the lane
    # dim stays a multiple of 128.
    xh = jnp.pad(x.astype(jnp.float32),
                 ((0, 0), (0, CIN_PAD - CIN), (1, 1), (0, 0)))
    xh = xh.reshape(n, CIN_PAD, LP)

    # Conv weights -> (COUT, 72) bf16, column order (dx=kw, dy=kh, ci[->8]),
    # matching the im2col row order built in the kernel.
    wmat = jnp.transpose(conv_w.astype(jnp.float32), (0, 3, 2, 1))  # co,kw,kh,ci
    wmat = jnp.pad(wmat, ((0, 0), (0, 0), (0, 0), (0, CIN_PAD - CIN)))
    wmat = wmat.reshape(COUT, KDIM).astype(jnp.bfloat16)

    convb = conv_b.astype(jnp.float32).reshape(COUT, 1)
    fcw2 = fc_w.astype(jnp.float32).reshape(COUT, HW).astype(jnp.bfloat16)
    fcb = fc_b.astype(jnp.float32)

    out = pl.pallas_call(
        simple_cnn_kernel,
        out_shape=jax.ShapeDtypeStruct((n, 1, W), jnp.float32),
        grid=(n // B,),
        in_specs=[
            # grid-invariant blocks (constant index_map -> fetched once)
            pl.BlockSpec((COUT, KDIM), lambda b: (0, 0)),          # conv weights
            pl.BlockSpec((COUT, 1), lambda b: (0, 0)),             # conv bias
            pl.BlockSpec(memory_space=pltpu.MemorySpace.SMEM),     # fc bias
            pl.BlockSpec((B, CIN_PAD, LP), lambda b: (b, 0, 0)),   # B images
            pl.BlockSpec((COUT, HW), lambda b: (0, 0)),            # fc weights
        ],
        out_specs=pl.BlockSpec((B, 1, W), lambda b: (b, 0, 0)),
        scratch_shapes=[pltpu.VMEM((KDIM, TILE), jnp.bfloat16)],   # im2col tile
        compiler_params=pltpu.CompilerParams(
            dimension_semantics=("parallel",),     # v7x: shard batch on 2 TCs
            vmem_limit_bytes=32 * 1024 * 1024),
    )(wmat, convb, fcb, xh, fcw2)

    return out[:, 0, :1]                                           # (N, 1)


def reference_forward(x, conv_w, conv_b, fc_w, fc_b):
    """Pure-JAX reference mirroring the PyTorch module."""
    y = jax.lax.conv_general_dilated(
        x, conv_w, window_strides=(1, 1), padding=((1, 1), (1, 1)),
        dimension_numbers=("NCHW", "OIHW", "NCHW"))
    y = y + conv_b[None, :, None, None]
    y = jnp.maximum(y, 0.0)
    y = y.reshape(x.shape[0], -1)                                  # (N, C*H*W)
    return y @ fc_w.T + fc_b


if __name__ == "__main__":
    key = jax.random.PRNGKey(0)
    k1, k2, k3, k4, k5 = jax.random.split(key, 5)

    # Deterministic synthetic parameters (shapes from SimpleCNN.__init__).
    conv_w = jax.random.normal(k1, (COUT, CIN, K, K), jnp.float32) * 0.1
    conv_b = jax.random.normal(k2, (COUT,), jnp.float32) * 0.1
    fc_w = jax.random.normal(k3, (1, COUT * H * W), jnp.float32) * 1e-3
    fc_b = jax.random.normal(k4, (1,), jnp.float32) * 0.1

    # Input shape implied by the module (fc = 16*128*128): small batch of 2.
    x = jax.random.normal(k5, (2, CIN, H, W), jnp.float32)

    out = simple_cnn_forward(x, conv_w, conv_b, fc_w, fc_b)
    out = jax.block_until_ready(out)

    ref = reference_forward(x, conv_w, conv_b, fc_w, fc_b)
    assert out.shape == (2, 1), out.shape
    assert jnp.allclose(out, ref, atol=1e-2, rtol=1e-2), (out, ref)

    print("KERNEL_OK")
</pallas_src>

<mosaic_0001>
module attributes {stable_mosaic.version = 11 : i64} {
  func.func @simple_cnn_kernel(%arg0: i32, %arg1: memref<16x72xbf16, #tpu.memory_space<vmem>>, %arg2: memref<16x1xf32, #tpu.memory_space<vmem>>, %arg3: memref<1xf32, #tpu.memory_space<smem>>, %arg4: memref<2x8x16640xf32, #tpu.memory_space<vmem>>, %arg5: memref<16x16384xbf16, #tpu.memory_space<vmem>>, %arg6: memref<2x1x128xf32, #tpu.memory_space<vmem>>, %arg7: memref<72x2048xbf16, #tpu.memory_space<vmem>>) attributes {dimension_semantics = [#tpu.dimension_semantics<parallel>], iteration_bounds = array<i64: 1>, scalar_prefetch = 0 : i64, scratch_operands = 1 : i64, tpu.core_type = #tpu.core_type<tc>, window_params = [{pipeline_mode = #tpu.pipeline_mode<synchronous>, transform_indices = @transform_0, window_bounds = array<i64: 16, 72>}, {pipeline_mode = #tpu.pipeline_mode<synchronous>, transform_indices = @transform_1, window_bounds = array<i64: 16, 1>}, {transform_indices = @transform_2, window_bounds = array<i64: 1>}, {transform_indices = @transform_3, window_bounds = array<i64: 2, 8, 16640>}, {pipeline_mode = #tpu.pipeline_mode<synchronous>, transform_indices = @transform_4, window_bounds = array<i64: 16, 16384>}, {transform_indices = @transform_5, window_bounds = array<i64: 2, 1, 128>}]} {
    %0 = tpu.iota {dimensions = array<i32: 1>} : vector<8x2304xi32>
    %c128_i32 = arith.constant 128 : i32
    %c0_i32 = arith.constant 0 : i32
    %1 = arith.cmpi eq, %c128_i32, %c0_i32 : i32
    %c1_i32 = arith.constant 1 : i32
    %2 = arith.select %1, %c1_i32, %c128_i32 : i32
    %3 = vector.broadcast %2 : i32 to vector<8x2304xi32>
    %4 = arith.remsi %0, %3 : vector<8x2304xi32>
    %c0_i32_0 = arith.constant 0 : i32
    %5 = vector.broadcast %c0_i32_0 : i32 to vector<8x2304xi32>
    %6 = arith.cmpi ne, %4, %5 : vector<8x2304xi32>
    %c0_i32_1 = arith.constant 0 : i32
    %7 = vector.broadcast %c0_i32_1 : i32 to vector<8x2304xi32>
    %8 = arith.cmpi slt, %4, %7 : vector<8x2304xi32>
    %c0_i32_2 = arith.constant 0 : i32
    %9 = arith.cmpi slt, %2, %c0_i32_2 : i32
    %10 = vector.broadcast %9 : i1 to vector<8x2304xi1>
    %11 = vector.broadcast %10 : vector<8x2304xi1> to vector<8x2304xi1>
    %12 = arith.xori %8, %11 : vector<8x2304xi1>
    %13 = arith.andi %12, %6 : vector<8x2304xi1>
    %14 = vector.broadcast %2 : i32 to vector<8x2304xi32>
    %15 = arith.addi %4, %14 : vector<8x2304xi32>
    %16 = arith.select %13, %15, %4 : vector<8x2304xi1>, vector<8x2304xi32>
    %c0_i32_3 = arith.constant 0 : i32
    %17 = vector.broadcast %c0_i32_3 : i32 to vector<8x2304xi32>
    %18 = arith.cmpi eq, %16, %17 : vector<8x2304xi32>
    %c127_i32 = arith.constant 127 : i32
    %19 = vector.broadcast %c127_i32 : i32 to vector<8x2304xi32>
    %20 = arith.cmpi eq, %16, %19 : vector<8x2304xi32>
    %c0 = arith.constant 0 : index
    %c0_4 = arith.constant 0 : index
    %21 = vector.load %arg1[%c0, %c0_4] : memref<16x72xbf16, #tpu.memory_space<vmem>>, vector<16x72xbf16>
    %c0_5 = arith.constant 0 : index
    %c0_6 = arith.constant 0 : index
    %22 = vector.load %arg2[%c0_5, %c0_6] : memref<16x1xf32, #tpu.memory_space<vmem>>, vector<16x1xf32>
    %cst = arith.constant 0.000000e+00 : f32
    %23 = vector.broadcast %cst : f32 to vector<16x1xf32>
    %c0_i32_7 = arith.constant 0 : i32
    %c8_i32 = arith.constant 8 : i32
    %24 = arith.addi %c0_i32_7, %c8_i32 : i32
    %c1_i32_8 = arith.constant 1 : i32
    %25 = scf.for %arg8 = %c0_i32_7 to %24 step %c1_i32_8 iter_args(%arg9 = %23) -> (vector<16x1xf32>)  : i32 {
      %c2048_i32 = arith.constant 2048 : i32
      %49 = arith.muli %arg8, %c2048_i32 : i32
      %50 = tpu.assume_multiple %49, 2048 : i32
      %c0_24 = arith.constant 0 : index
      %c0_25 = arith.constant 0 : index
      %51 = arith.index_cast %50 : i32 to index
      %52 = vector.load %arg4[%c0_24, %c0_25, %51] : memref<2x8x16640xf32, #tpu.memory_space<vmem>>, vector<1x8x2304xf32>
      %53 = vector.shape_cast %52 : vector<1x8x2304xf32> to vector<8x2304xf32>
      %54 = vector.extract_strided_slice %53 {offsets = [0, 2303], sizes = [8, 1], strides = [1, 1]} : vector<8x2304xf32> to vector<8x1xf32>
      %55 = vector.extract_strided_slice %53 {offsets = [0, 0], sizes = [8, 2303], strides = [1, 1]} : vector<8x2304xf32> to vector<8x2303xf32>
      %56 = tpu.concatenate %54, %55 in 1 : vector<8x1xf32>, vector<8x2303xf32> -> vector<8x2304xf32>
      %cst_26 = arith.constant 0.000000e+00 : f32
      %57 = vector.broadcast %cst_26 : f32 to vector<8x2304xf32>
      %58 = arith.select %18, %57, %56 : vector<8x2304xi1>, vector<8x2304xf32>
      %59 = vector.extract_strided_slice %58 {offsets = [0, 0], sizes = [8, 2048], strides = [1, 1]} : vector<8x2304xf32> to vector<8x2048xf32>
      %60 = vector.extract_strided_slice %58 {offsets = [0, 128], sizes = [8, 2048], strides = [1, 1]} : vector<8x2304xf32> to vector<8x2048xf32>
      %61 = vector.extract_strided_slice %58 {offsets = [0, 256], sizes = [8, 2048], strides = [1, 1]} : vector<8x2304xf32> to vector<8x2048xf32>
      %62 = vector.extract_strided_slice %53 {offsets = [0, 0], sizes = [8, 2048], strides = [1, 1]} : vector<8x2304xf32> to vector<8x2048xf32>
      %63 = vector.extract_strided_slice %53 {offsets = [0, 128], sizes = [8, 2048], strides = [1, 1]} : vector<8x2304xf32> to vector<8x2048xf32>
      %64 = vector.extract_strided_slice %53 {offsets = [0, 256], sizes = [8, 2048], strides = [1, 1]} : vector<8x2304xf32> to vector<8x2048xf32>
      %65 = vector.extract_strided_slice %53 {offsets = [0, 1], sizes = [8, 2303], strides = [1, 1]} : vector<8x2304xf32> to vector<8x2303xf32>
      %66 = vector.extract_strided_slice %53 {offsets = [0, 0], sizes = [8, 1], strides = [1, 1]} : vector<8x2304xf32> to vector<8x1xf32>
      %67 = tpu.concatenate %65, %66 in 1 : vector<8x2303xf32>, vector<8x1xf32> -> vector<8x2304xf32>
      %cst_27 = arith.constant 0.000000e+00 : f32
      %68 = vector.broadcast %cst_27 : f32 to vector<8x2304xf32>
      %69 = arith.select %20, %68, %67 : vector<8x2304xi1>, vector<8x2304xf32>
      %70 = vector.extract_strided_slice %69 {offsets = [0, 0], sizes = [8, 2048], strides = [1, 1]} : vector<8x2304xf32> to vector<8x2048xf32>
      %71 = vector.extract_strided_slice %69 {offsets = [0, 128], sizes = [8, 2048], strides = [1, 1]} : vector<8x2304xf32> to vector<8x2048xf32>
      %72 = vector.extract_strided_slice %69 {offsets = [0, 256], sizes = [8, 2048], strides = [1, 1]} : vector<8x2304xf32> to vector<8x2048xf32>
      %73 = tpu.concatenate %59, %60 in 0 : vector<8x2048xf32>, vector<8x2048xf32> -> vector<16x2048xf32>
      %74 = arith.truncf %73 : vector<16x2048xf32> to vector<16x2048xbf16>
      %c0_28 = arith.constant 0 : index
      %c0_29 = arith.constant 0 : index
      %75 = vector.load %arg7[%c0_28, %c0_29] : memref<72x2048xbf16, #tpu.memory_space<vmem>>, vector<16x2048xbf16>
      tpu.vector_store %arg7[%c0_28, %c0_29], %74 {strides = array<i32>} : memref<72x2048xbf16, #tpu.memory_space<vmem>>, vector<16x2048xbf16>,
      %76 = tpu.concatenate %61, %62 in 0 : vector<8x2048xf32>, vector<8x2048xf32> -> vector<16x2048xf32>
      %77 = arith.truncf %76 : vector<16x2048xf32> to vector<16x2048xbf16>
      %c16 = arith.constant 16 : index
      %c0_30 = arith.constant 0 : index
      %78 = vector.load %arg7[%c16, %c0_30] : memref<72x2048xbf16, #tpu.memory_space<vmem>>, vector<16x2048xbf16>
      tpu.vector_store %arg7[%c16, %c0_30], %77 {strides = array<i32>} : memref<72x2048xbf16, #tpu.memory_space<vmem>>, vector<16x2048xbf16>,
      %79 = tpu.concatenate %63, %64 in 0 : vector<8x2048xf32>, vector<8x2048xf32> -> vector<16x2048xf32>
      %80 = arith.truncf %79 : vector<16x2048xf32> to vector<16x2048xbf16>
      %c32 = arith.constant 32 : index
      %c0_31 = arith.constant 0 : index
      %81 = vector.load %arg7[%c32, %c0_31] : memref<72x2048xbf16, #tpu.memory_space<vmem>>, vector<16x2048xbf16>
      tpu.vector_store %arg7[%c32, %c0_31], %80 {strides = array<i32>} : memref<72x2048xbf16, #tpu.memory_space<vmem>>, vector<16x2048xbf16>,
      %82 = tpu.concatenate %70, %71 in 0 : vector<8x2048xf32>, vector<8x2048xf32> -> vector<16x2048xf32>
      %83 = arith.truncf %82 : vector<16x2048xf32> to vector<16x2048xbf16>
      %c48 = arith.constant 48 : index
      %c0_32 = arith.constant 0 : index
      %84 = vector.load %arg7[%c48, %c0_32] : memref<72x2048xbf16, #tpu.memory_space<vmem>>, vector<16x2048xbf16>
      tpu.vector_store %arg7[%c48, %c0_32], %83 {strides = array<i32>} : memref<72x2048xbf16, #tpu.memory_space<vmem>>, vector<16x2048xbf16>,
      %85 = arith.truncf %72 : vector<8x2048xf32> to vector<8x2048xbf16>
      %c64 = arith.constant 64 : index
      %c0_33 = arith.constant 0 : index
      %86 = vector.load %arg7[%c64, %c0_33] : memref<72x2048xbf16, #tpu.memory_space<vmem>>, vector<8x2048xbf16>
      tpu.vector_store %arg7[%c64, %c0_33], %85 {strides = array<i32>} : memref<72x2048xbf16, #tpu.memory_space<vmem>>, vector<8x2048xbf16>,
      %c0_34 = arith.constant 0 : index
      %c0_35 = arith.constant 0 : index
      %87 = vector.load %arg7[%c0_34, %c0_35] : memref<72x2048xbf16, #tpu.memory_space<vmem>>, vector<72x2048xbf16>
      %cst_36 = arith.constant dense<0.000000e+00> : vector<16x2048xf32>
      %88 = tpu.matmul %21, %87, %cst_36 {dimension_numbers = #tpu.dot_dimension_numbers<[1], [0], [0], [1], [0, 0, 1, 1], [], []>} : vector<16x72xbf16>, vector<72x2048xbf16>, vector<16x2048xf32> -> vector<16x2048xf32>
      %89 = vector.broadcast %22 : vector<16x1xf32> to vector<16x2048xf32>
      %90 = arith.addf %88, %89 : vector<16x2048xf32>
      %cst_37 = arith.constant 0.000000e+00 : f32
      %91 = vector.broadcast %cst_37 : f32 to vector<16x2048xf32>
      %92 = arith.maximumf %90, %91 : vector<16x2048xf32>
      %c0_38 = arith.constant 0 : index
      %93 = arith.index_cast %50 : i32 to index
      %94 = vector.load %arg5[%c0_38, %93] : memref<16x16384xbf16, #tpu.memory_space<vmem>>, vector<16x2048xbf16>
      %95 = arith.extf %94 : vector<16x2048xbf16> to vector<16x2048xf32>
      %96 = arith.mulf %92, %95 : vector<16x2048xf32>
      %cst_39 = arith.constant dense<0.000000e+00> : vector<16xf32>
      %97 = vector.multi_reduction <add>, %96, %cst_39 [1] : vector<16x2048xf32> to vector<16xf32>
      %98 = vector.shape_cast %97 : vector<16xf32> to vector<16x1xf32>
      %99 = arith.addf %arg9, %98 : vector<16x1xf32>
      scf.yield %99 : vector<16x1xf32>
    }
    %c8_i32_9 = arith.constant 8 : i32
    %cst_10 = arith.constant dense<0.000000e+00> : vector<1xf32>
    %26 = vector.multi_reduction <add>, %25, %cst_10 [0] : vector<16x1xf32> to vector<1xf32>
    %27 = vector.shape_cast %26 : vector<1xf32> to vector<1x1xf32>
    %c0_11 = arith.constant 0 : index
    %28 = memref.load %arg3[%c0_11] : memref<1xf32, #tpu.memory_space<smem>>
    %29 = vector.broadcast %28 : f32 to vector<1x1xf32>
    %30 = arith.addf %27, %29 : vector<1x1xf32>
    %31 = vector.shape_cast %30 : vector<1x1xf32> to vector<1x1xf32>
    %32 = vector.broadcast %31 : vector<1x1xf32> to vector<1x128xf32>
    %c0_12 = arith.constant 0 : index
    %c0_13 = arith.constant 0 : index
    %c0_14 = arith.constant 0 : index
    %33 = vector.load %arg6[%c0_12, %c0_13, %c0_14] : memref<2x1x128xf32, #tpu.memory_space<vmem>>, vector<1x1x128xf32>
    %34 = vector.shape_cast %33 : vector<1x1x128xf32> to vector<1x128xf32>
    %35 = vector.shape_cast %32 : vector<1x128xf32> to vector<1x1x128xf32>
    tpu.vector_store %arg6[%c0_12, %c0_13, %c0_14], %35 {strides = array<i32>} : memref<2x1x128xf32, #tpu.memory_space<vmem>>, vector<1x1x128xf32>,
    %cst_15 = arith.constant 0.000000e+00 : f32
    %36 = vector.broadcast %cst_15 : f32 to vector<16x1xf32>
    %c0_i32_16 = arith.constant 0 : i32
    %c8_i32_17 = arith.constant 8 : i32
    %37 = arith.addi %c0_i32_16, %c8_i32_17 : i32
    %c1_i32_18 = arith.constant 1 : i32
    %38 = scf.for %arg8 = %c0_i32_16 to %37 step %c1_i32_18 iter_args(%arg9 = %36) -> (vector<16x1xf32>)  : i32 {
      %c2048_i32 = arith.constant 2048 : i32
      %49 = arith.muli %arg8, %c2048_i32 : i32
      %50 = tpu.assume_multiple %49, 2048 : i32
      %c1_24 = arith.constant 1 : index
      %c0_25 = arith.constant 0 : index
      %51 = arith.index_cast %50 : i32 to index
      %52 = vector.load %arg4[%c1_24, %c0_25, %51] : memref<2x8x16640xf32, #tpu.memory_space<vmem>>, vector<1x8x2304xf32>
      %53 = vector.shape_cast %52 : vector<1x8x2304xf32> to vector<8x2304xf32>
      %54 = vector.extract_strided_slice %53 {offsets = [0, 2303], sizes = [8, 1], strides = [1, 1]} : vector<8x2304xf32> to vector<8x1xf32>
      %55 = vector.extract_strided_slice %53 {offsets = [0, 0], sizes = [8, 2303], strides = [1, 1]} : vector<8x2304xf32> to vector<8x2303xf32>
      %56 = tpu.concatenate %54, %55 in 1 : vector<8x1xf32>, vector<8x2303xf32> -> vector<8x2304xf32>
      %cst_26 = arith.constant 0.000000e+00 : f32
      %57 = vector.broadcast %cst_26 : f32 to vector<8x2304xf32>
      %58 = arith.select %18, %57, %56 : vector<8x2304xi1>, vector<8x2304xf32>
      %59 = vector.extract_strided_slice %58 {offsets = [0, 0], sizes = [8, 2048], strides = [1, 1]} : vector<8x2304xf32> to vector<8x2048xf32>
      %60 = vector.extract_strided_slice %58 {offsets = [0, 128], sizes = [8, 2048], strides = [1, 1]} : vector<8x2304xf32> to vector<8x2048xf32>
      %61 = vector.extract_strided_slice %58 {offsets = [0, 256], sizes = [8, 2048], strides = [1, 1]} : vector<8x2304xf32> to vector<8x2048xf32>
      %62 = vector.extract_strided_slice %53 {offsets = [0, 0], sizes = [8, 2048], strides = [1, 1]} : vector<8x2304xf32> to vector<8x2048xf32>
      %63 = vector.extract_strided_slice %53 {offsets = [0, 128], sizes = [8, 2048], strides = [1, 1]} : vector<8x2304xf32> to vector<8x2048xf32>
      %64 = vector.extract_strided_slice %53 {offsets = [0, 256], sizes = [8, 2048], strides = [1, 1]} : vector<8x2304xf32> to vector<8x2048xf32>
      %65 = vector.extract_strided_slice %53 {offsets = [0, 1], sizes = [8, 2303], strides = [1, 1]} : vector<8x2304xf32> to vector<8x2303xf32>
      %66 = vector.extract_strided_slice %53 {offsets = [0, 0], sizes = [8, 1], strides = [1, 1]} : vector<8x2304xf32> to vector<8x1xf32>
      %67 = tpu.concatenate %65, %66 in 1 : vector<8x2303xf32>, vector<8x1xf32> -> vector<8x2304xf32>
      %cst_27 = arith.constant 0.000000e+00 : f32
      %68 = vector.broadcast %cst_27 : f32 to vector<8x2304xf32>
      %69 = arith.select %20, %68, %67 : vector<8x2304xi1>, vector<8x2304xf32>
      %70 = vector.extract_strided_slice %69 {offsets = [0, 0], sizes = [8, 2048], strides = [1, 1]} : vector<8x2304xf32> to vector<8x2048xf32>
      %71 = vector.extract_strided_slice %69 {offsets = [0, 128], sizes = [8, 2048], strides = [1, 1]} : vector<8x2304xf32> to vector<8x2048xf32>
      %72 = vector.extract_strided_slice %69 {offsets = [0, 256], sizes = [8, 2048], strides = [1, 1]} : vector<8x2304xf32> to vector<8x2048xf32>
      %73 = tpu.concatenate %59, %60 in 0 : vector<8x2048xf32>, vector<8x2048xf32> -> vector<16x2048xf32>
      %74 = arith.truncf %73 : vector<16x2048xf32> to vector<16x2048xbf16>
      %c0_28 = arith.constant 0 : index
      %c0_29 = arith.constant 0 : index
      %75 = vector.load %arg7[%c0_28, %c0_29] : memref<72x2048xbf16, #tpu.memory_space<vmem>>, vector<16x2048xbf16>
      tpu.vector_store %arg7[%c0_28, %c0_29], %74 {strides = array<i32>} : memref<72x2048xbf16, #tpu.memory_space<vmem>>, vector<16x2048xbf16>,
      %76 = tpu.concatenate %61, %62 in 0 : vector<8x2048xf32>, vector<8x2048xf32> -> vector<16x2048xf32>
      %77 = arith.truncf %76 : vector<16x2048xf32> to vector<16x2048xbf16>
      %c16 = arith.constant 16 : index
      %c0_30 = arith.constant 0 : index
      %78 = vector.load %arg7[%c16, %c0_30] : memref<72x2048xbf16, #tpu.memory_space<vmem>>, vector<16x2048xbf16>
      tpu.vector_store %arg7[%c16, %c0_30], %77 {strides = array<i32>} : memref<72x2048xbf16, #tpu.memory_space<vmem>>, vector<16x2048xbf16>,
      %79 = tpu.concatenate %63, %64 in 0 : vector<8x2048xf32>, vector<8x2048xf32> -> vector<16x2048xf32>
      %80 = arith.truncf %79 : vector<16x2048xf32> to vector<16x2048xbf16>
      %c32 = arith.constant 32 : index
      %c0_31 = arith.constant 0 : index
      %81 = vector.load %arg7[%c32, %c0_31] : memref<72x2048xbf16, #tpu.memory_space<vmem>>, vector<16x2048xbf16>
      tpu.vector_store %arg7[%c32, %c0_31], %80 {strides = array<i32>} : memref<72x2048xbf16, #tpu.memory_space<vmem>>, vector<16x2048xbf16>,
      %82 = tpu.concatenate %70, %71 in 0 : vector<8x2048xf32>, vector<8x2048xf32> -> vector<16x2048xf32>
      %83 = arith.truncf %82 : vector<16x2048xf32> to vector<16x2048xbf16>
      %c48 = arith.constant 48 : index
      %c0_32 = arith.constant 0 : index
      %84 = vector.load %arg7[%c48, %c0_32] : memref<72x2048xbf16, #tpu.memory_space<vmem>>, vector<16x2048xbf16>
      tpu.vector_store %arg7[%c48, %c0_32], %83 {strides = array<i32>} : memref<72x2048xbf16, #tpu.memory_space<vmem>>, vector<16x2048xbf16>,
      %85 = arith.truncf %72 : vector<8x2048xf32> to vector<8x2048xbf16>
      %c64 = arith.constant 64 : index
      %c0_33 = arith.constant 0 : index
      %86 = vector.load %arg7[%c64, %c0_33] : memref<72x2048xbf16, #tpu.memory_space<vmem>>, vector<8x2048xbf16>
      tpu.vector_store %arg7[%c64, %c0_33], %85 {strides = array<i32>} : memref<72x2048xbf16, #tpu.memory_space<vmem>>, vector<8x2048xbf16>,
      %c0_34 = arith.constant 0 : index
      %c0_35 = arith.constant 0 : index
      %87 = vector.load %arg7[%c0_34, %c0_35] : memref<72x2048xbf16, #tpu.memory_space<vmem>>, vector<72x2048xbf16>
      %cst_36 = arith.constant dense<0.000000e+00> : vector<16x2048xf32>
      %88 = tpu.matmul %21, %87, %cst_36 {dimension_numbers = #tpu.dot_dimension_numbers<[1], [0], [0], [1], [0, 0, 1, 1], [], []>} : vector<16x72xbf16>, vector<72x2048xbf16>, vector<16x2048xf32> -> vector<16x2048xf32>
      %89 = vector.broadcast %22 : vector<16x1xf32> to vector<16x2048xf32>
      %90 = arith.addf %88, %89 : vector<16x2048xf32>
      %cst_37 = arith.constant 0.000000e+00 : f32
      %91 = vector.broadcast %cst_37 : f32 to vector<16x2048xf32>
      %92 = arith.maximumf %90, %91 : vector<16x2048xf32>
      %c0_38 = arith.constant 0 : index
      %93 = arith.index_cast %50 : i32 to index
      %94 = vector.load %arg5[%c0_38, %93] : memref<16x16384xbf16, #tpu.memory_space<vmem>>, vector<16x2048xbf16>
      %95 = arith.extf %94 : vector<16x2048xbf16> to vector<16x2048xf32>
      %96 = arith.mulf %92, %95 : vector<16x2048xf32>
      %cst_39 = arith.constant dense<0.000000e+00> : vector<16xf32>
      %97 = vector.multi_reduction <add>, %96, %cst_39 [1] : vector<16x2048xf32> to vector<16xf32>
      %98 = vector.shape_cast %97 : vector<16xf32> to vector<16x1xf32>
      %99 = arith.addf %arg9, %98 : vector<16x1xf32>
      scf.yield %99 : vector<16x1xf32>
    }
    %c8_i32_19 = arith.constant 8 : i32
    %cst_20 = arith.constant dense<0.000000e+00> : vector<1xf32>
    %39 = vector.multi_reduction <add>, %38, %cst_20 [0] : vector<16x1xf32> to vector<1xf32>
    %40 = vector.shape_cast %39 : vector<1xf32> to vector<1x1xf32>
    %c0_21 = arith.constant 0 : index
    %41 = memref.load %arg3[%c0_21] : memref<1xf32, #tpu.memory_space<smem>>
    %42 = vector.broadcast %41 : f32 to vector<1x1xf32>
    %43 = arith.addf %40, %42 : vector<1x1xf32>
    %44 = vector.shape_cast %43 : vector<1x1xf32> to vector<1x1xf32>
    %45 = vector.broadcast %44 : vector<1x1xf32> to vector<1x128xf32>
    %c1 = arith.constant 1 : index
    %c0_22 = arith.constant 0 : index
    %c0_23 = arith.constant 0 : index
    %46 = vector.load %arg6[%c1, %c0_22, %c0_23] : memref<2x1x128xf32, #tpu.memory_space<vmem>>, vector<1x1x128xf32>
    %47 = vector.shape_cast %46 : vector<1x1x128xf32> to vector<1x128xf32>
    %48 = vector.shape_cast %45 : vector<1x128xf32> to vector<1x1x128xf32>
    tpu.vector_store %arg6[%c1, %c0_22, %c0_23], %48 {strides = array<i32>} : memref<2x1x128xf32, #tpu.memory_space<vmem>>, vector<1x1x128xf32>,
    return
  }
  func.func @transform_0(%arg0: i32) -> (i32, i32) {
    %c0_i32 = arith.constant 0 : i32
    %c0_i32_0 = arith.constant 0 : i32
    %c0_i32_1 = arith.constant 0 : i32
    return %c0_i32, %c0_i32_0 : i32, i32
  }
  func.func @transform_1(%arg0: i32) -> (i32, i32) {
    %c0_i32 = arith.constant 0 : i32
    %c0_i32_0 = arith.constant 0 : i32
    %c0_i32_1 = arith.constant 0 : i32
    return %c0_i32, %c0_i32_0 : i32, i32
  }
  func.func @transform_2(%arg0: i32) -> i32 {
    %c0_i32 = arith.constant 0 : i32
    %c0_i32_0 = arith.constant 0 : i32
    return %c0_i32 : i32
  }
  func.func @transform_3(%arg0: i32) -> (i32, i32, i32) {
    %c0_i32 = arith.constant 0 : i32
    %c0_i32_0 = arith.constant 0 : i32
    %c0_i32_1 = arith.constant 0 : i32
    return %arg0, %c0_i32, %c0_i32_0 : i32, i32, i32
  }
  func.func @transform_4(%arg0: i32) -> (i32, i32) {
    %c0_i32 = arith.constant 0 : i32
    %c0_i32_0 = arith.constant 0 : i32
    %c0_i32_1 = arith.constant 0 : i32
    return %c0_i32, %c0_i32_0 : i32, i32
  }
  func.func @transform_5(%arg0: i32) -> (i32, i32, i32) {
    %c0_i32 = arith.constant 0 : i32
    %c0_i32_0 = arith.constant 0 : i32
    %c0_i32_1 = arith.constant 0 : i32
    return %arg0, %c0_i32, %c0_i32_0 : i32, i32, i32
  }
}

</mosaic_0001>

<llo_original>
// kernel: tpu_custom_call.1
$region0: #{tpu_custom_call.1}
  #allocation0 [shape = 'u32[]', space=smem, size = 0x4, offset = 0x4, fixed_abs, tag = 'smem constant byte address 0x4 - core index']
  #allocation1 [shape = 'u32[144,128]{1,0:T(1,128)}', space=vmem, size = 0x12000, scoped, tag = 'internal scratch']
  #allocation2 [shape = 'bf16[72,2048]{1,0:T(8,128)(2,1)}', space=vmem, size = 0x48000, scoped, tag = 'scratch operand']
  #allocation3 [shape = 'f32[1]{0:T(128)S(6)}', space=smem, size = 0x200, scoped, tag = 'scoped memory for tpu_custom_call.1']
  %s0 = inlined_call_operand.hbm [shape: bf16[16,72], index: 0, kind: input, shape index: {}]
  %s1 = inlined_call_operand.vmem [shape: f32[16,1], index: 1, kind: input, shape index: {}]
  %s2 = inlined_call_operand.<no memory space> [shape: f32[1], index: 2, kind: input, shape index: {}]
  %s3 = inlined_call_operand.hbm [shape: f32[2,8,16640], index: 3, kind: input, shape index: {}]
  %s4 = inlined_call_operand.hbm [shape: bf16[16,16384], index: 4, kind: input, shape index: {}]
  %s5 = inlined_call_operand.hbm [shape: f32[2,1,128], index: 5, kind: output, shape index: {}]
  %s6 = sld [smem:[#allocation0]]
  $region56: #{tpu_custom_call.1} parent=0
    _
  %s8 = ssub.s32 1, %s6
  %s9 = scalar_select 0, %s8, %s6
  %10 = sst [smem:[#allocation3]] %s2
  $region1: #{tpu_custom_call.1} parent=0
    #allocation4 [shape = 'u8[4096]{0}', space=vmem, size = 0x1000, scoped, tag = 'input window, operand 0, single buffered']
    #allocation5 [shape = 's32[1]{0}', space=sflag, size = 0x4, scoped, tag = 'scoped memory for tpu_custom_call.1']
    #allocation6 [shape = 's32[1]{0}', space=sflag, size = 0x4, scoped, tag = 'scoped memory for tpu_custom_call.1']
    #allocation7 [shape = 'u8[1064960]{0}', space=vmem, size = 0x104000, scoped, tag = 'input window, operand 3, single buffered']
    #allocation8 [shape = 's32[1]{0}', space=sflag, size = 0x4, scoped, tag = 'scoped memory for tpu_custom_call.1']
    #allocation9 [shape = 'u8[524288]{0}', space=vmem, size = 0x80000, scoped, tag = 'input window, operand 4, single buffered']
    #allocation10 [shape = 'u8[1024]{0}', space=vmem, size = 0x400, scoped, tag = 'output window, operand 0, single buffered']
    %11 = vsyncpa [#allocation5], 0
    %12 = vsyncpa [#allocation8], 0
    %13 = vsyncpa [#allocation6], 0
    // Predicated region
    $region2: #{tpu_custom_call.1} parent=1 // pred_check
      _
    $region3: #{tpu_custom_call.1} parent=1 // pred_check_branch
      %15 = sbr.rel (0) target = $region5
    $region4: #{tpu_custom_call.1} parent=1 // pred_region
      %s17 = ssub.s32 128, 128
      %18 = vsyncadd [#allocation5], %s17
      %s19 = sshll.u32 [#allocation4], 4
      %s20 = int_to_ptr.vmem [resolvable:$true] %s19
      %25 = dma.hbm_to_vmem [thread:$0]  %s0, 128, %s20, [#allocation5], 64, 64, 4
    $region5: #{tpu_custom_call.1} parent=1 // pred_fallthru
      _
    // Predicated region
    $region6: #{tpu_custom_call.1} parent=1 // pred_check
      _
    $region7: #{tpu_custom_call.1} parent=1 // pred_check_branch
      %27 = sbr.rel (0) target = $region9
    $region8: #{tpu_custom_call.1} parent=1 // pred_region
      _
    $region9: #{tpu_custom_call.1} parent=1 // pred_fallthru
      _
    // Predicated region
    $region10: #{tpu_custom_call.1} parent=1 // pred_check
      _
    $region11: #{tpu_custom_call.1} parent=1 // pred_check_branch
      %29 = sbr.rel (0) target = $region13
    $region12: #{tpu_custom_call.1} parent=1 // pred_region
      _
    $region13: #{tpu_custom_call.1} parent=1 // pred_fallthru
      _
    // Predicated region
    $region14: #{tpu_custom_call.1} parent=1 // pred_check
      _
    $region15: #{tpu_custom_call.1} parent=1 // pred_check_branch
      %31 = sbr.rel (0) target = $region17
    $region16: #{tpu_custom_call.1} parent=1 // pred_region
      %s33 = ssub.s32 33280, 33280
      %34 = vsyncadd [#allocation8], %s33
      %s35 = sshll.u32 [#allocation7], 4
      %s36 = int_to_ptr.vmem [resolvable:$true] %s35
      %41 = dma.hbm_to_vmem [thread:$0]  %s3, 33280, %s36, [#allocation8], 16640, 16640, 1040
    $region17: #{tpu_custom_call.1} parent=1 // pred_fallthru
      _
    // Predicated region
    $region18: #{tpu_custom_call.1} parent=1 // pred_check
      _
    $region19: #{tpu_custom_call.1} parent=1 // pred_check_branch
      %43 = sbr.rel (0) target = $region21
    $region20: #{tpu_custom_call.1} parent=1 // pred_region
      %s45 = ssub.s32 16384, 16384
      %46 = vsyncadd [#allocation8], %s45
      %s47 = sshll.u32 [#allocation9], 4
      %s48 = int_to_ptr.vmem [resolvable:$true] %s47
      %53 = dma.hbm_to_vmem [thread:$0]  %s4, 16384, %s48, [#allocation8], 8192, 8192, 512
    $region21: #{tpu_custom_call.1} parent=1 // pred_fallthru
      _
    // Predicated region
    $region22: #{tpu_custom_call.1} parent=1 // pred_check
      _
    $region23: #{tpu_custom_call.1} parent=1 // pred_check_branch
      %55 = sbr.rel (0) target = $region25
    $region24: #{tpu_custom_call.1} parent=1 // pred_region
      %56 = dma.done [#allocation5], 128
    $region25: #{tpu_custom_call.1} parent=1 // pred_fallthru
      _
    // Predicated region
    $region26: #{tpu_custom_call.1} parent=1 // pred_check
      _
    $region27: #{tpu_custom_call.1} parent=1 // pred_check_branch
      %58 = sbr.rel (0) target = $region29
    $region28: #{tpu_custom_call.1} parent=1 // pred_region
      %59 = dma.done [#allocation8], 33280
    $region29: #{tpu_custom_call.1} parent=1 // pred_fallthru
      _
    // Predicated region
    $region30: #{tpu_custom_call.1} parent=1 // pred_check
      _
    $region31: #{tpu_custom_call.1} parent=1 // pred_check_branch
      %61 = sbr.rel (0) target = $region33
    $region32: #{tpu_custom_call.1} parent=1 // pred_region
      %62 = dma.done [#allocation8], 16384
    $region33: #{tpu_custom_call.1} parent=1 // pred_fallthru
      _
    %v64 = vlaneseq
    %v65 = vand.u32 %v64, 127
    %v66 = vadd.s32 %v65, 128
    %v67 = vadd.s32 %v65, 256
    %v68 = vadd.s32 %v65, 384
    %v69 = vadd.s32 %v65, 512
    %v70 = vadd.s32 %v65, 640
    %v71 = vadd.s32 %v65, 768
    %v72 = vadd.s32 %v65, 896
    %v73 = vadd.s32 %v65, 1024
    %v74 = vadd.s32 %v65, 1152
    %v75 = vadd.s32 %v65, 1280
    %v76 = vadd.s32 %v65, 1408
    %v77 = vadd.s32 %v65, 1536
    %v78 = vadd.s32 %v65, 1664
    %v79 = vadd.s32 %v65, 1792
    %v80 = vadd.s32 %v65, 1920
    %v81 = vadd.s32 %v65, 2048
    %v82 = vadd.s32 %v65, 2176
    %vm83 = vcmp.lt.s32.totalorder %v65, 0
    %v84 = vsub.s32 0, %v65
    %v85 = vsel %vm83, %v84, %v65
    %v86 = vshrl.u32 %v85, 7
    %v87 = vand.u32 %v85, 127
    %v88 = vsub.s32 0, %v87
    %v89 = vsel %vm83, %v88, %v87
    %vm90 = vcmp.lt.s32.totalorder %v66, 0
    %v91 = vsub.s32 0, %v66
    %v92 = vsel %vm90, %v91, %v66
    %v93 = vshrl.u32 %v92, 7
    %v94 = vand.u32 %v92, 127
    %v95 = vsub.s32 0, %v94
    %v96 = vsel %vm90, %v95, %v94
    %vm97 = vcmp.lt.s32.totalorder %v67, 0
    %v98 = vsub.s32 0, %v67
    %v99 = vsel %vm97, %v98, %v67
    %v100 = vshrl.u32 %v99, 7
    %v101 = vand.u32 %v99, 127
    %v102 = vsub.s32 0, %v101
    %v103 = vsel %vm97, %v102, %v101
    %vm104 = vcmp.lt.s32.totalorder %v68, 0
    %v105 = vsub.s32 0, %v68
    %v106 = vsel %vm104, %v105, %v68
    %v107 = vshrl.u32 %v106, 7
    %v108 = vand.u32 %v106, 127
    %v109 = vsub.s32 0, %v108
    %v110 = vsel %vm104, %v109, %v108
    %vm111 = vcmp.lt.s32.totalorder %v69, 0
    %v112 = vsub.s32 0, %v69
    %v113 = vsel %vm111, %v112, %v69
    %v114 = vshrl.u32 %v113, 7
    %v115 = vand.u32 %v113, 127
    %v116 = vsub.s32 0, %v115
    %v117 = vsel %vm111, %v116, %v115
    %vm118 = vcmp.lt.s32.totalorder %v70, 0
    %v119 = vsub.s32 0, %v70
    %v120 = vsel %vm118, %v119, %v70
    %v121 = vshrl.u32 %v120, 7
    %v122 = vand.u32 %v120, 127
    %v123 = vsub.s32 0, %v122
    %v124 = vsel %vm118, %v123, %v122
    %vm125 = vcmp.lt.s32.totalorder %v71, 0
    %v126 = vsub.s32 0, %v71
    %v127 = vsel %vm125, %v126, %v71
    %v128 = vshrl.u32 %v127, 7
    %v129 = vand.u32 %v127, 127
    %v130 = vsub.s32 0, %v129
    %v131 = vsel %vm125, %v130, %v129
    %vm132 = vcmp.lt.s32.totalorder %v72, 0
    %v133 = vsub.s32 0, %v72
    %v134 = vsel %vm132, %v133, %v72
    %v135 = vshrl.u32 %v134, 7
    %v136 = vand.u32 %v134, 127
    %v137 = vsub.s32 0, %v136
    %v138 = vsel %vm132, %v137, %v136
    %vm139 = vcmp.lt.s32.totalorder %v73, 0
    %v140 = vsub.s32 0, %v73
    %v141 = vsel %vm139, %v140, %v73
    %v142 = vshrl.u32 %v141, 7
    %v143 = vand.u32 %v141, 127
    %v144 = vsub.s32 0, %v143
    %v145 = vsel %vm139, %v144, %v143
    %vm146 = vcmp.lt.s32.totalorder %v74, 0
    %v147 = vsub.s32 0, %v74
    %v148 = vsel %vm146, %v147, %v74
    %v149 = vshrl.u32 %v148, 7
    %v150 = vand.u32 %v148, 127
    %v151 = vsub.s32 0, %v150
    %v152 = vsel %vm146, %v151, %v150
    %vm153 = vcmp.lt.s32.totalorder %v75, 0
    %v154 = vsub.s32 0, %v75
    %v155 = vsel %vm153, %v154, %v75
    %v156 = vshrl.u32 %v155, 7
    %v157 = vand.u32 %v155, 127
    %v158 = vsub.s32 0, %v157
    %v159 = vsel %vm153, %v158, %v157
    %vm160 = vcmp.lt.s32.totalorder %v76, 0
    %v161 = vsub.s32 0, %v76
    %v162 = vsel %vm160, %v161, %v76
    %v163 = vshrl.u32 %v162, 7
    %v164 = vand.u32 %v162, 127
    %v165 = vsub.s32 0, %v164
    %v166 = vsel %vm160, %v165, %v164
    %vm167 = vcmp.lt.s32.totalorder %v77, 0
    %v168 = vsub.s32 0, %v77
    %v169 = vsel %vm167, %v168, %v77
    %v170 = vshrl.u32 %v169, 7
    %v171 = vand.u32 %v169, 127
    %v172 = vsub.s32 0, %v171
    %v173 = vsel %vm167, %v172, %v171
    %vm174 = vcmp.lt.s32.totalorder %v78, 0
    %v175 = vsub.s32 0, %v78
    %v176 = vsel %vm174, %v175, %v78
    %v177 = vshrl.u32 %v176, 7
    %v178 = vand.u32 %v176, 127
    %v179 = vsub.s32 0, %v178
    %v180 = vsel %vm174, %v179, %v178
    %vm181 = vcmp.lt.s32.totalorder %v79, 0
    %v182 = vsub.s32 0, %v79
    %v183 = vsel %vm181, %v182, %v79
    %v184 = vshrl.u32 %v183, 7
    %v185 = vand.u32 %v183, 127
    %v186 = vsub.s32 0, %v185
    %v187 = vsel %vm181, %v186, %v185
    %vm188 = vcmp.lt.s32.totalorder %v80, 0
    %v189 = vsub.s32 0, %v80
    %v190 = vsel %vm188, %v189, %v80
    %v191 = vshrl.u32 %v190, 7
    %v192 = vand.u32 %v190, 127
    %v193 = vsub.s32 0, %v192
    %v194 = vsel %vm188, %v193, %v192
    %vm195 = vcmp.lt.s32.totalorder %v81, 0
    %v196 = vsub.s32 0, %v81
    %v197 = vsel %vm195, %v196, %v81
    %v198 = vshrl.u32 %v197, 7
    %v199 = vand.u32 %v197, 127
    %v200 = vsub.s32 0, %v199
    %v201 = vsel %vm195, %v200, %v199
    %vm202 = vcmp.lt.s32.totalorder %v82, 0
    %v203 = vsub.s32 0, %v82
    %v204 = vsel %vm202, %v203, %v82
    %v205 = vshrl.u32 %v204, 7
    %v206 = vand.u32 %v204, 127
    %v207 = vsub.s32 0, %v206
    %v208 = vsel %vm202, %v207, %v206
    %vm209 = vcmp.ne.s32.totalorder %v89, 0
    %vm210 = vcmp.ne.s32.totalorder %v96, 0
    %vm211 = vcmp.ne.s32.totalorder %v103, 0
    %vm212 = vcmp.ne.s32.totalorder %v110, 0
    %vm213 = vcmp.ne.s32.totalorder %v117, 0
    %vm214 = vcmp.ne.s32.totalorder %v124, 0
    %vm215 = vcmp.ne.s32.totalorder %v131, 0
    %vm216 = vcmp.ne.s32.totalorder %v138, 0
    %vm217 = vcmp.ne.s32.totalorder %v145, 0
    %vm218 = vcmp.ne.s32.totalorder %v152, 0
    %vm219 = vcmp.ne.s32.totalorder %v159, 0
    %vm220 = vcmp.ne.s32.totalorder %v166, 0
    %vm221 = vcmp.ne.s32.totalorder %v173, 0
    %vm222 = vcmp.ne.s32.totalorder %v180, 0
    %vm223 = vcmp.ne.s32.totalorder %v187, 0
    %vm224 = vcmp.ne.s32.totalorder %v194, 0
    %vm225 = vcmp.ne.s32.totalorder %v201, 0
    %vm226 = vcmp.ne.s32.totalorder %v208, 0
    %vm227 = vcmp.lt.s32.totalorder %v89, 0
    %vm228 = vcmp.lt.s32.totalorder %v96, 0
    %vm229 = vcmp.lt.s32.totalorder %v103, 0
    %vm230 = vcmp.lt.s32.totalorder %v110, 0
    %vm231 = vcmp.lt.s32.totalorder %v117, 0
    %vm232 = vcmp.lt.s32.totalorder %v124, 0
    %vm233 = vcmp.lt.s32.totalorder %v131, 0
    %vm234 = vcmp.lt.s32.totalorder %v138, 0
    %vm235 = vcmp.lt.s32.totalorder %v145, 0
    %vm236 = vcmp.lt.s32.totalorder %v152, 0
    %vm237 = vcmp.lt.s32.totalorder %v159, 0
    %vm238 = vcmp.lt.s32.totalorder %v166, 0
    %vm239 = vcmp.lt.s32.totalorder %v173, 0
    %vm240 = vcmp.lt.s32.totalorder %v180, 0
    %vm241 = vcmp.lt.s32.totalorder %v187, 0
    %vm242 = vcmp.lt.s32.totalorder %v194, 0
    %vm243 = vcmp.lt.s32.totalorder %v201, 0
    %vm244 = vcmp.lt.s32.totalorder %v208, 0
    %vm245 = vmand %vm227, %vm209
    %vm246 = vmand %vm228, %vm210
    %vm247 = vmand %vm229, %vm211
    %vm248 = vmand %vm230, %vm212
    %vm249 = vmand %vm231, %vm213
    %vm250 = vmand %vm232, %vm214
    %vm251 = vmand %vm233, %vm215
    %vm252 = vmand %vm234, %vm216
    %vm253 = vmand %vm235, %vm217
    %vm254 = vmand %vm236, %vm218
    %vm255 = vmand %vm237, %vm219
    %vm256 = vmand %vm238, %vm220
    %vm257 = vmand %vm239, %vm221
    %vm258 = vmand %vm240, %vm222
    %vm259 = vmand %vm241, %vm223
    %vm260 = vmand %vm242, %vm224
    %vm261 = vmand %vm243, %vm225
    %vm262 = vmand %vm244, %vm226
    %v263 = vadd.s32 %v89, 128
    %v264 = vadd.s32 %v96, 128
    %v265 = vadd.s32 %v103, 128
    %v266 = vadd.s32 %v110, 128
    %v267 = vadd.s32 %v117, 128
    %v268 = vadd.s32 %v124, 128
    %v269 = vadd.s32 %v131, 128
    %v270 = vadd.s32 %v138, 128
    %v271 = vadd.s32 %v145, 128
    %v272 = vadd.s32 %v152, 128
    %v273 = vadd.s32 %v159, 128
    %v274 = vadd.s32 %v166, 128
    %v275 = vadd.s32 %v173, 128
    %v276 = vadd.s32 %v180, 128
    %v277 = vadd.s32 %v187, 128
    %v278 = vadd.s32 %v194, 128
    %v279 = vadd.s32 %v201, 128
    %v280 = vadd.s32 %v208, 128
    %v281 = vsel %vm245, %v263, %v89
    %v282 = vsel %vm246, %v264, %v96
    %v283 = vsel %vm247, %v265, %v103
    %v284 = vsel %vm248, %v266, %v110
    %v285 = vsel %vm249, %v267, %v117
    %v286 = vsel %vm250, %v268, %v124
    %v287 = vsel %vm251, %v269, %v131
    %v288 = vsel %vm252, %v270, %v138
    %v289 = vsel %vm253, %v271, %v145
    %v290 = vsel %vm254, %v272, %v152
    %v291 = vsel %vm255, %v273, %v159
    %v292 = vsel %vm256, %v274, %v166
    %v293 = vsel %vm257, %v275, %v173
    %v294 = vsel %vm258, %v276, %v180
    %v295 = vsel %vm259, %v277, %v187
    %v296 = vsel %vm260, %v278, %v194
    %v297 = vsel %vm261, %v279, %v201
    %v298 = vsel %vm262, %v280, %v208
    %vm299 = vcmp.eq.s32.totalorder %v281, 0
    %vm300 = vcmp.eq.s32.totalorder %v282, 0
    %vm301 = vcmp.eq.s32.totalorder %v283, 0
    %vm302 = vcmp.eq.s32.totalorder %v284, 0
    %vm303 = vcmp.eq.s32.totalorder %v285, 0
    %vm304 = vcmp.eq.s32.totalorder %v286, 0
    %vm305 = vcmp.eq.s32.totalorder %v287, 0
    %vm306 = vcmp.eq.s32.totalorder %v288, 0
    %vm307 = vcmp.eq.s32.totalorder %v289, 0
    %vm308 = vcmp.eq.s32.totalorder %v290, 0
    %vm309 = vcmp.eq.s32.totalorder %v291, 0
    %vm310 = vcmp.eq.s32.totalorder %v292, 0
    %vm311 = vcmp.eq.s32.totalorder %v293, 0
    %vm312 = vcmp.eq.s32.totalorder %v294, 0
    %vm313 = vcmp.eq.s32.totalorder %v295, 0
    %vm314 = vcmp.eq.s32.totalorder %v296, 0
    %vm315 = vcmp.eq.s32.totalorder %v297, 0
    %vm316 = vcmp.eq.s32.totalorder %v298, 0
    %vm317 = vcmp.eq.s32.totalorder %v281, 127
    %vm318 = vcmp.eq.s32.totalorder %v282, 127
    %vm319 = vcmp.eq.s32.totalorder %v283, 127
    %vm320 = vcmp.eq.s32.totalorder %v284, 127
    %vm321 = vcmp.eq.s32.totalorder %v285, 127
    %vm322 = vcmp.eq.s32.totalorder %v286, 127
    %vm323 = vcmp.eq.s32.totalorder %v287, 127
    %vm324 = vcmp.eq.s32.totalorder %v288, 127
    %vm325 = vcmp.eq.s32.totalorder %v289, 127
    %vm326 = vcmp.eq.s32.totalorder %v290, 127
    %vm327 = vcmp.eq.s32.totalorder %v291, 127
    %vm328 = vcmp.eq.s32.totalorder %v292, 127
    %vm329 = vcmp.eq.s32.totalorder %v293, 127
    %vm330 = vcmp.eq.s32.totalorder %v294, 127
    %vm331 = vcmp.eq.s32.totalorder %v295, 127
    %vm332 = vcmp.eq.s32.totalorder %v296, 127
    %vm333 = vcmp.eq.s32.totalorder %v297, 127
    %vm334 = vcmp.eq.s32.totalorder %v298, 127
    %v335 = vld [vmem:[#allocation4] sm:$0xf]
    %v336 = vld [vmem:[#allocation4 + $0x4] sm:$0xf]
    %v337 = vld [vmem:[%s1] sm:$0xff]
    %v338 = vld [vmem:[%s1 + $0x8] sm:$0xff]
    loop: start=0, step=1, limit=8
    $region34: #{tpu_custom_call.1} parent=1 // loop_pre_header
      _
    $region35: #{tpu_custom_call.1} parent=1 // loop_header
      %s340 = sphi 0, %s344
      %p341 = scmp.ge.s32.totalorder %s340, 8
      %v345 = vphi 0.0, %v2084
      %v346 = vphi 0.0, %v2085
    $region36: #{tpu_custom_call.1} parent=1 // loop_header_branch
      %343 = sbr.rel (%p341) target = $region40
    $region37: #{tpu_custom_call.1} parent=1 // loop_body
      %s347 = smul.u32 %s340, 2048
      %s348 = sshra.s32 %s347, 7
      %s349 = sand.u32 %s347, 127
      %s350 = smul.addr %s348, 8
      %s351 = scalar_lea.vmem [#allocation7], %s350
      %v352 = vld [vmem:[%s351] sm:$0xff]
      %v353 = vld [vmem:[%s351 + $0x8] sm:$0xff]
      %v354 = vld [vmem:[%s351 + $0x10] sm:$0xff]
      %v355 = vld [vmem:[%s351 + $0x18] sm:$0xff]
      %v356 = vld [vmem:[%s351 + $0x20] sm:$0xff]
      %v357 = vld [vmem:[%s351 + $0x28] sm:$0xff]
      %v358 = vld [vmem:[%s351 + $0x30] sm:$0xff]
      %v359 = vld [vmem:[%s351 + $0x38] sm:$0xff]
      %v360 = vld [vmem:[%s351 + $0x40] sm:$0xff]
      %v361 = vld [vmem:[%s351 + $0x48] sm:$0xff]
      %v362 = vld [vmem:[%s351 + $0x50] sm:$0xff]
      %v363 = vld [vmem:[%s351 + $0x58] sm:$0xff]
      %v364 = vld [vmem:[%s351 + $0x60] sm:$0xff]
      %v365 = vld [vmem:[%s351 + $0x68] sm:$0xff]
      %v366 = vld [vmem:[%s351 + $0x70] sm:$0xff]
      %v367 = vld [vmem:[%s351 + $0x78] sm:$0xff]
      %v368 = vld [vmem:[%s351 + $0x80] sm:$0xff]
      %v369 = vld [vmem:[%s351 + $0x88] sm:$0xff]
      %371 = vrot.lane.b32.xlu0 %v369, 1
      %v372 = vpop.permute.xlu0 %371
      %391 = vrot.lane.b32.xlu0 %v352, 1
      %v392 = vpop.permute.xlu0 %391
      %393 = vrot.lane.b32.xlu0 %v353, 1
      %v394 = vpop.permute.xlu0 %393
      %395 = vrot.lane.b32.xlu0 %v354, 1
      %v396 = vpop.permute.xlu0 %395
      %397 = vrot.lane.b32.xlu0 %v355, 1
      %v398 = vpop.permute.xlu0 %397
      %399 = vrot.lane.b32.xlu0 %v356, 1
      %v400 = vpop.permute.xlu0 %399
      %401 = vrot.lane.b32.xlu0 %v357, 1
      %v402 = vpop.permute.xlu0 %401
      %403 = vrot.lane.b32.xlu0 %v358, 1
      %v404 = vpop.permute.xlu0 %403
      %405 = vrot.lane.b32.xlu0 %v359, 1
      %v406 = vpop.permute.xlu0 %405
      %407 = vrot.lane.b32.xlu0 %v360, 1
      %v408 = vpop.permute.xlu0 %407
      %409 = vrot.lane.b32.xlu0 %v361, 1
      %v410 = vpop.permute.xlu0 %409
      %411 = vrot.lane.b32.xlu0 %v362, 1
      %v412 = vpop.permute.xlu0 %411
      %413 = vrot.lane.b32.xlu0 %v363, 1
      %v414 = vpop.permute.xlu0 %413
      %415 = vrot.lane.b32.xlu0 %v364, 1
      %v416 = vpop.permute.xlu0 %415
      %417 = vrot.lane.b32.xlu0 %v365, 1
      %v418 = vpop.permute.xlu0 %417
      %419 = vrot.lane.b32.xlu0 %v366, 1
      %v420 = vpop.permute.xlu0 %419
      %421 = vrot.lane.b32.xlu0 %v367, 1
      %v422 = vpop.permute.xlu0 %421
      %423 = vrot.lane.b32.xlu0 %v368, 1
      %v424 = vpop.permute.xlu0 %423
      %vm425 = vcmask 7168
      %v426 = vsel %vm425, %v392, %v394
      %v427 = vsel %vm425, %v394, %v396
      %v428 = vsel %vm425, %v396, %v398
      %v429 = vsel %vm425, %v398, %v400
      %v430 = vsel %vm425, %v400, %v402
      %v431 = vsel %vm425, %v402, %v404
      %v432 = vsel %vm425, %v404, %v406
      %v433 = vsel %vm425, %v406, %v408
      %v434 = vsel %vm425, %v408, %v410
      %v435 = vsel %vm425, %v410, %v412
      %v436 = vsel %vm425, %v412, %v414
      %v437 = vsel %vm425, %v414, %v416
      %v438 = vsel %vm425, %v416, %v418
      %v439 = vsel %vm425, %v418, %v420
      %v440 = vsel %vm425, %v420, %v422
      %v441 = vsel %vm425, %v422, %v424
      %v442 = vsel %vm425, %v424, %v372
      %v461 = vsel %vm425, %v372, %v392
      %v462 = vsel %vm299, 0.0, %v461
      %v463 = vsel %vm300, 0.0, %v426
      %v464 = vsel %vm301, 0.0, %v427
      %v465 = vsel %vm302, 0.0, %v428
      %v466 = vsel %vm303, 0.0, %v429
      %v467 = vsel %vm304, 0.0, %v430
      %v468 = vsel %vm305, 0.0, %v431
      %v469 = vsel %vm306, 0.0, %v432
      %v470 = vsel %vm307, 0.0, %v433
      %v471 = vsel %vm308, 0.0, %v434
      %v472 = vsel %vm309, 0.0, %v435
      %v473 = vsel %vm310, 0.0, %v436
      %v474 = vsel %vm311, 0.0, %v437
      %v475 = vsel %vm312, 0.0, %v438
      %v476 = vsel %vm313, 0.0, %v439
      %v477 = vsel %vm314, 0.0, %v440
      %v478 = vsel %vm315, 0.0, %v441
      %v479 = vsel %vm316, 0.0, %v442
      %480 = vrot.lane.b32.xlu0 %v352, 127
      %v481 = vpop.permute.xlu0 %480
      %482 = vrot.lane.b32.xlu0 %v353, 127
      %v483 = vpop.permute.xlu0 %482
      %484 = vrot.lane.b32.xlu0 %v354, 127
      %v485 = vpop.permute.xlu0 %484
      %486 = vrot.lane.b32.xlu0 %v355, 127
      %v487 = vpop.permute.xlu0 %486
      %488 = vrot.lane.b32.xlu0 %v356, 127
      %v489 = vpop.permute.xlu0 %488
      %490 = vrot.lane.b32.xlu0 %v357, 127
      %v491 = vpop.permute.xlu0 %490
      %492 = vrot.lane.b32.xlu0 %v358, 127
      %v493 = vpop.permute.xlu0 %492
      %494 = vrot.lane.b32.xlu0 %v359, 127
      %v495 = vpop.permute.xlu0 %494
      %496 = vrot.lane.b32.xlu0 %v360, 127
      %v497 = vpop.permute.xlu0 %496
      %498 = vrot.lane.b32.xlu0 %v361, 127
      %v499 = vpop.permute.xlu0 %498
      %500 = vrot.lane.b32.xlu0 %v362, 127
      %v501 = vpop.permute.xlu0 %500
      %502 = vrot.lane.b32.xlu0 %v363, 127
      %v503 = vpop.permute.xlu0 %502
      %504 = vrot.lane.b32.xlu0 %v364, 127
      %v505 = vpop.permute.xlu0 %504
      %506 = vrot.lane.b32.xlu0 %v365, 127
      %v507 = vpop.permute.xlu0 %506
      %508 = vrot.lane.b32.xlu0 %v366, 127
      %v509 = vpop.permute.xlu0 %508
      %510 = vrot.lane.b32.xlu0 %v367, 127
      %v511 = vpop.permute.xlu0 %510
      %512 = vrot.lane.b32.xlu0 %v368, 127
      %v513 = vpop.permute.xlu0 %512
      %514 = vrot.lane.b32.xlu0 %v369, 127
      %v515 = vpop.permute.xlu0 %514
      %vm516 = vcmask 1039360
      %v517 = vsel %vm516, %v481, %v483
      %v518 = vsel %vm516, %v483, %v485
      %v519 = vsel %vm516, %v485, %v487
      %v520 = vsel %vm516, %v487, %v489
      %v521 = vsel %vm516, %v489, %v491
      %v522 = vsel %vm516, %v491, %v493
      %v523 = vsel %vm516, %v493, %v495
      %v524 = vsel %vm516, %v495, %v497
      %v525 = vsel %vm516, %v497, %v499
      %v526 = vsel %vm516, %v499, %v501
      %v527 = vsel %vm516, %v501, %v503
      %v528 = vsel %vm516, %v503, %v505
      %v529 = vsel %vm516, %v505, %v507
      %v530 = vsel %vm516, %v507, %v509
      %v531 = vsel %vm516, %v509, %v511
      %v532 = vsel %vm516, %v511, %v513
      %v533 = vsel %vm516, %v513, %v515
      %v553 = vsel %vm516, %v515, %v481
      %v554 = vsel %vm317, 0.0, %v517
      %v555 = vsel %vm318, 0.0, %v518
      %v556 = vsel %vm319, 0.0, %v519
      %v557 = vsel %vm320, 0.0, %v520
      %v558 = vsel %vm321, 0.0, %v521
      %v559 = vsel %vm322, 0.0, %v522
      %v560 = vsel %vm323, 0.0, %v523
      %v561 = vsel %vm324, 0.0, %v524
      %v562 = vsel %vm325, 0.0, %v525
      %v563 = vsel %vm326, 0.0, %v526
      %v564 = vsel %vm327, 0.0, %v527
      %v565 = vsel %vm328, 0.0, %v528
      %v566 = vsel %vm329, 0.0, %v529
      %v567 = vsel %vm330, 0.0, %v530
      %v568 = vsel %vm331, 0.0, %v531
      %v569 = vsel %vm332, 0.0, %v532
      %v570 = vsel %vm333, 0.0, %v533
      %v571 = vsel %vm334, 0.0, %v553
      %v572 = vpack.c.bf16 %v463, %v462
      %v573 = vpack.c.bf16 %v464, %v463
      %v574 = vpack.c.bf16 %v465, %v464
      %v575 = vpack.c.bf16 %v466, %v465
      %v576 = vpack.c.bf16 %v467, %v466
      %v577 = vpack.c.bf16 %v468, %v467
      %v578 = vpack.c.bf16 %v469, %v468
      %v579 = vpack.c.bf16 %v470, %v469
      %v580 = vpack.c.bf16 %v471, %v470
      %v581 = vpack.c.bf16 %v472, %v471
      %v582 = vpack.c.bf16 %v473, %v472
      %v583 = vpack.c.bf16 %v474, %v473
      %v584 = vpack.c.bf16 %v475, %v474
      %v585 = vpack.c.bf16 %v476, %v475
      %v586 = vpack.c.bf16 %v477, %v476
      %v587 = vpack.c.bf16 %v478, %v477
      %v604 = vunpack.c.l.b16 %v572
      %v605 = vunpack.c.l.b16 %v573
      %v606 = vunpack.c.l.b16 %v574
      %v607 = vunpack.c.l.b16 %v575
      %v608 = vunpack.c.l.b16 %v576
      %v609 = vunpack.c.l.b16 %v577
      %v610 = vunpack.c.l.b16 %v578
      %v611 = vunpack.c.l.b16 %v579
      %v612 = vunpack.c.l.b16 %v580
      %v613 = vunpack.c.l.b16 %v581
      %v614 = vunpack.c.l.b16 %v582
      %v615 = vunpack.c.l.b16 %v583
      %v616 = vunpack.c.l.b16 %v584
      %v617 = vunpack.c.l.b16 %v585
      %v618 = vunpack.c.l.b16 %v586
      %v619 = vunpack.c.l.b16 %v587
      %v620 = vunpack.c.h.b16 %v572
      %v621 = vunpack.c.h.b16 %v573
      %v622 = vunpack.c.h.b16 %v574
      %v623 = vunpack.c.h.b16 %v575
      %v624 = vunpack.c.h.b16 %v576
      %v625 = vunpack.c.h.b16 %v577
      %v626 = vunpack.c.h.b16 %v578
      %v627 = vunpack.c.h.b16 %v579
      %v628 = vunpack.c.h.b16 %v580
      %v629 = vunpack.c.h.b16 %v581
      %v630 = vunpack.c.h.b16 %v582
      %v631 = vunpack.c.h.b16 %v583
      %v632 = vunpack.c.h.b16 %v584
      %v633 = vunpack.c.h.b16 %v585
      %v634 = vunpack.c.h.b16 %v586
      %v635 = vunpack.c.h.b16 %v587
      %v636 = vpack.c.b16 %v605, %v604
      %v637 = vpack.c.b16 %v607, %v606
      %v638 = vpack.c.b16 %v609, %v608
      %v639 = vpack.c.b16 %v611, %v610
      %v640 = vpack.c.b16 %v613, %v612
      %v641 = vpack.c.b16 %v615, %v614
      %v642 = vpack.c.b16 %v617, %v616
      %v643 = vpack.c.b16 %v619, %v618
      %v644 = vpack.c.b16 %v621, %v620
      %v645 = vpack.c.b16 %v623, %v622
      %v646 = vpack.c.b16 %v625, %v624
      %v647 = vpack.c.b16 %v627, %v626
      %v648 = vpack.c.b16 %v629, %v628
      %v649 = vpack.c.b16 %v631, %v630
      %v650 = vpack.c.b16 %v633, %v632
      %v651 = vpack.c.b16 %v635, %v634
      %668 = vst [vmem:[#allocation2] sm:$0xff] %v636
      %669 = vst [vmem:[#allocation2 + $0x8] sm:$0xff] %v637
      %670 = vst [vmem:[#allocation2 + $0x10] sm:$0xff] %v638
      %671 = vst [vmem:[#allocation2 + $0x18] sm:$0xff] %v639
      %672 = vst [vmem:[#allocation2 + $0x20] sm:$0xff] %v640
      %673 = vst [vmem:[#allocation2 + $0x28] sm:$0xff] %v641
      %674 = vst [vmem:[#allocation2 + $0x30] sm:$0xff] %v642
      %675 = vst [vmem:[#allocation2 + $0x38] sm:$0xff] %v643
      %676 = vst [vmem:[#allocation2 + $0x40] sm:$0xff] %v644
      %677 = vst [vmem:[#allocation2 + $0x48] sm:$0xff] %v645
      %678 = vst [vmem:[#allocation2 + $0x50] sm:$0xff] %v646
      %679 = vst [vmem:[#allocation2 + $0x58] sm:$0xff] %v647
      %680 = vst [vmem:[#allocation2 + $0x60] sm:$0xff] %v648
      %681 = vst [vmem:[#allocation2 + $0x68] sm:$0xff] %v649
      %682 = vst [vmem:[#allocation2 + $0x70] sm:$0xff] %v650
      %683 = vst [vmem:[#allocation2 + $0x78] sm:$0xff] %v651
      %v684 = vpack.c.bf16 %v352, %v464
      %v685 = vpack.c.bf16 %v353, %v465
      %v686 = vpack.c.bf16 %v354, %v466
      %v687 = vpack.c.bf16 %v355, %v467
      %v688 = vpack.c.bf16 %v356, %v468
      %v689 = vpack.c.bf16 %v357, %v469
      %v690 = vpack.c.bf16 %v358, %v470
      %v691 = vpack.c.bf16 %v359, %v471
      %v692 = vpack.c.bf16 %v360, %v472
      %v693 = vpack.c.bf16 %v361, %v473
      %v694 = vpack.c.bf16 %v362, %v474
      %v695 = vpack.c.bf16 %v363, %v475
      %v696 = vpack.c.bf16 %v364, %v476
      %v697 = vpack.c.bf16 %v365, %v477
      %v698 = vpack.c.bf16 %v366, %v478
      %v699 = vpack.c.bf16 %v367, %v479
      %v716 = vunpack.c.l.b16 %v684
      %v717 = vunpack.c.l.b16 %v685
      %v718 = vunpack.c.l.b16 %v686
      %v719 = vunpack.c.l.b16 %v687
      %v720 = vunpack.c.l.b16 %v688
      %v721 = vunpack.c.l.b16 %v689
      %v722 = vunpack.c.l.b16 %v690
      %v723 = vunpack.c.l.b16 %v691
      %v724 = vunpack.c.l.b16 %v692
      %v725 = vunpack.c.l.b16 %v693
      %v726 = vunpack.c.l.b16 %v694
      %v727 = vunpack.c.l.b16 %v695
      %v728 = vunpack.c.l.b16 %v696
      %v729 = vunpack.c.l.b16 %v697
      %v730 = vunpack.c.l.b16 %v698
      %v731 = vunpack.c.l.b16 %v699
      %v732 = vunpack.c.h.b16 %v684
      %v733 = vunpack.c.h.b16 %v685
      %v734 = vunpack.c.h.b16 %v686
      %v735 = vunpack.c.h.b16 %v687
      %v736 = vunpack.c.h.b16 %v688
      %v737 = vunpack.c.h.b16 %v689
      %v738 = vunpack.c.h.b16 %v690
      %v739 = vunpack.c.h.b16 %v691
      %v740 = vunpack.c.h.b16 %v692
      %v741 = vunpack.c.h.b16 %v693
      %v742 = vunpack.c.h.b16 %v694
      %v743 = vunpack.c.h.b16 %v695
      %v744 = vunpack.c.h.b16 %v696
      %v745 = vunpack.c.h.b16 %v697
      %v746 = vunpack.c.h.b16 %v698
      %v747 = vunpack.c.h.b16 %v699
      %v748 = vpack.c.b16 %v717, %v716
      %v749 = vpack.c.b16 %v719, %v718
      %v750 = vpack.c.b16 %v721, %v720
      %v751 = vpack.c.b16 %v723, %v722
      %v752 = vpack.c.b16 %v725, %v724
      %v753 = vpack.c.b16 %v727, %v726
      %v754 = vpack.c.b16 %v729, %v728
      %v755 = vpack.c.b16 %v731, %v730
      %v756 = vpack.c.b16 %v733, %v732
      %v757 = vpack.c.b16 %v735, %v734
      %v758 = vpack.c.b16 %v737, %v736
      %v759 = vpack.c.b16 %v739, %v738
      %v760 = vpack.c.b16 %v741, %v740
      %v761 = vpack.c.b16 %v743, %v742
      %v762 = vpack.c.b16 %v745, %v744
      %v763 = vpack.c.b16 %v747, %v746
      %780 = vst [vmem:[#allocation2 + $0x80] sm:$0xff] %v748
      %781 = vst [vmem:[#allocation2 + $0x88] sm:$0xff] %v749
      %782 = vst [vmem:[#allocation2 + $0x90] sm:$0xff] %v750
      %783 = vst [vmem:[#allocation2 + $0x98] sm:$0xff] %v751
      %784 = vst [vmem:[#allocation2 + $0xa0] sm:$0xff] %v752
      %785 = vst [vmem:[#allocation2 + $0xa8] sm:$0xff] %v753
      %786 = vst [vmem:[#allocation2 + $0xb0] sm:$0xff] %v754
      %787 = vst [vmem:[#allocation2 + $0xb8] sm:$0xff] %v755
      %788 = vst [vmem:[#allocation2 + $0xc0] sm:$0xff] %v756
      %789 = vst [vmem:[#allocation2 + $0xc8] sm:$0xff] %v757
      %790 = vst [vmem:[#allocation2 + $0xd0] sm:$0xff] %v758
      %791 = vst [vmem:[#allocation2 + $0xd8] sm:$0xff] %v759
      %792 = vst [vmem:[#allocation2 + $0xe0] sm:$0xff] %v760
      %793 = vst [vmem:[#allocation2 + $0xe8] sm:$0xff] %v761
      %794 = vst [vmem:[#allocation2 + $0xf0] sm:$0xff] %v762
      %795 = vst [vmem:[#allocation2 + $0xf8] sm:$0xff] %v763
      %v796 = vpack.c.bf16 %v354, %v353
      %v797 = vpack.c.bf16 %v355, %v354
      %v798 = vpack.c.bf16 %v356, %v355
      %v799 = vpack.c.bf16 %v357, %v356
      %v800 = vpack.c.bf16 %v358, %v357
      %v801 = vpack.c.bf16 %v359, %v358
      %v802 = vpack.c.bf16 %v360, %v359
      %v803 = vpack.c.bf16 %v361, %v360
      %v804 = vpack.c.bf16 %v362, %v361
      %v805 = vpack.c.bf16 %v363, %v362
      %v806 = vpack.c.bf16 %v364, %v363
      %v807 = vpack.c.bf16 %v365, %v364
      %v808 = vpack.c.bf16 %v366, %v365
      %v809 = vpack.c.bf16 %v367, %v366
      %v810 = vpack.c.bf16 %v368, %v367
      %v811 = vpack.c.bf16 %v369, %v368
      %v828 = vunpack.c.l.b16 %v796
      %v829 = vunpack.c.l.b16 %v797
      %v830 = vunpack.c.l.b16 %v798
      %v831 = vunpack.c.l.b16 %v799
      %v832 = vunpack.c.l.b16 %v800
      %v833 = vunpack.c.l.b16 %v801
      %v834 = vunpack.c.l.b16 %v802
      %v835 = vunpack.c.l.b16 %v803
      %v836 = vunpack.c.l.b16 %v804
      %v837 = vunpack.c.l.b16 %v805
      %v838 = vunpack.c.l.b16 %v806
      %v839 = vunpack.c.l.b16 %v807
      %v840 = vunpack.c.l.b16 %v808
      %v841 = vunpack.c.l.b16 %v809
      %v842 = vunpack.c.l.b16 %v810
      %v843 = vunpack.c.l.b16 %v811
      %v844 = vunpack.c.h.b16 %v796
      %v845 = vunpack.c.h.b16 %v797
      %v846 = vunpack.c.h.b16 %v798
      %v847 = vunpack.c.h.b16 %v799
      %v848 = vunpack.c.h.b16 %v800
      %v849 = vunpack.c.h.b16 %v801
      %v850 = vunpack.c.h.b16 %v802
      %v851 = vunpack.c.h.b16 %v803
      %v852 = vunpack.c.h.b16 %v804
      %v853 = vunpack.c.h.b16 %v805
      %v854 = vunpack.c.h.b16 %v806
      %v855 = vunpack.c.h.b16 %v807
      %v856 = vunpack.c.h.b16 %v808
      %v857 = vunpack.c.h.b16 %v809
      %v858 = vunpack.c.h.b16 %v810
      %v859 = vunpack.c.h.b16 %v811
      %v860 = vpack.c.b16 %v829, %v828
      %v861 = vpack.c.b16 %v831, %v830
      %v862 = vpack.c.b16 %v833, %v832
      %v863 = vpack.c.b16 %v835, %v834
      %v864 = vpack.c.b16 %v837, %v836
      %v865 = vpack.c.b16 %v839, %v838
      %v866 = vpack.c.b16 %v841, %v840
      %v867 = vpack.c.b16 %v843, %v842
      %v868 = vpack.c.b16 %v845, %v844
      %v869 = vpack.c.b16 %v847, %v846
      %v870 = vpack.c.b16 %v849, %v848
      %v871 = vpack.c.b16 %v851, %v850
      %v872 = vpack.c.b16 %v853, %v852
      %v873 = vpack.c.b16 %v855, %v854
      %v874 = vpack.c.b16 %v857, %v856
      %v875 = vpack.c.b16 %v859, %v858
      %892 = vst [vmem:[#allocation2 + $0x100] sm:$0xff] %v860
      %893 = vst [vmem:[#allocation2 + $0x108] sm:$0xff] %v861
      %894 = vst [vmem:[#allocation2 + $0x110] sm:$0xff] %v862
      %895 = vst [vmem:[#allocation2 + $0x118] sm:$0xff] %v863
      %896 = vst [vmem:[#allocation2 + $0x120] sm:$0xff] %v864
      %897 = vst [vmem:[#allocation2 + $0x128] sm:$0xff] %v865
      %898 = vst [vmem:[#allocation2 + $0x130] sm:$0xff] %v866
      %899 = vst [vmem:[#allocation2 + $0x138] sm:$0xff] %v867
      %900 = vst [vmem:[#allocation2 + $0x140] sm:$0xff] %v868
      %901 = vst [vmem:[#allocation2 + $0x148] sm:$0xff] %v869
      %902 = vst [vmem:[#allocation2 + $0x150] sm:$0xff] %v870
      %903 = vst [vmem:[#allocation2 + $0x158] sm:$0xff] %v871
      %904 = vst [vmem:[#allocation2 + $0x160] sm:$0xff] %v872
      %905 = vst [vmem:[#allocation2 + $0x168] sm:$0xff] %v873
      %906 = vst [vmem:[#allocation2 + $0x170] sm:$0xff] %v874
      %907 = vst [vmem:[#allocation2 + $0x178] sm:$0xff] %v875
      %v908 = vpack.c.bf16 %v555, %v554
      %v909 = vpack.c.bf16 %v556, %v555
      %v910 = vpack.c.bf16 %v557, %v556
      %v911 = vpack.c.bf16 %v558, %v557
      %v912 = vpack.c.bf16 %v559, %v558
      %v913 = vpack.c.bf16 %v560, %v559
      %v914 = vpack.c.bf16 %v561, %v560
      %v915 = vpack.c.bf16 %v562, %v561
      %v916 = vpack.c.bf16 %v563, %v562
      %v917 = vpack.c.bf16 %v564, %v563
      %v918 = vpack.c.bf16 %v565, %v564
      %v919 = vpack.c.bf16 %v566, %v565
      %v920 = vpack.c.bf16 %v567, %v566
      %v921 = vpack.c.bf16 %v568, %v567
      %v922 = vpack.c.bf16 %v569, %v568
      %v923 = vpack.c.bf16 %v570, %v569
      %v940 = vunpack.c.l.b16 %v908
      %v941 = vunpack.c.l.b16 %v909
      %v942 = vunpack.c.l.b16 %v910
      %v943 = vunpack.c.l.b16 %v911
      %v944 = vunpack.c.l.b16 %v912
      %v945 = vunpack.c.l.b16 %v913
      %v946 = vunpack.c.l.b16 %v914
      %v947 = vunpack.c.l.b16 %v915
      %v948 = vunpack.c.l.b16 %v916
      %v949 = vunpack.c.l.b16 %v917
      %v950 = vunpack.c.l.b16 %v918
      %v951 = vunpack.c.l.b16 %v919
      %v952 = vunpack.c.l.b16 %v920
      %v953 = vunpack.c.l.b16 %v921
      %v954 = vunpack.c.l.b16 %v922
      %v955 = vunpack.c.l.b16 %v923
      %v956 = vunpack.c.h.b16 %v908
      %v957 = vunpack.c.h.b16 %v909
      %v958 = vunpack.c.h.b16 %v910
      %v959 = vunpack.c.h.b16 %v911
      %v960 = vunpack.c.h.b16 %v912
      %v961 = vunpack.c.h.b16 %v913
      %v962 = vunpack.c.h.b16 %v914
      %v963 = vunpack.c.h.b16 %v915
      %v964 = vunpack.c.h.b16 %v916
      %v965 = vunpack.c.h.b16 %v917
      %v966 = vunpack.c.h.b16 %v918
      %v967 = vunpack.c.h.b16 %v919
      %v968 = vunpack.c.h.b16 %v920
      %v969 = vunpack.c.h.b16 %v921
      %v970 = vunpack.c.h.b16 %v922
      %v971 = vunpack.c.h.b16 %v923
      %v972 = vpack.c.b16 %v941, %v940
      %v973 = vpack.c.b16 %v943, %v942
      %v974 = vpack.c.b16 %v945, %v944
      %v975 = vpack.c.b16 %v947, %v946
      %v976 = vpack.c.b16 %v949, %v948
      %v977 = vpack.c.b16 %v951, %v950
      %v978 = vpack.c.b16 %v953, %v952
      %v979 = vpack.c.b16 %v955, %v954
      %v980 = vpack.c.b16 %v957, %v956
      %v981 = vpack.c.b16 %v959, %v958
      %v982 = vpack.c.b16 %v961, %v960
      %v983 = vpack.c.b16 %v963, %v962
      %v984 = vpack.c.b16 %v965, %v964
      %v985 = vpack.c.b16 %v967, %v966
      %v986 = vpack.c.b16 %v969, %v968
      %v987 = vpack.c.b16 %v971, %v970
      %1004 = vst [vmem:[#allocation2 + $0x180] sm:$0xff] %v972
      %1005 = vst [vmem:[#allocation2 + $0x188] sm:$0xff] %v973
      %1006 = vst [vmem:[#allocation2 + $0x190] sm:$0xff] %v974
      %1007 = vst [vmem:[#allocation2 + $0x198] sm:$0xff] %v975
      %1008 = vst [vmem:[#allocation2 + $0x1a0] sm:$0xff] %v976
      %1009 = vst [vmem:[#allocation2 + $0x1a8] sm:$0xff] %v977
      %1010 = vst [vmem:[#allocation2 + $0x1b0] sm:$0xff] %v978
      %1011 = vst [vmem:[#allocation2 + $0x1b8] sm:$0xff] %v979
      %1012 = vst [vmem:[#allocation2 + $0x1c0] sm:$0xff] %v980
      %1013 = vst [vmem:[#allocation2 + $0x1c8] sm:$0xff] %v981
      %1014 = vst [vmem:[#allocation2 + $0x1d0] sm:$0xff] %v982
      %1015 = vst [vmem:[#allocation2 + $0x1d8] sm:$0xff] %v983
      %1016 = vst [vmem:[#allocation2 + $0x1e0] sm:$0xff] %v984
      %1017 = vst [vmem:[#allocation2 + $0x1e8] sm:$0xff] %v985
      %1018 = vst [vmem:[#allocation2 + $0x1f0] sm:$0xff] %v986
      %1019 = vst [vmem:[#allocation2 + $0x1f8] sm:$0xff] %v987
      %v1020 = vpack.c.bf16 %v556, %v556
      %v1021 = vpack.c.bf16 %v557, %v557
      %v1022 = vpack.c.bf16 %v558, %v558
      %v1023 = vpack.c.bf16 %v559, %v559
      %v1024 = vpack.c.bf16 %v560, %v560
      %v1025 = vpack.c.bf16 %v561, %v561
      %v1026 = vpack.c.bf16 %v562, %v562
      %v1027 = vpack.c.bf16 %v563, %v563
      %v1028 = vpack.c.bf16 %v564, %v564
      %v1029 = vpack.c.bf16 %v565, %v565
      %v1030 = vpack.c.bf16 %v566, %v566
      %v1031 = vpack.c.bf16 %v567, %v567
      %v1032 = vpack.c.bf16 %v568, %v568
      %v1033 = vpack.c.bf16 %v569, %v569
      %v1034 = vpack.c.bf16 %v570, %v570
      %v1035 = vpack.c.bf16 %v571, %v571
      %v1052 = vunpack.c.l.b16 %v1020
      %v1053 = vunpack.c.l.b16 %v1021
      %v1054 = vunpack.c.l.b16 %v1022
      %v1055 = vunpack.c.l.b16 %v1023
      %v1056 = vunpack.c.l.b16 %v1024
      %v1057 = vunpack.c.l.b16 %v1025
      %v1058 = vunpack.c.l.b16 %v1026
      %v1059 = vunpack.c.l.b16 %v1027
      %v1060 = vunpack.c.l.b16 %v1028
      %v1061 = vunpack.c.l.b16 %v1029
      %v1062 = vunpack.c.l.b16 %v1030
      %v1063 = vunpack.c.l.b16 %v1031
      %v1064 = vunpack.c.l.b16 %v1032
      %v1065 = vunpack.c.l.b16 %v1033
      %v1066 = vunpack.c.l.b16 %v1034
      %v1067 = vunpack.c.l.b16 %v1035
      %v1068 = vpack.c.b16 %v1053, %v1052
      %v1069 = vpack.c.b16 %v1055, %v1054
      %v1070 = vpack.c.b16 %v1057, %v1056
      %v1071 = vpack.c.b16 %v1059, %v1058
      %v1072 = vpack.c.b16 %v1061, %v1060
      %v1073 = vpack.c.b16 %v1063, %v1062
      %v1074 = vpack.c.b16 %v1065, %v1064
      %v1075 = vpack.c.b16 %v1067, %v1066
      %1084 = vst [vmem:[#allocation2 + $0x200] sm:$0xff] %v1068
      %1085 = vst [vmem:[#allocation2 + $0x208] sm:$0xff] %v1069
      %1086 = vst [vmem:[#allocation2 + $0x210] sm:$0xff] %v1070
      %1087 = vst [vmem:[#allocation2 + $0x218] sm:$0xff] %v1071
      %1088 = vst [vmem:[#allocation2 + $0x220] sm:$0xff] %v1072
      %1089 = vst [vmem:[#allocation2 + $0x228] sm:$0xff] %v1073
      %1090 = vst [vmem:[#allocation2 + $0x230] sm:$0xff] %v1074
      %1091 = vst [vmem:[#allocation2 + $0x238] sm:$0xff] %v1075
      %v1092 = vld [vmem:[#allocation2] sm:$0xff]
      %v1093 = vld [vmem:[#allocation2 + $0x8] sm:$0xff]
      %v1094 = vld [vmem:[#allocation2 + $0x10] sm:$0xff]
      %v1095 = vld [vmem:[#allocation2 + $0x18] sm:$0xff]
      %v1096 = vld [vmem:[#allocation2 + $0x20] sm:$0xff]
      %v1097 = vld [vmem:[#allocation2 + $0x28] sm:$0xff]
      %v1098 = vld [vmem:[#allocation2 + $0x30] sm:$0xff]
      %v1099 = vld [vmem:[#allocation2 + $0x38] sm:$0xff]
      %v1100 = vld [vmem:[#allocation2 + $0x40] sm:$0xff]
      %v1101 = vld [vmem:[#allocation2 + $0x48] sm:$0xff]
      %v1102 = vld [vmem:[#allocation2 + $0x50] sm:$0xff]
      %v1103 = vld [vmem:[#allocation2 + $0x58] sm:$0xff]
      %v1104 = vld [vmem:[#allocation2 + $0x60] sm:$0xff]
      %v1105 = vld [vmem:[#allocation2 + $0x68] sm:$0xff]
      %v1106 = vld [vmem:[#allocation2 + $0x70] sm:$0xff]
      %v1107 = vld [vmem:[#allocation2 + $0x78] sm:$0xff]
      %v1108 = vld [vmem:[#allocation2 + $0x80] sm:$0xff]
      %v1109 = vld [vmem:[#allocation2 + $0x88] sm:$0xff]
      %v1110 = vld [vmem:[#allocation2 + $0x90] sm:$0xff]
      %v1111 = vld [vmem:[#allocation2 + $0x98] sm:$0xff]
      %v1112 = vld [vmem:[#allocation2 + $0xa0] sm:$0xff]
      %v1113 = vld [vmem:[#allocation2 + $0xa8] sm:$0xff]
      %v1114 = vld [vmem:[#allocation2 + $0xb0] sm:$0xff]
      %v1115 = vld [vmem:[#allocation2 + $0xb8] sm:$0xff]
      %v1116 = vld [vmem:[#allocation2 + $0xc0] sm:$0xff]
      %v1117 = vld [vmem:[#allocation2 + $0xc8] sm:$0xff]
      %v1118 = vld [vmem:[#allocation2 + $0xd0] sm:$0xff]
      %v1119 = vld [vmem:[#allocation2 + $0xd8] sm:$0xff]
      %v1120 = vld [vmem:[#allocation2 + $0xe0] sm:$0xff]
      %v1121 = vld [vmem:[#allocation2 + $0xe8] sm:$0xff]
      %v1122 = vld [vmem:[#allocation2 + $0xf0] sm:$0xff]
      %v1123 = vld [vmem:[#allocation2 + $0xf8] sm:$0xff]
      %v1124 = vld [vmem:[#allocation2 + $0x100] sm:$0xff]
      %v1125 = vld [vmem:[#allocation2 + $0x108] sm:$0xff]
      %v1126 = vld [vmem:[#allocation2 + $0x110] sm:$0xff]
      %v1127 = vld [vmem:[#allocation2 + $0x118] sm:$0xff]
      %v1128 = vld [vmem:[#allocation2 + $0x120] sm:$0xff]
      %v1129 = vld [vmem:[#allocation2 + $0x128] sm:$0xff]
      %v1130 = vld [vmem:[#allocation2 + $0x130] sm:$0xff]
      %v1131 = vld [vmem:[#allocation2 + $0x138] sm:$0xff]
      %v1132 = vld [vmem:[#allocation2 + $0x140] sm:$0xff]
      %v1133 = vld [vmem:[#allocation2 + $0x148] sm:$0xff]
      %v1134 = vld [vmem:[#allocation2 + $0x150] sm:$0xff]
      %v1135 = vld [vmem:[#allocation2 + $0x158] sm:$0xff]
      %v1136 = vld [vmem:[#allocation2 + $0x160] sm:$0xff]
      %v1137 = vld [vmem:[#allocation2 + $0x168] sm:$0xff]
      %v1138 = vld [vmem:[#allocation2 + $0x170] sm:$0xff]
      %v1139 = vld [vmem:[#allocation2 + $0x178] sm:$0xff]
      %v1140 = vld [vmem:[#allocation2 + $0x180] sm:$0xff]
      %v1141 = vld [vmem:[#allocation2 + $0x188] sm:$0xff]
      %v1142 = vld [vmem:[#allocation2 + $0x190] sm:$0xff]
      %v1143 = vld [vmem:[#allocation2 + $0x198] sm:$0xff]
      %v1144 = vld [vmem:[#allocation2 + $0x1a0] sm:$0xff]
      %v1145 = vld [vmem:[#allocation2 + $0x1a8] sm:$0xff]
      %v1146 = vld [vmem:[#allocation2 + $0x1b0] sm:$0xff]
      %v1147 = vld [vmem:[#allocation2 + $0x1b8] sm:$0xff]
      %v1148 = vld [vmem:[#allocation2 + $0x1c0] sm:$0xff]
      %v1149 = vld [vmem:[#allocation2 + $0x1c8] sm:$0xff]
      %v1150 = vld [vmem:[#allocation2 + $0x1d0] sm:$0xff]
      %v1151 = vld [vmem:[#allocation2 + $0x1d8] sm:$0xff]
      %v1152 = vld [vmem:[#allocation2 + $0x1e0] sm:$0xff]
      %v1153 = vld [vmem:[#allocation2 + $0x1e8] sm:$0xff]
      %v1154 = vld [vmem:[#allocation2 + $0x1f0] sm:$0xff]
      %v1155 = vld [vmem:[#allocation2 + $0x1f8] sm:$0xff]
      %v1156 = vld [vmem:[#allocation2 + $0x200] sm:$0xff]
      %v1157 = vld [vmem:[#allocation2 + $0x208] sm:$0xff]
      %v1158 = vld [vmem:[#allocation2 + $0x210] sm:$0xff]
      %v1159 = vld [vmem:[#allocation2 + $0x218] sm:$0xff]
      %v1160 = vld [vmem:[#allocation2 + $0x220] sm:$0xff]
      %v1161 = vld [vmem:[#allocation2 + $0x228] sm:$0xff]
      %v1162 = vld [vmem:[#allocation2 + $0x230] sm:$0xff]
      %v1163 = vld [vmem:[#allocation2 + $0x238] sm:$0xff]
      %1165 = vset.pattern.permute.xlu0 0
      %1166 = vperm.xlu0 %1165, %v337
      %v1167 = vpop.permute.xlu0 %1166
      %1170 = vset.pattern.permute.xlu0 0
      %1171 = vperm.xlu0 %1170, %v338
      %v1172 = vpop.permute.xlu0 %1171
      %v1176 = vunpack.c.l.b16 %v335
      %v1177 = vunpack.c.l.b16 %v336
      %v1178 = vpack.c.b16 %v1177, %v1176
      %v1251 = vunpack.c.l.b16 %v1092
      %v1252 = vunpack.c.h.b16 %v1092
      %v1253 = vunpack.c.l.b16 %v1093
      %v1254 = vunpack.c.h.b16 %v1093
      %v1255 = vunpack.c.l.b16 %v1094
      %v1256 = vunpack.c.h.b16 %v1094
      %v1257 = vunpack.c.l.b16 %v1095
      %v1258 = vunpack.c.h.b16 %v1095
      %v1259 = vunpack.c.l.b16 %v1096
      %v1260 = vunpack.c.h.b16 %v1096
      %v1261 = vunpack.c.l.b16 %v1097
      %v1262 = vunpack.c.h.b16 %v1097
      %v1263 = vunpack.c.l.b16 %v1098
      %v1264 = vunpack.c.h.b16 %v1098
      %v1265 = vunpack.c.l.b16 %v1099
      %v1266 = vunpack.c.h.b16 %v1099
      %v1267 = vunpack.c.l.b16 %v1100
      %v1268 = vunpack.c.h.b16 %v1100
      %v1269 = vunpack.c.l.b16 %v1101
      %v1270 = vunpack.c.h.b16 %v1101
      %v1271 = vunpack.c.l.b16 %v1102
      %v1272 = vunpack.c.h.b16 %v1102
      %v1273 = vunpack.c.l.b16 %v1103
      %v1274 = vunpack.c.h.b16 %v1103
      %v1275 = vunpack.c.l.b16 %v1104
      %v1276 = vunpack.c.h.b16 %v1104
      %v1277 = vunpack.c.l.b16 %v1105
      %v1278 = vunpack.c.h.b16 %v1105
      %v1279 = vunpack.c.l.b16 %v1106
      %v1280 = vunpack.c.h.b16 %v1106
      %v1281 = vunpack.c.l.b16 %v1107
      %v1282 = vunpack.c.h.b16 %v1107
      %v1283 = vunpack.c.l.b16 %v1108
      %v1284 = vunpack.c.h.b16 %v1108
      %v1285 = vunpack.c.l.b16 %v1109
      %v1286 = vunpack.c.h.b16 %v1109
      %v1287 = vunpack.c.l.b16 %v1110
      %v1288 = vunpack.c.h.b16 %v1110
      %v1289 = vunpack.c.l.b16 %v1111
      %v1290 = vunpack.c.h.b16 %v1111
      %v1291 = vunpack.c.l.b16 %v1112
      %v1292 = vunpack.c.h.b16 %v1112
      %v1293 = vunpack.c.l.b16 %v1113
      %v1294 = vunpack.c.h.b16 %v1113
      %v1295 = vunpack.c.l.b16 %v1114
      %v1296 = vunpack.c.h.b16 %v1114
      %v1297 = vunpack.c.l.b16 %v1115
      %v1298 = vunpack.c.h.b16 %v1115
      %v1299 = vunpack.c.l.b16 %v1116
      %v1300 = vunpack.c.h.b16 %v1116
      %v1301 = vunpack.c.l.b16 %v1117
      %v1302 = vunpack.c.h.b16 %v1117
      %v1303 = vunpack.c.l.b16 %v1118
      %v1304 = vunpack.c.h.b16 %v1118
      %v1305 = vunpack.c.l.b16 %v1119
      %v1306 = vunpack.c.h.b16 %v1119
      %v1307 = vunpack.c.l.b16 %v1120
      %v1308 = vunpack.c.h.b16 %v1120
      %v1309 = vunpack.c.l.b16 %v1121
      %v1310 = vunpack.c.h.b16 %v1121
      %v1311 = vunpack.c.l.b16 %v1122
      %v1312 = vunpack.c.h.b16 %v1122
      %v1313 = vunpack.c.l.b16 %v1123
      %v1314 = vunpack.c.h.b16 %v1123
      %v1315 = vunpack.c.l.b16 %v1124
      %v1316 = vunpack.c.h.b16 %v1124
      %v1317 = vunpack.c.l.b16 %v1125
      %v1318 = vunpack.c.h.b16 %v1125
      %v1319 = vunpack.c.l.b16 %v1126
      %v1320 = vunpack.c.h.b16 %v1126
      %v1321 = vunpack.c.l.b16 %v1127
      %v1322 = vunpack.c.h.b16 %v1127
      %v1323 = vunpack.c.l.b16 %v1128
      %v1324 = vunpack.c.h.b16 %v1128
      %v1325 = vunpack.c.l.b16 %v1129
      %v1326 = vunpack.c.h.b16 %v1129
      %v1327 = vunpack.c.l.b16 %v1130
      %v1328 = vunpack.c.h.b16 %v1130
      %v1329 = vunpack.c.l.b16 %v1131
      %v1330 = vunpack.c.h.b16 %v1131
      %v1331 = vunpack.c.l.b16 %v1132
      %v1332 = vunpack.c.h.b16 %v1132
      %v1333 = vunpack.c.l.b16 %v1133
      %v1334 = vunpack.c.h.b16 %v1133
      %v1335 = vunpack.c.l.b16 %v1134
      %v1336 = vunpack.c.h.b16 %v1134
      %v1337 = vunpack.c.l.b16 %v1135
      %v1338 = vunpack.c.h.b16 %v1135
      %v1339 = vunpack.c.l.b16 %v1136
      %v1340 = vunpack.c.h.b16 %v1136
      %v1341 = vunpack.c.l.b16 %v1137
      %v1342 = vunpack.c.h.b16 %v1137
      %v1343 = vunpack.c.l.b16 %v1138
      %v1344 = vunpack.c.h.b16 %v1138
      %v1345 = vunpack.c.l.b16 %v1139
      %v1346 = vunpack.c.h.b16 %v1139
      %v1347 = vunpack.c.l.b16 %v1140
      %v1348 = vunpack.c.h.b16 %v1140
      %v1349 = vunpack.c.l.b16 %v1141
      %v1350 = vunpack.c.h.b16 %v1141
      %v1351 = vunpack.c.l.b16 %v1142
      %v1352 = vunpack.c.h.b16 %v1142
      %v1353 = vunpack.c.l.b16 %v1143
      %v1354 = vunpack.c.h.b16 %v1143
      %v1355 = vunpack.c.l.b16 %v1144
      %v1356 = vunpack.c.h.b16 %v1144
      %v1357 = vunpack.c.l.b16 %v1145
      %v1358 = vunpack.c.h.b16 %v1145
      %v1359 = vunpack.c.l.b16 %v1146
      %v1360 = vunpack.c.h.b16 %v1146
      %v1361 = vunpack.c.l.b16 %v1147
      %v1362 = vunpack.c.h.b16 %v1147
      %v1363 = vunpack.c.l.b16 %v1148
      %v1364 = vunpack.c.h.b16 %v1148
      %v1365 = vunpack.c.l.b16 %v1149
      %v1366 = vunpack.c.h.b16 %v1149
      %v1367 = vunpack.c.l.b16 %v1150
      %v1368 = vunpack.c.h.b16 %v1150
      %v1369 = vunpack.c.l.b16 %v1151
      %v1370 = vunpack.c.h.b16 %v1151
      %v1371 = vunpack.c.l.b16 %v1152
      %v1372 = vunpack.c.h.b16 %v1152
      %v1373 = vunpack.c.l.b16 %v1153
      %v1374 = vunpack.c.h.b16 %v1153
      %v1375 = vunpack.c.l.b16 %v1154
      %v1376 = vunpack.c.h.b16 %v1154
      %v1377 = vunpack.c.l.b16 %v1155
      %v1378 = vunpack.c.h.b16 %v1155
      %v1379 = vunpack.c.l.b16 %v1156
      %v1380 = vunpack.c.h.b16 %v1156
      %v1381 = vunpack.c.l.b16 %v1157
      %v1382 = vunpack.c.h.b16 %v1157
      %v1383 = vunpack.c.l.b16 %v1158
      %v1384 = vunpack.c.h.b16 %v1158
      %v1385 = vunpack.c.l.b16 %v1159
      %v1386 = vunpack.c.h.b16 %v1159
      %v1387 = vunpack.c.l.b16 %v1160
      %v1388 = vunpack.c.h.b16 %v1160
      %v1389 = vunpack.c.l.b16 %v1161
      %v1390 = vunpack.c.h.b16 %v1161
      %v1391 = vunpack.c.l.b16 %v1162
      %v1392 = vunpack.c.h.b16 %v1162
      %v1393 = vunpack.c.l.b16 %v1163
      %v1394 = vunpack.c.h.b16 %v1163
      %v1395 = vpack.c.b16 %v1267, %v1251
      %v1396 = vpack.c.b16 %v1268, %v1252
      %v1397 = vpack.c.b16 %v1269, %v1253
      %v1398 = vpack.c.b16 %v1270, %v1254
      %v1399 = vpack.c.b16 %v1271, %v1255
      %v1400 = vpack.c.b16 %v1272, %v1256
      %v1401 = vpack.c.b16 %v1273, %v1257
      %v1402 = vpack.c.b16 %v1274, %v1258
      %v1403 = vpack.c.b16 %v1275, %v1259
      %v1404 = vpack.c.b16 %v1276, %v1260
      %v1405 = vpack.c.b16 %v1277, %v1261
      %v1406 = vpack.c.b16 %v1278, %v1262
      %v1407 = vpack.c.b16 %v1279, %v1263
      %v1408 = vpack.c.b16 %v1280, %v1264
      %v1409 = vpack.c.b16 %v1281, %v1265
      %v1410 = vpack.c.b16 %v1282, %v1266
      %v1411 = vpack.c.b16 %v1299, %v1283
      %v1412 = vpack.c.b16 %v1300, %v1284
      %v1413 = vpack.c.b16 %v1301, %v1285
      %v1414 = vpack.c.b16 %v1302, %v1286
      %v1415 = vpack.c.b16 %v1303, %v1287
      %v1416 = vpack.c.b16 %v1304, %v1288
      %v1417 = vpack.c.b16 %v1305, %v1289
      %v1418 = vpack.c.b16 %v1306, %v1290
      %v1419 = vpack.c.b16 %v1307, %v1291
      %v1420 = vpack.c.b16 %v1308, %v1292
      %v1421 = vpack.c.b16 %v1309, %v1293
      %v1422 = vpack.c.b16 %v1310, %v1294
      %v1423 = vpack.c.b16 %v1311, %v1295
      %v1424 = vpack.c.b16 %v1312, %v1296
      %v1425 = vpack.c.b16 %v1313, %v1297
      %v1426 = vpack.c.b16 %v1314, %v1298
      %v1427 = vpack.c.b16 %v1331, %v1315
      %v1428 = vpack.c.b16 %v1332, %v1316
      %v1429 = vpack.c.b16 %v1333, %v1317
      %v1430 = vpack.c.b16 %v1334, %v1318
      %v1431 = vpack.c.b16 %v1335, %v1319
      %v1432 = vpack.c.b16 %v1336, %v1320
      %v1433 = vpack.c.b16 %v1337, %v1321
      %v1434 = vpack.c.b16 %v1338, %v1322
      %v1435 = vpack.c.b16 %v1339, %v1323
      %v1436 = vpack.c.b16 %v1340, %v1324
      %v1437 = vpack.c.b16 %v1341, %v1325
      %v1438 = vpack.c.b16 %v1342, %v1326
      %v1439 = vpack.c.b16 %v1343, %v1327
      %v1440 = vpack.c.b16 %v1344, %v1328
      %v1441 = vpack.c.b16 %v1345, %v1329
      %v1442 = vpack.c.b16 %v1346, %v1330
      %v1443 = vpack.c.b16 %v1363, %v1347
      %v1444 = vpack.c.b16 %v1364, %v1348
      %v1445 = vpack.c.b16 %v1365, %v1349
      %v1446 = vpack.c.b16 %v1366, %v1350
      %v1447 = vpack.c.b16 %v1367, %v1351
      %v1448 = vpack.c.b16 %v1368, %v1352
      %v1449 = vpack.c.b16 %v1369, %v1353
      %v1450 = vpack.c.b16 %v1370, %v1354
      %v1451 = vpack.c.b16 %v1371, %v1355
      %v1452 = vpack.c.b16 %v1372, %v1356
      %v1453 = vpack.c.b16 %v1373, %v1357
      %v1454 = vpack.c.b16 %v1374, %v1358
      %v1455 = vpack.c.b16 %v1375, %v1359
      %v1456 = vpack.c.b16 %v1376, %v1360
      %v1457 = vpack.c.b16 %v1377, %v1361
      %v1458 = vpack.c.b16 %v1378, %v1362
      %v1459 = vpack.c.b16 %v1379, %v1379
      %v1460 = vpack.c.b16 %v1380, %v1380
      %v1461 = vpack.c.b16 %v1381, %v1381
      %v1462 = vpack.c.b16 %v1382, %v1382
      %v1463 = vpack.c.b16 %v1383, %v1383
      %v1464 = vpack.c.b16 %v1384, %v1384
      %v1465 = vpack.c.b16 %v1385, %v1385
      %v1466 = vpack.c.b16 %v1386, %v1386
      %v1467 = vpack.c.b16 %v1387, %v1387
      %v1468 = vpack.c.b16 %v1388, %v1388
      %v1469 = vpack.c.b16 %v1389, %v1389
      %v1470 = vpack.c.b16 %v1390, %v1390
      %v1471 = vpack.c.b16 %v1391, %v1391
      %v1472 = vpack.c.b16 %v1392, %v1392
      %v1473 = vpack.c.b16 %v1393, %v1393
      %v1474 = vpack.c.b16 %v1394, %v1394
      %vm1539 = vcmask 588800
      %v1541 = vsel %vm1539, %v1178, 0
      %vm1543 = vcmask 1043456
      %v1545 = vsel %vm1543, %v1459, 0
      %v1548 = vsel %vm1543, %v1460, 0
      %v1551 = vsel %vm1543, %v1461, 0
      %v1554 = vsel %vm1543, %v1462, 0
      %v1557 = vsel %vm1543, %v1463, 0
      %v1560 = vsel %vm1543, %v1464, 0
      %v1563 = vsel %vm1543, %v1465, 0
      %v1566 = vsel %vm1543, %v1466, 0
      %v1569 = vsel %vm1543, %v1467, 0
      %v1572 = vsel %vm1543, %v1468, 0
      %v1575 = vsel %vm1543, %v1469, 0
      %v1578 = vsel %vm1543, %v1470, 0
      %v1581 = vsel %vm1543, %v1471, 0
      %v1584 = vsel %vm1543, %v1472, 0
      %v1587 = vsel %vm1543, %v1473, 0
      %v1590 = vsel %vm1543, %v1474, 0
      %1592 = vmatprep.subr.bf16.mxu0 0
      %1593 = vmatpush1.bf16.msra.mxu0 0
      %1594 = vmatprep.subr.bf16.mxu0 0
      %1595 = vmatpush1.bf16.msra.mxu0 0
      %1596 = vmatprep.subr.bf16.mxu0 0
      %1597 = vmatpush1.bf16.msra.mxu0 0
      %1598 = vmatprep.subr.bf16.mxu0 %v1548
      %1599 = vmatpush1.bf16.msra.mxu0 %v1545
      %1600 = vmatprep.subr.bf16.mxu0 %v1444
      %1601 = vmatpush1.bf16.msra.mxu0 %v1443
      %1602 = vmatprep.subr.bf16.mxu0 %v1428
      %1603 = vmatpush1.bf16.msra.mxu0 %v1427
      %1604 = vmatprep.subr.bf16.mxu0 %v1412
      %1605 = vmatpush1.bf16.msra.mxu0 %v1411
      %1606 = vmatprep.subr.bf16.mxu0 %v1396
      %1607 = vmatpush1.bf16.msra.mxu0 %v1395
      %1608 = vmatprep.subr.bf16.mxu0 0
      %1609 = vmatpush2.bf16.msra.mxu0 0
      %1610 = vmatprep.subr.bf16.mxu0 0
      %1611 = vmatpush2.bf16.msra.mxu0 0
      %1612 = vmatprep.subr.bf16.mxu0 0
      %1613 = vmatpush2.bf16.msra.mxu0 0
      %1614 = vmatprep.subr.bf16.mxu0 0
      %1615 = vmatpush2.bf16.msra.mxu0 0
      %1616 = vmatprep.subr.bf16.mxu0 0
      %1617 = vmatpush2.bf16.msra.mxu0 0
      %1618 = vmatprep.subr.bf16.mxu0 0
      %1619 = vmatpush2.bf16.msra.mxu0 0
      %1620 = vmatprep.subr.bf16.mxu0 0
      %1621 = vmatpush2.bf16.msra.mxu0 0
      %1622 = vmatprep.subr.bf16.mxu0 0
      %1623 = vmatpush2.bf16.msra.mxu0 0
      %1624 = vmatprep.mubr.bf16.mxu0 0
      %1625 = vmatmul.mubr.bf16.gmra.mxu0 %v1541
      %v1626 = vpop.f32.mrf.mxu0
      %v1627 = vadd.f32 %v1167, %v1626
      %v1628 = vpop.f32.mrf.mxu0
      %v1629 = vadd.f32 %v1167, %v1628
      %v1630 = vpop.f32.mrf.mxu0
      %v1631 = vadd.f32 %v1172, %v1630
      %v1632 = vpop.f32.mrf.mxu0
      %v1633 = vadd.f32 %v1172, %v1632
      %1634 = vdwg.mxu0
      %1635 = vmatprep.subr.bf16.mxu0 0
      %1636 = vmatpush1.bf16.msra.mxu0 0
      %1637 = vmatprep.subr.bf16.mxu0 0
      %1638 = vmatpush1.bf16.msra.mxu0 0
      %1639 = vmatprep.subr.bf16.mxu0 0
      %1640 = vmatpush1.bf16.msra.mxu0 0
      %1641 = vmatprep.subr.bf16.mxu0 %v1554
      %1642 = vmatpush1.bf16.msra.mxu0 %v1551
      %1643 = vmatprep.subr.bf16.mxu0 %v1446
      %1644 = vmatpush1.bf16.msra.mxu0 %v1445
      %1645 = vmatprep.subr.bf16.mxu0 %v1430
      %1646 = vmatpush1.bf16.msra.mxu0 %v1429
      %1647 = vmatprep.subr.bf16.mxu0 %v1414
      %1648 = vmatpush1.bf16.msra.mxu0 %v1413
      %1649 = vmatprep.subr.bf16.mxu0 %v1398
      %1650 = vmatpush1.bf16.msra.mxu0 %v1397
      %1651 = vmatprep.subr.bf16.mxu0 0
      %1652 = vmatpush2.bf16.msra.mxu0 0
      %1653 = vmatprep.subr.bf16.mxu0 0
      %1654 = vmatpush2.bf16.msra.mxu0 0
      %1655 = vmatprep.subr.bf16.mxu0 0
      %1656 = vmatpush2.bf16.msra.mxu0 0
      %1657 = vmatprep.subr.bf16.mxu0 0
      %1658 = vmatpush2.bf16.msra.mxu0 0
      %1659 = vmatprep.subr.bf16.mxu0 0
      %1660 = vmatpush2.bf16.msra.mxu0 0
      %1661 = vmatprep.subr.bf16.mxu0 0
      %1662 = vmatpush2.bf16.msra.mxu0 0
      %1663 = vmatprep.subr.bf16.mxu0 0
      %1664 = vmatpush2.bf16.msra.mxu0 0
      %1665 = vmatprep.subr.bf16.mxu0 0
      %1666 = vmatpush2.bf16.msra.mxu0 0
      %1667 = vmatprep.mubr.bf16.mxu0 0
      %1668 = vmatmul.mubr.bf16.gmra.mxu0 %v1541
      %v1669 = vpop.f32.mrf.mxu0
      %v1670 = vadd.f32 %v1167, %v1669
      %v1671 = vpop.f32.mrf.mxu0
      %v1672 = vadd.f32 %v1167, %v1671
      %v1673 = vpop.f32.mrf.mxu0
      %v1674 = vadd.f32 %v1172, %v1673
      %v1675 = vpop.f32.mrf.mxu0
      %v1676 = vadd.f32 %v1172, %v1675
      %1677 = vdwg.mxu0
      %1678 = vmatprep.subr.bf16.mxu0 0
      %1679 = vmatpush1.bf16.msra.mxu0 0
      %1680 = vmatprep.subr.bf16.mxu0 0
      %1681 = vmatpush1.bf16.msra.mxu0 0
      %1682 = vmatprep.subr.bf16.mxu0 0
      %1683 = vmatpush1.bf16.msra.mxu0 0
      %1684 = vmatprep.subr.bf16.mxu0 %v1560
      %1685 = vmatpush1.bf16.msra.mxu0 %v1557
      %1686 = vmatprep.subr.bf16.mxu0 %v1448
      %1687 = vmatpush1.bf16.msra.mxu0 %v1447
      %1688 = vmatprep.subr.bf16.mxu0 %v1432
      %1689 = vmatpush1.bf16.msra.mxu0 %v1431
      %1690 = vmatprep.subr.bf16.mxu0 %v1416
      %1691 = vmatpush1.bf16.msra.mxu0 %v1415
      %1692 = vmatprep.subr.bf16.mxu0 %v1400
      %1693 = vmatpush1.bf16.msra.mxu0 %v1399
      %1694 = vmatprep.subr.bf16.mxu0 0
      %1695 = vmatpush2.bf16.msra.mxu0 0
      %1696 = vmatprep.subr.bf16.mxu0 0
      %1697 = vmatpush2.bf16.msra.mxu0 0
      %1698 = vmatprep.subr.bf16.mxu0 0
      %1699 = vmatpush2.bf16.msra.mxu0 0
      %1700 = vmatprep.subr.bf16.mxu0 0
      %1701 = vmatpush2.bf16.msra.mxu0 0
      %1702 = vmatprep.subr.bf16.mxu0 0
      %1703 = vmatpush2.bf16.msra.mxu0 0
      %1704 = vmatprep.subr.bf16.mxu0 0
      %1705 = vmatpush2.bf16.msra.mxu0 0
      %1706 = vmatprep.subr.bf16.mxu0 0
      %1707 = vmatpush2.bf16.msra.mxu0 0
      %1708 = vmatprep.subr.bf16.mxu0 0
      %1709 = vmatpush2.bf16.msra.mxu0 0
      %1710 = vmatprep.mubr.bf16.mxu0 0
      %1711 = vmatmul.mubr.bf16.gmra.mxu0 %v1541
      %v1712 = vpop.f32.mrf.mxu0
      %v1713 = vadd.f32 %v1167, %v1712
      %v1714 = vpop.f32.mrf.mxu0
      %v1715 = vadd.f32 %v1167, %v1714
      %v1716 = vpop.f32.mrf.mxu0
      %v1717 = vadd.f32 %v1172, %v1716
      %v1718 = vpop.f32.mrf.mxu0
      %v1719 = vadd.f32 %v1172, %v1718
      %1720 = vdwg.mxu0
      %1721 = vmatprep.subr.bf16.mxu0 0
      %1722 = vmatpush1.bf16.msra.mxu0 0
      %1723 = vmatprep.subr.bf16.mxu0 0
      %1724 = vmatpush1.bf16.msra.mxu0 0
      %1725 = vmatprep.subr.bf16.mxu0 0
      %1726 = vmatpush1.bf16.msra.mxu0 0
      %1727 = vmatprep.subr.bf16.mxu0 %v1566
      %1728 = vmatpush1.bf16.msra.mxu0 %v1563
      %1729 = vmatprep.subr.bf16.mxu0 %v1450
      %1730 = vmatpush1.bf16.msra.mxu0 %v1449
      %1731 = vmatprep.subr.bf16.mxu0 %v1434
      %1732 = vmatpush1.bf16.msra.mxu0 %v1433
      %1733 = vmatprep.subr.bf16.mxu0 %v1418
      %1734 = vmatpush1.bf16.msra.mxu0 %v1417
      %1735 = vmatprep.subr.bf16.mxu0 %v1402
      %1736 = vmatpush1.bf16.msra.mxu0 %v1401
      %1737 = vmatprep.subr.bf16.mxu0 0
      %1738 = vmatpush2.bf16.msra.mxu0 0
      %1739 = vmatprep.subr.bf16.mxu0 0
      %1740 = vmatpush2.bf16.msra.mxu0 0
      %1741 = vmatprep.subr.bf16.mxu0 0
      %1742 = vmatpush2.bf16.msra.mxu0 0
      %1743 = vmatprep.subr.bf16.mxu0 0
      %1744 = vmatpush2.bf16.msra.mxu0 0
      %1745 = vmatprep.subr.bf16.mxu0 0
      %1746 = vmatpush2.bf16.msra.mxu0 0
      %1747 = vmatprep.subr.bf16.mxu0 0
      %1748 = vmatpush2.bf16.msra.mxu0 0
      %1749 = vmatprep.subr.bf16.mxu0 0
      %1750 = vmatpush2.bf16.msra.mxu0 0
      %1751 = vmatprep.subr.bf16.mxu0 0
      %1752 = vmatpush2.bf16.msra.mxu0 0
      %1753 = vmatprep.mubr.bf16.mxu0 0
      %1754 = vmatmul.mubr.bf16.gmra.mxu0 %v1541
      %v1755 = vpop.f32.mrf.mxu0
      %v1756 = vadd.f32 %v1167, %v1755
      %v1757 = vpop.f32.mrf.mxu0
      %v1758 = vadd.f32 %v1167, %v1757
      %v1759 = vpop.f32.mrf.mxu0
      %v1760 = vadd.f32 %v1172, %v1759
      %v1761 = vpop.f32.mrf.mxu0
      %v1762 = vadd.f32 %v1172, %v1761
      %1763 = vdwg.mxu0
      %1764 = vmatprep.subr.bf16.mxu0 0
      %1765 = vmatpush1.bf16.msra.mxu0 0
      %1766 = vmatprep.subr.bf16.mxu0 0
      %1767 = vmatpush1.bf16.msra.mxu0 0
      %1768 = vmatprep.subr.bf16.mxu0 0
      %1769 = vmatpush1.bf16.msra.mxu0 0
      %1770 = vmatprep.subr.bf16.mxu0 %v1572
      %1771 = vmatpush1.bf16.msra.mxu0 %v1569
      %1772 = vmatprep.subr.bf16.mxu0 %v1452
      %1773 = vmatpush1.bf16.msra.mxu0 %v1451
      %1774 = vmatprep.subr.bf16.mxu0 %v1436
      %1775 = vmatpush1.bf16.msra.mxu0 %v1435
      %1776 = vmatprep.subr.bf16.mxu0 %v1420
      %1777 = vmatpush1.bf16.msra.mxu0 %v1419
      %1778 = vmatprep.subr.bf16.mxu0 %v1404
      %1779 = vmatpush1.bf16.msra.mxu0 %v1403
      %1780 = vmatprep.subr.bf16.mxu0 0
      %1781 = vmatpush2.bf16.msra.mxu0 0
      %1782 = vmatprep.subr.bf16.mxu0 0
      %1783 = vmatpush2.bf16.msra.mxu0 0
      %1784 = vmatprep.subr.bf16.mxu0 0
      %1785 = vmatpush2.bf16.msra.mxu0 0
      %1786 = vmatprep.subr.bf16.mxu0 0
      %1787 = vmatpush2.bf16.msra.mxu0 0
      %1788 = vmatprep.subr.bf16.mxu0 0
      %1789 = vmatpush2.bf16.msra.mxu0 0
      %1790 = vmatprep.subr.bf16.mxu0 0
      %1791 = vmatpush2.bf16.msra.mxu0 0
      %1792 = vmatprep.subr.bf16.mxu0 0
      %1793 = vmatpush2.bf16.msra.mxu0 0
      %1794 = vmatprep.subr.bf16.mxu0 0
      %1795 = vmatpush2.bf16.msra.mxu0 0
      %1796 = vmatprep.mubr.bf16.mxu0 0
      %1797 = vmatmul.mubr.bf16.gmra.mxu0 %v1541
      %v1798 = vpop.f32.mrf.mxu0
      %v1799 = vadd.f32 %v1167, %v1798
      %v1800 = vpop.f32.mrf.mxu0
      %v1801 = vadd.f32 %v1167, %v1800
      %v1802 = vpop.f32.mrf.mxu0
      %v1803 = vadd.f32 %v1172, %v1802
      %v1804 = vpop.f32.mrf.mxu0
      %v1805 = vadd.f32 %v1172, %v1804
      %1806 = vdwg.mxu0
      %1807 = vmatprep.subr.bf16.mxu0 0
      %1808 = vmatpush1.bf16.msra.mxu0 0
      %1809 = vmatprep.subr.bf16.mxu0 0
      %1810 = vmatpush1.bf16.msra.mxu0 0
      %1811 = vmatprep.subr.bf16.mxu0 0
      %1812 = vmatpush1.bf16.msra.mxu0 0
      %1813 = vmatprep.subr.bf16.mxu0 %v1578
      %1814 = vmatpush1.bf16.msra.mxu0 %v1575
      %1815 = vmatprep.subr.bf16.mxu0 %v1454
      %1816 = vmatpush1.bf16.msra.mxu0 %v1453
      %1817 = vmatprep.subr.bf16.mxu0 %v1438
      %1818 = vmatpush1.bf16.msra.mxu0 %v1437
      %1819 = vmatprep.subr.bf16.mxu0 %v1422
      %1820 = vmatpush1.bf16.msra.mxu0 %v1421
      %1821 = vmatprep.subr.bf16.mxu0 %v1406
      %1822 = vmatpush1.bf16.msra.mxu0 %v1405
      %1823 = vmatprep.subr.bf16.mxu0 0
      %1824 = vmatpush2.bf16.msra.mxu0 0
      %1825 = vmatprep.subr.bf16.mxu0 0
      %1826 = vmatpush2.bf16.msra.mxu0 0
      %1827 = vmatprep.subr.bf16.mxu0 0
      %1828 = vmatpush2.bf16.msra.mxu0 0
      %1829 = vmatprep.subr.bf16.mxu0 0
      %1830 = vmatpush2.bf16.msra.mxu0 0
      %1831 = vmatprep.subr.bf16.mxu0 0
      %1832 = vmatpush2.bf16.msra.mxu0 0
      %1833 = vmatprep.subr.bf16.mxu0 0
      %1834 = vmatpush2.bf16.msra.mxu0 0
      %1835 = vmatprep.subr.bf16.mxu0 0
      %1836 = vmatpush2.bf16.msra.mxu0 0
      %1837 = vmatprep.subr.bf16.mxu0 0
      %1838 = vmatpush2.bf16.msra.mxu0 0
      %1839 = vmatprep.mubr.bf16.mxu0 0
      %1840 = vmatmul.mubr.bf16.gmra.mxu0 %v1541
      %v1841 = vpop.f32.mrf.mxu0
      %v1842 = vadd.f32 %v1167, %v1841
      %v1843 = vpop.f32.mrf.mxu0
      %v1844 = vadd.f32 %v1167, %v1843
      %v1845 = vpop.f32.mrf.mxu0
      %v1846 = vadd.f32 %v1172, %v1845
      %v1847 = vpop.f32.mrf.mxu0
      %v1848 = vadd.f32 %v1172, %v1847
      %1849 = vdwg.mxu0
      %1850 = vmatprep.subr.bf16.mxu0 0
      %1851 = vmatpush1.bf16.msra.mxu0 0
      %1852 = vmatprep.subr.bf16.mxu0 0
      %1853 = vmatpush1.bf16.msra.mxu0 0
      %1854 = vmatprep.subr.bf16.mxu0 0
      %1855 = vmatpush1.bf16.msra.mxu0 0
      %1856 = vmatprep.subr.bf16.mxu0 %v1584
      %1857 = vmatpush1.bf16.msra.mxu0 %v1581
      %1858 = vmatprep.subr.bf16.mxu0 %v1456
      %1859 = vmatpush1.bf16.msra.mxu0 %v1455
      %1860 = vmatprep.subr.bf16.mxu0 %v1440
      %1861 = vmatpush1.bf16.msra.mxu0 %v1439
      %1862 = vmatprep.subr.bf16.mxu0 %v1424
      %1863 = vmatpush1.bf16.msra.mxu0 %v1423
      %1864 = vmatprep.subr.bf16.mxu0 %v1408
      %1865 = vmatpush1.bf16.msra.mxu0 %v1407
      %1866 = vmatprep.subr.bf16.mxu0 0
      %1867 = vmatpush2.bf16.msra.mxu0 0
      %1868 = vmatprep.subr.bf16.mxu0 0
      %1869 = vmatpush2.bf16.msra.mxu0 0
      %1870 = vmatprep.subr.bf16.mxu0 0
      %1871 = vmatpush2.bf16.msra.mxu0 0
      %1872 = vmatprep.subr.bf16.mxu0 0
      %1873 = vmatpush2.bf16.msra.mxu0 0
      %1874 = vmatprep.subr.bf16.mxu0 0
      %1875 = vmatpush2.bf16.msra.mxu0 0
      %1876 = vmatprep.subr.bf16.mxu0 0
      %1877 = vmatpush2.bf16.msra.mxu0 0
      %1878 = vmatprep.subr.bf16.mxu0 0
      %1879 = vmatpush2.bf16.msra.mxu0 0
      %1880 = vmatprep.subr.bf16.mxu0 0
      %1881 = vmatpush2.bf16.msra.mxu0 0
      %1882 = vmatprep.mubr.bf16.mxu0 0
      %1883 = vmatmul.mubr.bf16.gmra.mxu0 %v1541
      %v1884 = vpop.f32.mrf.mxu0
      %v1885 = vadd.f32 %v1167, %v1884
      %v1886 = vpop.f32.mrf.mxu0
      %v1887 = vadd.f32 %v1167, %v1886
      %v1888 = vpop.f32.mrf.mxu0
      %v1889 = vadd.f32 %v1172, %v1888
      %v1890 = vpop.f32.mrf.mxu0
      %v1891 = vadd.f32 %v1172, %v1890
      %1892 = vdwg.mxu0
      %1893 = vmatprep.subr.bf16.mxu0 0
      %1894 = vmatpush1.bf16.msra.mxu0 0
      %1895 = vmatprep.subr.bf16.mxu0 0
      %1896 = vmatpush1.bf16.msra.mxu0 0
      %1897 = vmatprep.subr.bf16.mxu0 0
      %1898 = vmatpush1.bf16.msra.mxu0 0
      %1899 = vmatprep.subr.bf16.mxu0 %v1590
      %1900 = vmatpush1.bf16.msra.mxu0 %v1587
      %1901 = vmatprep.subr.bf16.mxu0 %v1458
      %1902 = vmatpush1.bf16.msra.mxu0 %v1457
      %1903 = vmatprep.subr.bf16.mxu0 %v1442
      %1904 = vmatpush1.bf16.msra.mxu0 %v1441
      %1905 = vmatprep.subr.bf16.mxu0 %v1426
      %1906 = vmatpush1.bf16.msra.mxu0 %v1425
      %1907 = vmatprep.subr.bf16.mxu0 %v1410
      %1908 = vmatpush1.bf16.msra.mxu0 %v1409
      %1909 = vmatprep.subr.bf16.mxu0 0
      %1910 = vmatpush2.bf16.msra.mxu0 0
      %1911 = vmatprep.subr.bf16.mxu0 0
      %1912 = vmatpush2.bf16.msra.mxu0 0
      %1913 = vmatprep.subr.bf16.mxu0 0
      %1914 = vmatpush2.bf16.msra.mxu0 0
      %1915 = vmatprep.subr.bf16.mxu0 0
      %1916 = vmatpush2.bf16.msra.mxu0 0
      %1917 = vmatprep.subr.bf16.mxu0 0
      %1918 = vmatpush2.bf16.msra.mxu0 0
      %1919 = vmatprep.subr.bf16.mxu0 0
      %1920 = vmatpush2.bf16.msra.mxu0 0
      %1921 = vmatprep.subr.bf16.mxu0 0
      %1922 = vmatpush2.bf16.msra.mxu0 0
      %1923 = vmatprep.subr.bf16.mxu0 0
      %1924 = vmatpush2.bf16.msra.mxu0 0
      %1925 = vmatprep.mubr.bf16.mxu0 0
      %1926 = vmatmul.mubr.bf16.gmra.mxu0 %v1541
      %v1927 = vpop.f32.mrf.mxu0
      %v1928 = vadd.f32 %v1167, %v1927
      %v1929 = vpop.f32.mrf.mxu0
      %v1930 = vadd.f32 %v1167, %v1929
      %v1931 = vpop.f32.mrf.mxu0
      %v1932 = vadd.f32 %v1172, %v1931
      %v1933 = vpop.f32.mrf.mxu0
      %v1934 = vadd.f32 %v1172, %v1933
      %1935 = vdwg.mxu0
      %v1936 = vmax.f32 %v1627, 0.0
      %v1937 = vmax.f32 %v1629, 0.0
      %v1938 = vmax.f32 %v1670, 0.0
      %v1939 = vmax.f32 %v1672, 0.0
      %v1940 = vmax.f32 %v1713, 0.0
      %v1941 = vmax.f32 %v1715, 0.0
      %v1942 = vmax.f32 %v1756, 0.0
      %v1943 = vmax.f32 %v1758, 0.0
      %v1944 = vmax.f32 %v1799, 0.0
      %v1945 = vmax.f32 %v1801, 0.0
      %v1946 = vmax.f32 %v1842, 0.0
      %v1947 = vmax.f32 %v1844, 0.0
      %v1948 = vmax.f32 %v1885, 0.0
      %v1949 = vmax.f32 %v1887, 0.0
      %v1950 = vmax.f32 %v1928, 0.0
      %v1951 = vmax.f32 %v1930, 0.0
      %v1952 = vmax.f32 %v1631, 0.0
      %v1953 = vmax.f32 %v1633, 0.0
      %v1954 = vmax.f32 %v1674, 0.0
      %v1955 = vmax.f32 %v1676, 0.0
      %v1956 = vmax.f32 %v1717, 0.0
      %v1957 = vmax.f32 %v1719, 0.0
      %v1958 = vmax.f32 %v1760, 0.0
      %v1959 = vmax.f32 %v1762, 0.0
      %v1960 = vmax.f32 %v1803, 0.0
      %v1961 = vmax.f32 %v1805, 0.0
      %v1962 = vmax.f32 %v1846, 0.0
      %v1963 = vmax.f32 %v1848, 0.0
      %v1964 = vmax.f32 %v1889, 0.0
      %v1965 = vmax.f32 %v1891, 0.0
      %v1966 = vmax.f32 %v1932, 0.0
      %v1967 = vmax.f32 %v1934, 0.0
      %s1968 = smul.addr %s348, 4
      %s1969 = scalar_lea.vmem [#allocation9], %s1968
      %v1970 = vld [vmem:[%s1969] sm:$0xff]
      %v1971 = vld [vmem:[%s1969 + $0x8] sm:$0xff]
      %v1972 = vld [vmem:[%s1969 + $0x10] sm:$0xff]
      %v1973 = vld [vmem:[%s1969 + $0x18] sm:$0xff]
      %v1974 = vld [vmem:[%s1969 + $0x20] sm:$0xff]
      %v1975 = vld [vmem:[%s1969 + $0x28] sm:$0xff]
      %v1976 = vld [vmem:[%s1969 + $0x30] sm:$0xff]
      %v1977 = vld [vmem:[%s1969 + $0x38] sm:$0xff]
      %v1978 = vld [vmem:[%s1969 + $0x200] sm:$0xff]
      %v1979 = vld [vmem:[%s1969 + $0x208] sm:$0xff]
      %v1980 = vld [vmem:[%s1969 + $0x210] sm:$0xff]
      %v1981 = vld [vmem:[%s1969 + $0x218] sm:$0xff]
      %v1982 = vld [vmem:[%s1969 + $0x220] sm:$0xff]
      %v1983 = vld [vmem:[%s1969 + $0x228] sm:$0xff]
      %v1984 = vld [vmem:[%s1969 + $0x230] sm:$0xff]
      %v1985 = vld [vmem:[%s1969 + $0x238] sm:$0xff]
      %v1986 = vunpack.c.l.bf16 %v1970
      %v1987 = vunpack.c.h.bf16 %v1970
      %v1988 = vunpack.c.l.bf16 %v1971
      %v1989 = vunpack.c.h.bf16 %v1971
      %v1990 = vunpack.c.l.bf16 %v1972
      %v1991 = vunpack.c.h.bf16 %v1972
      %v1992 = vunpack.c.l.bf16 %v1973
      %v1993 = vunpack.c.h.bf16 %v1973
      %v1994 = vunpack.c.l.bf16 %v1974
      %v1995 = vunpack.c.h.bf16 %v1974
      %v1996 = vunpack.c.l.bf16 %v1975
      %v1997 = vunpack.c.h.bf16 %v1975
      %v1998 = vunpack.c.l.bf16 %v1976
      %v1999 = vunpack.c.h.bf16 %v1976
      %v2000 = vunpack.c.l.bf16 %v1977
      %v2001 = vunpack.c.h.bf16 %v1977
      %v2002 = vunpack.c.l.bf16 %v1978
      %v2003 = vunpack.c.h.bf16 %v1978
      %v2004 = vunpack.c.l.bf16 %v1979
      %v2005 = vunpack.c.h.bf16 %v1979
      %v2006 = vunpack.c.l.bf16 %v1980
      %v2007 = vunpack.c.h.bf16 %v1980
      %v2008 = vunpack.c.l.bf16 %v1981
      %v2009 = vunpack.c.h.bf16 %v1981
      %v2010 = vunpack.c.l.bf16 %v1982
      %v2011 = vunpack.c.h.bf16 %v1982
      %v2012 = vunpack.c.l.bf16 %v1983
      %v2013 = vunpack.c.h.bf16 %v1983
      %v2014 = vunpack.c.l.bf16 %v1984
      %v2015 = vunpack.c.h.bf16 %v1984
      %v2016 = vunpack.c.l.bf16 %v1985
      %v2017 = vunpack.c.h.bf16 %v1985
      %v2018 = vmul.f32 %v1936, %v1986
      %v2019 = vmul.f32 %v1937, %v1987
      %v2020 = vmul.f32 %v1938, %v1988
      %v2021 = vmul.f32 %v1939, %v1989
      %v2022 = vmul.f32 %v1940, %v1990
      %v2023 = vmul.f32 %v1941, %v1991
      %v2024 = vmul.f32 %v1942, %v1992
      %v2025 = vmul.f32 %v1943, %v1993
      %v2026 = vmul.f32 %v1944, %v1994
      %v2027 = vmul.f32 %v1945, %v1995
      %v2028 = vmul.f32 %v1946, %v1996
      %v2029 = vmul.f32 %v1947, %v1997
      %v2030 = vmul.f32 %v1948, %v1998
      %v2031 = vmul.f32 %v1949, %v1999
      %v2032 = vmul.f32 %v1950, %v2000
      %v2033 = vmul.f32 %v1951, %v2001
      %v2034 = vmul.f32 %v1952, %v2002
      %v2035 = vmul.f32 %v1953, %v2003
      %v2036 = vmul.f32 %v1954, %v2004
      %v2037 = vmul.f32 %v1955, %v2005
      %v2038 = vmul.f32 %v1956, %v2006
      %v2039 = vmul.f32 %v1957, %v2007
      %v2040 = vmul.f32 %v1958, %v2008
      %v2041 = vmul.f32 %v1959, %v2009
      %v2042 = vmul.f32 %v1960, %v2010
      %v2043 = vmul.f32 %v1961, %v2011
      %v2044 = vmul.f32 %v1962, %v2012
      %v2045 = vmul.f32 %v1963, %v2013
      %v2046 = vmul.f32 %v1964, %v2014
      %v2047 = vmul.f32 %v1965, %v2015
      %v2048 = vmul.f32 %v1966, %v2016
      %v2049 = vmul.f32 %v1967, %v2017
      %v2050 = vadd.f32 %v2018, %v2019
      %v2051 = vadd.f32 %v2050, %v2020
      %v2052 = vadd.f32 %v2051, %v2021
      %v2053 = vadd.f32 %v2052, %v2022
      %v2054 = vadd.f32 %v2053, %v2023
      %v2055 = vadd.f32 %v2054, %v2024
      %v2056 = vadd.f32 %v2055, %v2025
      %v2057 = vadd.f32 %v2056, %v2026
      %v2058 = vadd.f32 %v2057, %v2027
      %v2059 = vadd.f32 %v2058, %v2028
      %v2060 = vadd.f32 %v2059, %v2029
      %v2061 = vadd.f32 %v2060, %v2030
      %v2062 = vadd.f32 %v2061, %v2031
      %v2063 = vadd.f32 %v2062, %v2032
      %v2064 = vadd.f32 %v2063, %v2033
      %2065 = vadd.xlane.f32.xlu0 %v2064
      %v2066 = vpop.xlane.xlu0 %2065
      %v2067 = vadd.f32 %v2034, %v2035
      %v2068 = vadd.f32 %v2067, %v2036
      %v2069 = vadd.f32 %v2068, %v2037
      %v2070 = vadd.f32 %v2069, %v2038
      %v2071 = vadd.f32 %v2070, %v2039
      %v2072 = vadd.f32 %v2071, %v2040
      %v2073 = vadd.f32 %v2072, %v2041
      %v2074 = vadd.f32 %v2073, %v2042
      %v2075 = vadd.f32 %v2074, %v2043
      %v2076 = vadd.f32 %v2075, %v2044
      %v2077 = vadd.f32 %v2076, %v2045
      %v2078 = vadd.f32 %v2077, %v2046
      %v2079 = vadd.f32 %v2078, %v2047
      %v2080 = vadd.f32 %v2079, %v2048
      %v2081 = vadd.f32 %v2080, %v2049
      %2082 = vadd.xlane.f32.xlu0 %v2081
      %v2083 = vpop.xlane.xlu0 %2082
      %v2084 = vadd.f32 %v345, %v2066
      %v2085 = vadd.f32 %v346, %v2083
    $region38: #{tpu_custom_call.1} parent=1 // loop_footer
      %s344 = sadd.s32 1, %s340
    $region39: #{tpu_custom_call.1} parent=1 // loop_footer_branch
      %339 = sbr.rel target = $region35
    $region40: #{tpu_custom_call.1} parent=1 // loop_exit
      _
    %v2086 = vadd.f32 %v345, %v346
    %v2087 = vrot.slane %v2086, 4
    %v2088 = vadd.f32 %v2086, %v2087
    %v2089 = vrot.slane %v2088, 2
    %v2090 = vadd.f32 %v2088, %v2089
    %v2091 = vrot.slane %v2090, 1
    %v2092 = vadd.f32 %v2090, %v2091
    %s2093 = sld [smem:[#allocation3]]
    %v2094 = vstv %s2093
    %v2095 = vadd.f32 %v2092, %v2094
    %2096 = vst [vmem:[#allocation10] sm:$0x1] %v2095
    loop: start=0, step=1, limit=8
    $region41: #{tpu_custom_call.1} parent=1 // loop_pre_header
      _
    $region42: #{tpu_custom_call.1} parent=1 // loop_header
      %s2098 = sphi 0, %s2102
      %p2099 = scmp.ge.s32.totalorder %s2098, 8
      %v2103 = vphi 0.0, %v3843
      %v2104 = vphi 0.0, %v3844
    $region43: #{tpu_custom_call.1} parent=1 // loop_header_branch
      %2101 = sbr.rel (%p2099) target = $region47
    $region44: #{tpu_custom_call.1} parent=1 // loop_body
      %s2105 = smul.u32 %s2098, 2048
      %s2106 = sshra.s32 %s2105, 7
      %s2107 = sand.u32 %s2105, 127
      %s2108 = sadd.s32 %s2106, 130
      %s2109 = smul.addr %s2108, 8
      %s2110 = scalar_lea.vmem [#allocation7], %s2109
      %v2111 = vld [vmem:[%s2110] sm:$0xff]
      %v2112 = vld [vmem:[%s2110 + $0x8] sm:$0xff]
      %v2113 = vld [vmem:[%s2110 + $0x10] sm:$0xff]
      %v2114 = vld [vmem:[%s2110 + $0x18] sm:$0xff]
      %v2115 = vld [vmem:[%s2110 + $0x20] sm:$0xff]
      %v2116 = vld [vmem:[%s2110 + $0x28] sm:$0xff]
      %v2117 = vld [vmem:[%s2110 + $0x30] sm:$0xff]
      %v2118 = vld [vmem:[%s2110 + $0x38] sm:$0xff]
      %v2119 = vld [vmem:[%s2110 + $0x40] sm:$0xff]
      %v2120 = vld [vmem:[%s2110 + $0x48] sm:$0xff]
      %v2121 = vld [vmem:[%s2110 + $0x50] sm:$0xff]
      %v2122 = vld [vmem:[%s2110 + $0x58] sm:$0xff]
      %v2123 = vld [vmem:[%s2110 + $0x60] sm:$0xff]
      %v2124 = vld [vmem:[%s2110 + $0x68] sm:$0xff]
      %v2125 = vld [vmem:[%s2110 + $0x70] sm:$0xff]
      %v2126 = vld [vmem:[%s2110 + $0x78] sm:$0xff]
      %v2127 = vld [vmem:[%s2110 + $0x80] sm:$0xff]
      %v2128 = vld [vmem:[%s2110 + $0x88] sm:$0xff]
      %2130 = vrot.lane.b32.xlu0 %v2128, 1
      %v2131 = vpop.permute.xlu0 %2130
      %2150 = vrot.lane.b32.xlu0 %v2111, 1
      %v2151 = vpop.permute.xlu0 %2150
      %2152 = vrot.lane.b32.xlu0 %v2112, 1
      %v2153 = vpop.permute.xlu0 %2152
      %2154 = vrot.lane.b32.xlu0 %v2113, 1
      %v2155 = vpop.permute.xlu0 %2154
      %2156 = vrot.lane.b32.xlu0 %v2114, 1
      %v2157 = vpop.permute.xlu0 %2156
      %2158 = vrot.lane.b32.xlu0 %v2115, 1
      %v2159 = vpop.permute.xlu0 %2158
      %2160 = vrot.lane.b32.xlu0 %v2116, 1
      %v2161 = vpop.permute.xlu0 %2160
      %2162 = vrot.lane.b32.xlu0 %v2117, 1
      %v2163 = vpop.permute.xlu0 %2162
      %2164 = vrot.lane.b32.xlu0 %v2118, 1
      %v2165 = vpop.permute.xlu0 %2164
      %2166 = vrot.lane.b32.xlu0 %v2119, 1
      %v2167 = vpop.permute.xlu0 %2166
      %2168 = vrot.lane.b32.xlu0 %v2120, 1
      %v2169 = vpop.permute.xlu0 %2168
      %2170 = vrot.lane.b32.xlu0 %v2121, 1
      %v2171 = vpop.permute.xlu0 %2170
      %2172 = vrot.lane.b32.xlu0 %v2122, 1
      %v2173 = vpop.permute.xlu0 %2172
      %2174 = vrot.lane.b32.xlu0 %v2123, 1
      %v2175 = vpop.permute.xlu0 %2174
      %2176 = vrot.lane.b32.xlu0 %v2124, 1
      %v2177 = vpop.permute.xlu0 %2176
      %2178 = vrot.lane.b32.xlu0 %v2125, 1
      %v2179 = vpop.permute.xlu0 %2178
      %2180 = vrot.lane.b32.xlu0 %v2126, 1
      %v2181 = vpop.permute.xlu0 %2180
      %2182 = vrot.lane.b32.xlu0 %v2127, 1
      %v2183 = vpop.permute.xlu0 %2182
      %vm2184 = vcmask 7168
      %v2185 = vsel %vm2184, %v2151, %v2153
      %v2186 = vsel %vm2184, %v2153, %v2155
      %v2187 = vsel %vm2184, %v2155, %v2157
      %v2188 = vsel %vm2184, %v2157, %v2159
      %v2189 = vsel %vm2184, %v2159, %v2161
      %v2190 = vsel %vm2184, %v2161, %v2163
      %v2191 = vsel %vm2184, %v2163, %v2165
      %v2192 = vsel %vm2184, %v2165, %v2167
      %v2193 = vsel %vm2184, %v2167, %v2169
      %v2194 = vsel %vm2184, %v2169, %v2171
      %v2195 = vsel %vm2184, %v2171, %v2173
      %v2196 = vsel %vm2184, %v2173, %v2175
      %v2197 = vsel %vm2184, %v2175, %v2177
      %v2198 = vsel %vm2184, %v2177, %v2179
      %v2199 = vsel %vm2184, %v2179, %v2181
      %v2200 = vsel %vm2184, %v2181, %v2183
      %v2201 = vsel %vm2184, %v2183, %v2131
      %v2220 = vsel %vm2184, %v2131, %v2151
      %v2221 = vsel %vm299, 0.0, %v2220
      %v2222 = vsel %vm300, 0.0, %v2185
      %v2223 = vsel %vm301, 0.0, %v2186
      %v2224 = vsel %vm302, 0.0, %v2187
      %v2225 = vsel %vm303, 0.0, %v2188
      %v2226 = vsel %vm304, 0.0, %v2189
      %v2227 = vsel %vm305, 0.0, %v2190
      %v2228 = vsel %vm306, 0.0, %v2191
      %v2229 = vsel %vm307, 0.0, %v2192
      %v2230 = vsel %vm308, 0.0, %v2193
      %v2231 = vsel %vm309, 0.0, %v2194
      %v2232 = vsel %vm310, 0.0, %v2195
      %v2233 = vsel %vm311, 0.0, %v2196
      %v2234 = vsel %vm312, 0.0, %v2197
      %v2235 = vsel %vm313, 0.0, %v2198
      %v2236 = vsel %vm314, 0.0, %v2199
      %v2237 = vsel %vm315, 0.0, %v2200
      %v2238 = vsel %vm316, 0.0, %v2201
      %2239 = vrot.lane.b32.xlu0 %v2111, 127
      %v2240 = vpop.permute.xlu0 %2239
      %2241 = vrot.lane.b32.xlu0 %v2112, 127
      %v2242 = vpop.permute.xlu0 %2241
      %2243 = vrot.lane.b32.xlu0 %v2113, 127
      %v2244 = vpop.permute.xlu0 %2243
      %2245 = vrot.lane.b32.xlu0 %v2114, 127
      %v2246 = vpop.permute.xlu0 %2245
      %2247 = vrot.lane.b32.xlu0 %v2115, 127
      %v2248 = vpop.permute.xlu0 %2247
      %2249 = vrot.lane.b32.xlu0 %v2116, 127
      %v2250 = vpop.permute.xlu0 %2249
      %2251 = vrot.lane.b32.xlu0 %v2117, 127
      %v2252 = vpop.permute.xlu0 %2251
      %2253 = vrot.lane.b32.xlu0 %v2118, 127
      %v2254 = vpop.permute.xlu0 %2253
      %2255 = vrot.lane.b32.xlu0 %v2119, 127
      %v2256 = vpop.permute.xlu0 %2255
      %2257 = vrot.lane.b32.xlu0 %v2120, 127
      %v2258 = vpop.permute.xlu0 %2257
      %2259 = vrot.lane.b32.xlu0 %v2121, 127
      %v2260 = vpop.permute.xlu0 %2259
      %2261 = vrot.lane.b32.xlu0 %v2122, 127
      %v2262 = vpop.permute.xlu0 %2261
      %2263 = vrot.lane.b32.xlu0 %v2123, 127
      %v2264 = vpop.permute.xlu0 %2263
      %2265 = vrot.lane.b32.xlu0 %v2124, 127
      %v2266 = vpop.permute.xlu0 %2265
      %2267 = vrot.lane.b32.xlu0 %v2125, 127
      %v2268 = vpop.permute.xlu0 %2267
      %2269 = vrot.lane.b32.xlu0 %v2126, 127
      %v2270 = vpop.permute.xlu0 %2269
      %2271 = vrot.lane.b32.xlu0 %v2127, 127
      %v2272 = vpop.permute.xlu0 %2271
      %2273 = vrot.lane.b32.xlu0 %v2128, 127
      %v2274 = vpop.permute.xlu0 %2273
      %vm2275 = vcmask 1039360
      %v2276 = vsel %vm2275, %v2240, %v2242
      %v2277 = vsel %vm2275, %v2242, %v2244
      %v2278 = vsel %vm2275, %v2244, %v2246
      %v2279 = vsel %vm2275, %v2246, %v2248
      %v2280 = vsel %vm2275, %v2248, %v2250
      %v2281 = vsel %vm2275, %v2250, %v2252
      %v2282 = vsel %vm2275, %v2252, %v2254
      %v2283 = vsel %vm2275, %v2254, %v2256
      %v2284 = vsel %vm2275, %v2256, %v2258
      %v2285 = vsel %vm2275, %v2258, %v2260
      %v2286 = vsel %vm2275, %v2260, %v2262
      %v2287 = vsel %vm2275, %v2262, %v2264
      %v2288 = vsel %vm2275, %v2264, %v2266
      %v2289 = vsel %vm2275, %v2266, %v2268
      %v2290 = vsel %vm2275, %v2268, %v2270
      %v2291 = vsel %vm2275, %v2270, %v2272
      %v2292 = vsel %vm2275, %v2272, %v2274
      %v2312 = vsel %vm2275, %v2274, %v2240
      %v2313 = vsel %vm317, 0.0, %v2276
      %v2314 = vsel %vm318, 0.0, %v2277
      %v2315 = vsel %vm319, 0.0, %v2278
      %v2316 = vsel %vm320, 0.0, %v2279
      %v2317 = vsel %vm321, 0.0, %v2280
      %v2318 = vsel %vm322, 0.0, %v2281
      %v2319 = vsel %vm323, 0.0, %v2282
      %v2320 = vsel %vm324, 0.0, %v2283
      %v2321 = vsel %vm325, 0.0, %v2284
      %v2322 = vsel %vm326, 0.0, %v2285
      %v2323 = vsel %vm327, 0.0, %v2286
      %v2324 = vsel %vm328, 0.0, %v2287
      %v2325 = vsel %vm329, 0.0, %v2288
      %v2326 = vsel %vm330, 0.0, %v2289
      %v2327 = vsel %vm331, 0.0, %v2290
      %v2328 = vsel %vm332, 0.0, %v2291
      %v2329 = vsel %vm333, 0.0, %v2292
      %v2330 = vsel %vm334, 0.0, %v2312
      %v2331 = vpack.c.bf16 %v2222, %v2221
      %v2332 = vpack.c.bf16 %v2223, %v2222
      %v2333 = vpack.c.bf16 %v2224, %v2223
      %v2334 = vpack.c.bf16 %v2225, %v2224
      %v2335 = vpack.c.bf16 %v2226, %v2225
      %v2336 = vpack.c.bf16 %v2227, %v2226
      %v2337 = vpack.c.bf16 %v2228, %v2227
      %v2338 = vpack.c.bf16 %v2229, %v2228
      %v2339 = vpack.c.bf16 %v2230, %v2229
      %v2340 = vpack.c.bf16 %v2231, %v2230
      %v2341 = vpack.c.bf16 %v2232, %v2231
      %v2342 = vpack.c.bf16 %v2233, %v2232
      %v2343 = vpack.c.bf16 %v2234, %v2233
      %v2344 = vpack.c.bf16 %v2235, %v2234
      %v2345 = vpack.c.bf16 %v2236, %v2235
      %v2346 = vpack.c.bf16 %v2237, %v2236
      %v2363 = vunpack.c.l.b16 %v2331
      %v2364 = vunpack.c.l.b16 %v2332
      %v2365 = vunpack.c.l.b16 %v2333
      %v2366 = vunpack.c.l.b16 %v2334
      %v2367 = vunpack.c.l.b16 %v2335
      %v2368 = vunpack.c.l.b16 %v2336
      %v2369 = vunpack.c.l.b16 %v2337
      %v2370 = vunpack.c.l.b16 %v2338
      %v2371 = vunpack.c.l.b16 %v2339
      %v2372 = vunpack.c.l.b16 %v2340
      %v2373 = vunpack.c.l.b16 %v2341
      %v2374 = vunpack.c.l.b16 %v2342
      %v2375 = vunpack.c.l.b16 %v2343
      %v2376 = vunpack.c.l.b16 %v2344
      %v2377 = vunpack.c.l.b16 %v2345
      %v2378 = vunpack.c.l.b16 %v2346
      %v2379 = vunpack.c.h.b16 %v2331
      %v2380 = vunpack.c.h.b16 %v2332
      %v2381 = vunpack.c.h.b16 %v2333
      %v2382 = vunpack.c.h.b16 %v2334
      %v2383 = vunpack.c.h.b16 %v2335
      %v2384 = vunpack.c.h.b16 %v2336
      %v2385 = vunpack.c.h.b16 %v2337
      %v2386 = vunpack.c.h.b16 %v2338
      %v2387 = vunpack.c.h.b16 %v2339
      %v2388 = vunpack.c.h.b16 %v2340
      %v2389 = vunpack.c.h.b16 %v2341
      %v2390 = vunpack.c.h.b16 %v2342
      %v2391 = vunpack.c.h.b16 %v2343
      %v2392 = vunpack.c.h.b16 %v2344
      %v2393 = vunpack.c.h.b16 %v2345
      %v2394 = vunpack.c.h.b16 %v2346
      %v2395 = vpack.c.b16 %v2364, %v2363
      %v2396 = vpack.c.b16 %v2366, %v2365
      %v2397 = vpack.c.b16 %v2368, %v2367
      %v2398 = vpack.c.b16 %v2370, %v2369
      %v2399 = vpack.c.b16 %v2372, %v2371
      %v2400 = vpack.c.b16 %v2374, %v2373
      %v2401 = vpack.c.b16 %v2376, %v2375
      %v2402 = vpack.c.b16 %v2378, %v2377
      %v2403 = vpack.c.b16 %v2380, %v2379
      %v2404 = vpack.c.b16 %v2382, %v2381
      %v2405 = vpack.c.b16 %v2384, %v2383
      %v2406 = vpack.c.b16 %v2386, %v2385
      %v2407 = vpack.c.b16 %v2388, %v2387
      %v2408 = vpack.c.b16 %v2390, %v2389
      %v2409 = vpack.c.b16 %v2392, %v2391
      %v2410 = vpack.c.b16 %v2394, %v2393
      %2427 = vst [vmem:[#allocation2] sm:$0xff] %v2395
      %2428 = vst [vmem:[#allocation2 + $0x8] sm:$0xff] %v2396
      %2429 = vst [vmem:[#allocation2 + $0x10] sm:$0xff] %v2397
      %2430 = vst [vmem:[#allocation2 + $0x18] sm:$0xff] %v2398
      %2431 = vst [vmem:[#allocation2 + $0x20] sm:$0xff] %v2399
      %2432 = vst [vmem:[#allocation2 + $0x28] sm:$0xff] %v2400
      %2433 = vst [vmem:[#allocation2 + $0x30] sm:$0xff] %v2401
      %2434 = vst [vmem:[#allocation2 + $0x38] sm:$0xff] %v2402
      %2435 = vst [vmem:[#allocation2 + $0x40] sm:$0xff] %v2403
      %2436 = vst [vmem:[#allocation2 + $0x48] sm:$0xff] %v2404
      %2437 = vst [vmem:[#allocation2 + $0x50] sm:$0xff] %v2405
      %2438 = vst [vmem:[#allocation2 + $0x58] sm:$0xff] %v2406
      %2439 = vst [vmem:[#allocation2 + $0x60] sm:$0xff] %v2407
      %2440 = vst [vmem:[#allocation2 + $0x68] sm:$0xff] %v2408
      %2441 = vst [vmem:[#allocation2 + $0x70] sm:$0xff] %v2409
      %2442 = vst [vmem:[#allocation2 + $0x78] sm:$0xff] %v2410
      %v2443 = vpack.c.bf16 %v2111, %v2223
      %v2444 = vpack.c.bf16 %v2112, %v2224
      %v2445 = vpack.c.bf16 %v2113, %v2225
      %v2446 = vpack.c.bf16 %v2114, %v2226
      %v2447 = vpack.c.bf16 %v2115, %v2227
      %v2448 = vpack.c.bf16 %v2116, %v2228
      %v2449 = vpack.c.bf16 %v2117, %v2229
      %v2450 = vpack.c.bf16 %v2118, %v2230
      %v2451 = vpack.c.bf16 %v2119, %v2231
      %v2452 = vpack.c.bf16 %v2120, %v2232
      %v2453 = vpack.c.bf16 %v2121, %v2233
      %v2454 = vpack.c.bf16 %v2122, %v2234
      %v2455 = vpack.c.bf16 %v2123, %v2235
      %v2456 = vpack.c.bf16 %v2124, %v2236
      %v2457 = vpack.c.bf16 %v2125, %v2237
      %v2458 = vpack.c.bf16 %v2126, %v2238
      %v2475 = vunpack.c.l.b16 %v2443
      %v2476 = vunpack.c.l.b16 %v2444
      %v2477 = vunpack.c.l.b16 %v2445
      %v2478 = vunpack.c.l.b16 %v2446
      %v2479 = vunpack.c.l.b16 %v2447
      %v2480 = vunpack.c.l.b16 %v2448
      %v2481 = vunpack.c.l.b16 %v2449
      %v2482 = vunpack.c.l.b16 %v2450
      %v2483 = vunpack.c.l.b16 %v2451
      %v2484 = vunpack.c.l.b16 %v2452
      %v2485 = vunpack.c.l.b16 %v2453
      %v2486 = vunpack.c.l.b16 %v2454
      %v2487 = vunpack.c.l.b16 %v2455
      %v2488 = vunpack.c.l.b16 %v2456
      %v2489 = vunpack.c.l.b16 %v2457
      %v2490 = vunpack.c.l.b16 %v2458
      %v2491 = vunpack.c.h.b16 %v2443
      %v2492 = vunpack.c.h.b16 %v2444
      %v2493 = vunpack.c.h.b16 %v2445
      %v2494 = vunpack.c.h.b16 %v2446
      %v2495 = vunpack.c.h.b16 %v2447
      %v2496 = vunpack.c.h.b16 %v2448
      %v2497 = vunpack.c.h.b16 %v2449
      %v2498 = vunpack.c.h.b16 %v2450
      %v2499 = vunpack.c.h.b16 %v2451
      %v2500 = vunpack.c.h.b16 %v2452
      %v2501 = vunpack.c.h.b16 %v2453
      %v2502 = vunpack.c.h.b16 %v2454
      %v2503 = vunpack.c.h.b16 %v2455
      %v2504 = vunpack.c.h.b16 %v2456
      %v2505 = vunpack.c.h.b16 %v2457
      %v2506 = vunpack.c.h.b16 %v2458
      %v2507 = vpack.c.b16 %v2476, %v2475
      %v2508 = vpack.c.b16 %v2478, %v2477
      %v2509 = vpack.c.b16 %v2480, %v2479
      %v2510 = vpack.c.b16 %v2482, %v2481
      %v2511 = vpack.c.b16 %v2484, %v2483
      %v2512 = vpack.c.b16 %v2486, %v2485
      %v2513 = vpack.c.b16 %v2488, %v2487
      %v2514 = vpack.c.b16 %v2490, %v2489
      %v2515 = vpack.c.b16 %v2492, %v2491
      %v2516 = vpack.c.b16 %v2494, %v2493
      %v2517 = vpack.c.b16 %v2496, %v2495
      %v2518 = vpack.c.b16 %v2498, %v2497
      %v2519 = vpack.c.b16 %v2500, %v2499
      %v2520 = vpack.c.b16 %v2502, %v2501
      %v2521 = vpack.c.b16 %v2504, %v2503
      %v2522 = vpack.c.b16 %v2506, %v2505
      %2539 = vst [vmem:[#allocation2 + $0x80] sm:$0xff] %v2507
      %2540 = vst [vmem:[#allocation2 + $0x88] sm:$0xff] %v2508
      %2541 = vst [vmem:[#allocation2 + $0x90] sm:$0xff] %v2509
      %2542 = vst [vmem:[#allocation2 + $0x98] sm:$0xff] %v2510
      %2543 = vst [vmem:[#allocation2 + $0xa0] sm:$0xff] %v2511
      %2544 = vst [vmem:[#allocation2 + $0xa8] sm:$0xff] %v2512
      %2545 = vst [vmem:[#allocation2 + $0xb0] sm:$0xff] %v2513
      %2546 = vst [vmem:[#allocation2 + $0xb8] sm:$0xff] %v2514
      %2547 = vst [vmem:[#allocation2 + $0xc0] sm:$0xff] %v2515
      %2548 = vst [vmem:[#allocation2 + $0xc8] sm:$0xff] %v2516
      %2549 = vst [vmem:[#allocation2 + $0xd0] sm:$0xff] %v2517
      %2550 = vst [vmem:[#allocation2 + $0xd8] sm:$0xff] %v2518
      %2551 = vst [vmem:[#allocation2 + $0xe0] sm:$0xff] %v2519
      %2552 = vst [vmem:[#allocation2 + $0xe8] sm:$0xff] %v2520
      %2553 = vst [vmem:[#allocation2 + $0xf0] sm:$0xff] %v2521
      %2554 = vst [vmem:[#allocation2 + $0xf8] sm:$0xff] %v2522
      %v2555 = vpack.c.bf16 %v2113, %v2112
      %v2556 = vpack.c.bf16 %v2114, %v2113
      %v2557 = vpack.c.bf16 %v2115, %v2114
      %v2558 = vpack.c.bf16 %v2116, %v2115
      %v2559 = vpack.c.bf16 %v2117, %v2116
      %v2560 = vpack.c.bf16 %v2118, %v2117
      %v2561 = vpack.c.bf16 %v2119, %v2118
      %v2562 = vpack.c.bf16 %v2120, %v2119
      %v2563 = vpack.c.bf16 %v2121, %v2120
      %v2564 = vpack.c.bf16 %v2122, %v2121
      %v2565 = vpack.c.bf16 %v2123, %v2122
      %v2566 = vpack.c.bf16 %v2124, %v2123
      %v2567 = vpack.c.bf16 %v2125, %v2124
      %v2568 = vpack.c.bf16 %v2126, %v2125
      %v2569 = vpack.c.bf16 %v2127, %v2126
      %v2570 = vpack.c.bf16 %v2128, %v2127
      %v2587 = vunpack.c.l.b16 %v2555
      %v2588 = vunpack.c.l.b16 %v2556
      %v2589 = vunpack.c.l.b16 %v2557
      %v2590 = vunpack.c.l.b16 %v2558
      %v2591 = vunpack.c.l.b16 %v2559
      %v2592 = vunpack.c.l.b16 %v2560
      %v2593 = vunpack.c.l.b16 %v2561
      %v2594 = vunpack.c.l.b16 %v2562
      %v2595 = vunpack.c.l.b16 %v2563
      %v2596 = vunpack.c.l.b16 %v2564
      %v2597 = vunpack.c.l.b16 %v2565
      %v2598 = vunpack.c.l.b16 %v2566
      %v2599 = vunpack.c.l.b16 %v2567
      %v2600 = vunpack.c.l.b16 %v2568
      %v2601 = vunpack.c.l.b16 %v2569
      %v2602 = vunpack.c.l.b16 %v2570
      %v2603 = vunpack.c.h.b16 %v2555
      %v2604 = vunpack.c.h.b16 %v2556
      %v2605 = vunpack.c.h.b16 %v2557
      %v2606 = vunpack.c.h.b16 %v2558
      %v2607 = vunpack.c.h.b16 %v2559
      %v2608 = vunpack.c.h.b16 %v2560
      %v2609 = vunpack.c.h.b16 %v2561
      %v2610 = vunpack.c.h.b16 %v2562
      %v2611 = vunpack.c.h.b16 %v2563
      %v2612 = vunpack.c.h.b16 %v2564
      %v2613 = vunpack.c.h.b16 %v2565
      %v2614 = vunpack.c.h.b16 %v2566
      %v2615 = vunpack.c.h.b16 %v2567
      %v2616 = vunpack.c.h.b16 %v2568
      %v2617 = vunpack.c.h.b16 %v2569
      %v2618 = vunpack.c.h.b16 %v2570
      %v2619 = vpack.c.b16 %v2588, %v2587
      %v2620 = vpack.c.b16 %v2590, %v2589
      %v2621 = vpack.c.b16 %v2592, %v2591
      %v2622 = vpack.c.b16 %v2594, %v2593
      %v2623 = vpack.c.b16 %v2596, %v2595
      %v2624 = vpack.c.b16 %v2598, %v2597
      %v2625 = vpack.c.b16 %v2600, %v2599
      %v2626 = vpack.c.b16 %v2602, %v2601
      %v2627 = vpack.c.b16 %v2604, %v2603
      %v2628 = vpack.c.b16 %v2606, %v2605
      %v2629 = vpack.c.b16 %v2608, %v2607
      %v2630 = vpack.c.b16 %v2610, %v2609
      %v2631 = vpack.c.b16 %v2612, %v2611
      %v2632 = vpack.c.b16 %v2614, %v2613
      %v2633 = vpack.c.b16 %v2616, %v2615
      %v2634 = vpack.c.b16 %v2618, %v2617
      %2651 = vst [vmem:[#allocation2 + $0x100] sm:$0xff] %v2619
      %2652 = vst [vmem:[#allocation2 + $0x108] sm:$0xff] %v2620
      %2653 = vst [vmem:[#allocation2 + $0x110] sm:$0xff] %v2621
      %2654 = vst [vmem:[#allocation2 + $0x118] sm:$0xff] %v2622
      %2655 = vst [vmem:[#allocation2 + $0x120] sm:$0xff] %v2623
      %2656 = vst [vmem:[#allocation2 + $0x128] sm:$0xff] %v2624
      %2657 = vst [vmem:[#allocation2 + $0x130] sm:$0xff] %v2625
      %2658 = vst [vmem:[#allocation2 + $0x138] sm:$0xff] %v2626
      %2659 = vst [vmem:[#allocation2 + $0x140] sm:$0xff] %v2627
      %2660 = vst [vmem:[#allocation2 + $0x148] sm:$0xff] %v2628
      %2661 = vst [vmem:[#allocation2 + $0x150] sm:$0xff] %v2629
      %2662 = vst [vmem:[#allocation2 + $0x158] sm:$0xff] %v2630
      %2663 = vst [vmem:[#allocation2 + $0x160] sm:$0xff] %v2631
      %2664 = vst [vmem:[#allocation2 + $0x168] sm:$0xff] %v2632
      %2665 = vst [vmem:[#allocation2 + $0x170] sm:$0xff] %v2633
      %2666 = vst [vmem:[#allocation2 + $0x178] sm:$0xff] %v2634
      %v2667 = vpack.c.bf16 %v2314, %v2313
      %v2668 = vpack.c.bf16 %v2315, %v2314
      %v2669 = vpack.c.bf16 %v2316, %v2315
      %v2670 = vpack.c.bf16 %v2317, %v2316
      %v2671 = vpack.c.bf16 %v2318, %v2317
      %v2672 = vpack.c.bf16 %v2319, %v2318
      %v2673 = vpack.c.bf16 %v2320, %v2319
      %v2674 = vpack.c.bf16 %v2321, %v2320
      %v2675 = vpack.c.bf16 %v2322, %v2321
      %v2676 = vpack.c.bf16 %v2323, %v2322
      %v2677 = vpack.c.bf16 %v2324, %v2323
      %v2678 = vpack.c.bf16 %v2325, %v2324
      %v2679 = vpack.c.bf16 %v2326, %v2325
      %v2680 = vpack.c.bf16 %v2327, %v2326
      %v2681 = vpack.c.bf16 %v2328, %v2327
      %v2682 = vpack.c.bf16 %v2329, %v2328
      %v2699 = vunpack.c.l.b16 %v2667
      %v2700 = vunpack.c.l.b16 %v2668
      %v2701 = vunpack.c.l.b16 %v2669
      %v2702 = vunpack.c.l.b16 %v2670
      %v2703 = vunpack.c.l.b16 %v2671
      %v2704 = vunpack.c.l.b16 %v2672
      %v2705 = vunpack.c.l.b16 %v2673
      %v2706 = vunpack.c.l.b16 %v2674
      %v2707 = vunpack.c.l.b16 %v2675
      %v2708 = vunpack.c.l.b16 %v2676
      %v2709 = vunpack.c.l.b16 %v2677
      %v2710 = vunpack.c.l.b16 %v2678
      %v2711 = vunpack.c.l.b16 %v2679
      %v2712 = vunpack.c.l.b16 %v2680
      %v2713 = vunpack.c.l.b16 %v2681
      %v2714 = vunpack.c.l.b16 %v2682
      %v2715 = vunpack.c.h.b16 %v2667
      %v2716 = vunpack.c.h.b16 %v2668
      %v2717 = vunpack.c.h.b16 %v2669
      %v2718 = vunpack.c.h.b16 %v2670
      %v2719 = vunpack.c.h.b16 %v2671
      %v2720 = vunpack.c.h.b16 %v2672
      %v2721 = vunpack.c.h.b16 %v2673
      %v2722 = vunpack.c.h.b16 %v2674
      %v2723 = vunpack.c.h.b16 %v2675
      %v2724 = vunpack.c.h.b16 %v2676
      %v2725 = vunpack.c.h.b16 %v2677
      %v2726 = vunpack.c.h.b16 %v2678
      %v2727 = vunpack.c.h.b16 %v2679
      %v2728 = vunpack.c.h.b16 %v2680
      %v2729 = vunpack.c.h.b16 %v2681
      %v2730 = vunpack.c.h.b16 %v2682
      %v2731 = vpack.c.b16 %v2700, %v2699
      %v2732 = vpack.c.b16 %v2702, %v2701
      %v2733 = vpack.c.b16 %v2704, %v2703
      %v2734 = vpack.c.b16 %v2706, %v2705
      %v2735 = vpack.c.b16 %v2708, %v2707
      %v2736 = vpack.c.b16 %v2710, %v2709
      %v2737 = vpack.c.b16 %v2712, %v2711
      %v2738 = vpack.c.b16 %v2714, %v2713
      %v2739 = vpack.c.b16 %v2716, %v2715
      %v2740 = vpack.c.b16 %v2718, %v2717
      %v2741 = vpack.c.b16 %v2720, %v2719
      %v2742 = vpack.c.b16 %v2722, %v2721
      %v2743 = vpack.c.b16 %v2724, %v2723
      %v2744 = vpack.c.b16 %v2726, %v2725
      %v2745 = vpack.c.b16 %v2728, %v2727
      %v2746 = vpack.c.b16 %v2730, %v2729
      %2763 = vst [vmem:[#allocation2 + $0x180] sm:$0xff] %v2731
      %2764 = vst [vmem:[#allocation2 + $0x188] sm:$0xff] %v2732
      %2765 = vst [vmem:[#allocation2 + $0x190] sm:$0xff] %v2733
      %2766 = vst [vmem:[#allocation2 + $0x198] sm:$0xff] %v2734
      %2767 = vst [vmem:[#allocation2 + $0x1a0] sm:$0xff] %v2735
      %2768 = vst [vmem:[#allocation2 + $0x1a8] sm:$0xff] %v2736
      %2769 = vst [vmem:[#allocation2 + $0x1b0] sm:$0xff] %v2737
      %2770 = vst [vmem:[#allocation2 + $0x1b8] sm:$0xff] %v2738
      %2771 = vst [vmem:[#allocation2 + $0x1c0] sm:$0xff] %v2739
      %2772 = vst [vmem:[#allocation2 + $0x1c8] sm:$0xff] %v2740
      %2773 = vst [vmem:[#allocation2 + $0x1d0] sm:$0xff] %v2741
      %2774 = vst [vmem:[#allocation2 + $0x1d8] sm:$0xff] %v2742
      %2775 = vst [vmem:[#allocation2 + $0x1e0] sm:$0xff] %v2743
      %2776 = vst [vmem:[#allocation2 + $0x1e8] sm:$0xff] %v2744
      %2777 = vst [vmem:[#allocation2 + $0x1f0] sm:$0xff] %v2745
      %2778 = vst [vmem:[#allocation2 + $0x1f8] sm:$0xff] %v2746
      %v2779 = vpack.c.bf16 %v2315, %v2315
      %v2780 = vpack.c.bf16 %v2316, %v2316
      %v2781 = vpack.c.bf16 %v2317, %v2317
      %v2782 = vpack.c.bf16 %v2318, %v2318
      %v2783 = vpack.c.bf16 %v2319, %v2319
      %v2784 = vpack.c.bf16 %v2320, %v2320
      %v2785 = vpack.c.bf16 %v2321, %v2321
      %v2786 = vpack.c.bf16 %v2322, %v2322
      %v2787 = vpack.c.bf16 %v2323, %v2323
      %v2788 = vpack.c.bf16 %v2324, %v2324
      %v2789 = vpack.c.bf16 %v2325, %v2325
      %v2790 = vpack.c.bf16 %v2326, %v2326
      %v2791 = vpack.c.bf16 %v2327, %v2327
      %v2792 = vpack.c.bf16 %v2328, %v2328
      %v2793 = vpack.c.bf16 %v2329, %v2329
      %v2794 = vpack.c.bf16 %v2330, %v2330
      %v2811 = vunpack.c.l.b16 %v2779
      %v2812 = vunpack.c.l.b16 %v2780
      %v2813 = vunpack.c.l.b16 %v2781
      %v2814 = vunpack.c.l.b16 %v2782
      %v2815 = vunpack.c.l.b16 %v2783
      %v2816 = vunpack.c.l.b16 %v2784
      %v2817 = vunpack.c.l.b16 %v2785
      %v2818 = vunpack.c.l.b16 %v2786
      %v2819 = vunpack.c.l.b16 %v2787
      %v2820 = vunpack.c.l.b16 %v2788
      %v2821 = vunpack.c.l.b16 %v2789
      %v2822 = vunpack.c.l.b16 %v2790
      %v2823 = vunpack.c.l.b16 %v2791
      %v2824 = vunpack.c.l.b16 %v2792
      %v2825 = vunpack.c.l.b16 %v2793
      %v2826 = vunpack.c.l.b16 %v2794
      %v2827 = vpack.c.b16 %v2812, %v2811
      %v2828 = vpack.c.b16 %v2814, %v2813
      %v2829 = vpack.c.b16 %v2816, %v2815
      %v2830 = vpack.c.b16 %v2818, %v2817
      %v2831 = vpack.c.b16 %v2820, %v2819
      %v2832 = vpack.c.b16 %v2822, %v2821
      %v2833 = vpack.c.b16 %v2824, %v2823
      %v2834 = vpack.c.b16 %v2826, %v2825
      %2843 = vst [vmem:[#allocation2 + $0x200] sm:$0xff] %v2827
      %2844 = vst [vmem:[#allocation2 + $0x208] sm:$0xff] %v2828
      %2845 = vst [vmem:[#allocation2 + $0x210] sm:$0xff] %v2829
      %2846 = vst [vmem:[#allocation2 + $0x218] sm:$0xff] %v2830
      %2847 = vst [vmem:[#allocation2 + $0x220] sm:$0xff] %v2831
      %2848 = vst [vmem:[#allocation2 + $0x228] sm:$0xff] %v2832
      %2849 = vst [vmem:[#allocation2 + $0x230] sm:$0xff] %v2833
      %2850 = vst [vmem:[#allocation2 + $0x238] sm:$0xff] %v2834
      %v2851 = vld [vmem:[#allocation2] sm:$0xff]
      %v2852 = vld [vmem:[#allocation2 + $0x8] sm:$0xff]
      %v2853 = vld [vmem:[#allocation2 + $0x10] sm:$0xff]
      %v2854 = vld [vmem:[#allocation2 + $0x18] sm:$0xff]
      %v2855 = vld [vmem:[#allocation2 + $0x20] sm:$0xff]
      %v2856 = vld [vmem:[#allocation2 + $0x28] sm:$0xff]
      %v2857 = vld [vmem:[#allocation2 + $0x30] sm:$0xff]
      %v2858 = vld [vmem:[#allocation2 + $0x38] sm:$0xff]
      %v2859 = vld [vmem:[#allocation2 + $0x40] sm:$0xff]
      %v2860 = vld [vmem:[#allocation2 + $0x48] sm:$0xff]
      %v2861 = vld [vmem:[#allocation2 + $0x50] sm:$0xff]
      %v2862 = vld [vmem:[#allocation2 + $0x58] sm:$0xff]
      %v2863 = vld [vmem:[#allocation2 + $0x60] sm:$0xff]
      %v2864 = vld [vmem:[#allocation2 + $0x68] sm:$0xff]
      %v2865 = vld [vmem:[#allocation2 + $0x70] sm:$0xff]
      %v2866 = vld [vmem:[#allocation2 + $0x78] sm:$0xff]
      %v2867 = vld [vmem:[#allocation2 + $0x80] sm:$0xff]
      %v2868 = vld [vmem:[#allocation2 + $0x88] sm:$0xff]
      %v2869 = vld [vmem:[#allocation2 + $0x90] sm:$0xff]
      %v2870 = vld [vmem:[#allocation2 + $0x98] sm:$0xff]
      %v2871 = vld [vmem:[#allocation2 + $0xa0] sm:$0xff]
      %v2872 = vld [vmem:[#allocation2 + $0xa8] sm:$0xff]
      %v2873 = vld [vmem:[#allocation2 + $0xb0] sm:$0xff]
      %v2874 = vld [vmem:[#allocation2 + $0xb8] sm:$0xff]
      %v2875 = vld [vmem:[#allocation2 + $0xc0] sm:$0xff]
      %v2876 = vld [vmem:[#allocation2 + $0xc8] sm:$0xff]
      %v2877 = vld [vmem:[#allocation2 + $0xd0] sm:$0xff]
      %v2878 = vld [vmem:[#allocation2 + $0xd8] sm:$0xff]
      %v2879 = vld [vmem:[#allocation2 + $0xe0] sm:$0xff]
      %v2880 = vld [vmem:[#allocation2 + $0xe8] sm:$0xff]
      %v2881 = vld [vmem:[#allocation2 + $0xf0] sm:$0xff]
      %v2882 = vld [vmem:[#allocation2 + $0xf8] sm:$0xff]
      %v2883 = vld [vmem:[#allocation2 + $0x100] sm:$0xff]
      %v2884 = vld [vmem:[#allocation2 + $0x108] sm:$0xff]
      %v2885 = vld [vmem:[#allocation2 + $0x110] sm:$0xff]
      %v2886 = vld [vmem:[#allocation2 + $0x118] sm:$0xff]
      %v2887 = vld [vmem:[#allocation2 + $0x120] sm:$0xff]
      %v2888 = vld [vmem:[#allocation2 + $0x128] sm:$0xff]
      %v2889 = vld [vmem:[#allocation2 + $0x130] sm:$0xff]
      %v2890 = vld [vmem:[#allocation2 + $0x138] sm:$0xff]
      %v2891 = vld [vmem:[#allocation2 + $0x140] sm:$0xff]
      %v2892 = vld [vmem:[#allocation2 + $0x148] sm:$0xff]
      %v2893 = vld [vmem:[#allocation2 + $0x150] sm:$0xff]
      %v2894 = vld [vmem:[#allocation2 + $0x158] sm:$0xff]
      %v2895 = vld [vmem:[#allocation2 + $0x160] sm:$0xff]
      %v2896 = vld [vmem:[#allocation2 + $0x168] sm:$0xff]
      %v2897 = vld [vmem:[#allocation2 + $0x170] sm:$0xff]
      %v2898 = vld [vmem:[#allocation2 + $0x178] sm:$0xff]
      %v2899 = vld [vmem:[#allocation2 + $0x180] sm:$0xff]
      %v2900 = vld [vmem:[#allocation2 + $0x188] sm:$0xff]
      %v2901 = vld [vmem:[#allocation2 + $0x190] sm:$0xff]
      %v2902 = vld [vmem:[#allocation2 + $0x198] sm:$0xff]
      %v2903 = vld [vmem:[#allocation2 + $0x1a0] sm:$0xff]
      %v2904 = vld [vmem:[#allocation2 + $0x1a8] sm:$0xff]
      %v2905 = vld [vmem:[#allocation2 + $0x1b0] sm:$0xff]
      %v2906 = vld [vmem:[#allocation2 + $0x1b8] sm:$0xff]
      %v2907 = vld [vmem:[#allocation2 + $0x1c0] sm:$0xff]
      %v2908 = vld [vmem:[#allocation2 + $0x1c8] sm:$0xff]
      %v2909 = vld [vmem:[#allocation2 + $0x1d0] sm:$0xff]
      %v2910 = vld [vmem:[#allocation2 + $0x1d8] sm:$0xff]
      %v2911 = vld [vmem:[#allocation2 + $0x1e0] sm:$0xff]
      %v2912 = vld [vmem:[#allocation2 + $0x1e8] sm:$0xff]
      %v2913 = vld [vmem:[#allocation2 + $0x1f0] sm:$0xff]
      %v2914 = vld [vmem:[#allocation2 + $0x1f8] sm:$0xff]
      %v2915 = vld [vmem:[#allocation2 + $0x200] sm:$0xff]
      %v2916 = vld [vmem:[#allocation2 + $0x208] sm:$0xff]
      %v2917 = vld [vmem:[#allocation2 + $0x210] sm:$0xff]
      %v2918 = vld [vmem:[#allocation2 + $0x218] sm:$0xff]
      %v2919 = vld [vmem:[#allocation2 + $0x220] sm:$0xff]
      %v2920 = vld [vmem:[#allocation2 + $0x228] sm:$0xff]
      %v2921 = vld [vmem:[#allocation2 + $0x230] sm:$0xff]
      %v2922 = vld [vmem:[#allocation2 + $0x238] sm:$0xff]
      %2924 = vset.pattern.permute.xlu0 0
      %2925 = vperm.xlu0 %2924, %v337
      %v2926 = vpop.permute.xlu0 %2925
      %2929 = vset.pattern.permute.xlu0 0
      %2930 = vperm.xlu0 %2929, %v338
      %v2931 = vpop.permute.xlu0 %2930
      %v2935 = vunpack.c.l.b16 %v335
      %v2936 = vunpack.c.l.b16 %v336
      %v2937 = vpack.c.b16 %v2936, %v2935
      %v3010 = vunpack.c.l.b16 %v2851
      %v3011 = vunpack.c.h.b16 %v2851
      %v3012 = vunpack.c.l.b16 %v2852
      %v3013 = vunpack.c.h.b16 %v2852
      %v3014 = vunpack.c.l.b16 %v2853
      %v3015 = vunpack.c.h.b16 %v2853
      %v3016 = vunpack.c.l.b16 %v2854
      %v3017 = vunpack.c.h.b16 %v2854
      %v3018 = vunpack.c.l.b16 %v2855
      %v3019 = vunpack.c.h.b16 %v2855
      %v3020 = vunpack.c.l.b16 %v2856
      %v3021 = vunpack.c.h.b16 %v2856
      %v3022 = vunpack.c.l.b16 %v2857
      %v3023 = vunpack.c.h.b16 %v2857
      %v3024 = vunpack.c.l.b16 %v2858
      %v3025 = vunpack.c.h.b16 %v2858
      %v3026 = vunpack.c.l.b16 %v2859
      %v3027 = vunpack.c.h.b16 %v2859
      %v3028 = vunpack.c.l.b16 %v2860
      %v3029 = vunpack.c.h.b16 %v2860
      %v3030 = vunpack.c.l.b16 %v2861
      %v3031 = vunpack.c.h.b16 %v2861
      %v3032 = vunpack.c.l.b16 %v2862
      %v3033 = vunpack.c.h.b16 %v2862
      %v3034 = vunpack.c.l.b16 %v2863
      %v3035 = vunpack.c.h.b16 %v2863
      %v3036 = vunpack.c.l.b16 %v2864
      %v3037 = vunpack.c.h.b16 %v2864
      %v3038 = vunpack.c.l.b16 %v2865
      %v3039 = vunpack.c.h.b16 %v2865
      %v3040 = vunpack.c.l.b16 %v2866
      %v3041 = vunpack.c.h.b16 %v2866
      %v3042 = vunpack.c.l.b16 %v2867
      %v3043 = vunpack.c.h.b16 %v2867
      %v3044 = vunpack.c.l.b16 %v2868
      %v3045 = vunpack.c.h.b16 %v2868
      %v3046 = vunpack.c.l.b16 %v2869
      %v3047 = vunpack.c.h.b16 %v2869
      %v3048 = vunpack.c.l.b16 %v2870
      %v3049 = vunpack.c.h.b16 %v2870
      %v3050 = vunpack.c.l.b16 %v2871
      %v3051 = vunpack.c.h.b16 %v2871
      %v3052 = vunpack.c.l.b16 %v2872
      %v3053 = vunpack.c.h.b16 %v2872
      %v3054 = vunpack.c.l.b16 %v2873
      %v3055 = vunpack.c.h.b16 %v2873
      %v3056 = vunpack.c.l.b16 %v2874
      %v3057 = vunpack.c.h.b16 %v2874
      %v3058 = vunpack.c.l.b16 %v2875
      %v3059 = vunpack.c.h.b16 %v2875
      %v3060 = vunpack.c.l.b16 %v2876
      %v3061 = vunpack.c.h.b16 %v2876
      %v3062 = vunpack.c.l.b16 %v2877
      %v3063 = vunpack.c.h.b16 %v2877
      %v3064 = vunpack.c.l.b16 %v2878
      %v3065 = vunpack.c.h.b16 %v2878
      %v3066 = vunpack.c.l.b16 %v2879
      %v3067 = vunpack.c.h.b16 %v2879
      %v3068 = vunpack.c.l.b16 %v2880
      %v3069 = vunpack.c.h.b16 %v2880
      %v3070 = vunpack.c.l.b16 %v2881
      %v3071 = vunpack.c.h.b16 %v2881
      %v3072 = vunpack.c.l.b16 %v2882
      %v3073 = vunpack.c.h.b16 %v2882
      %v3074 = vunpack.c.l.b16 %v2883
      %v3075 = vunpack.c.h.b16 %v2883
      %v3076 = vunpack.c.l.b16 %v2884
      %v3077 = vunpack.c.h.b16 %v2884
      %v3078 = vunpack.c.l.b16 %v2885
      %v3079 = vunpack.c.h.b16 %v2885
      %v3080 = vunpack.c.l.b16 %v2886
      %v3081 = vunpack.c.h.b16 %v2886
      %v3082 = vunpack.c.l.b16 %v2887
      %v3083 = vunpack.c.h.b16 %v2887
      %v3084 = vunpack.c.l.b16 %v2888
      %v3085 = vunpack.c.h.b16 %v2888
      %v3086 = vunpack.c.l.b16 %v2889
      %v3087 = vunpack.c.h.b16 %v2889
      %v3088 = vunpack.c.l.b16 %v2890
      %v3089 = vunpack.c.h.b16 %v2890
      %v3090 = vunpack.c.l.b16 %v2891
      %v3091 = vunpack.c.h.b16 %v2891
      %v3092 = vunpack.c.l.b16 %v2892
      %v3093 = vunpack.c.h.b16 %v2892
      %v3094 = vunpack.c.l.b16 %v2893
      %v3095 = vunpack.c.h.b16 %v2893
      %v3096 = vunpack.c.l.b16 %v2894
      %v3097 = vunpack.c.h.b16 %v2894
      %v3098 = vunpack.c.l.b16 %v2895
      %v3099 = vunpack.c.h.b16 %v2895
      %v3100 = vunpack.c.l.b16 %v2896
      %v3101 = vunpack.c.h.b16 %v2896
      %v3102 = vunpack.c.l.b16 %v2897
      %v3103 = vunpack.c.h.b16 %v2897
      %v3104 = vunpack.c.l.b16 %v2898
      %v3105 = vunpack.c.h.b16 %v2898
      %v3106 = vunpack.c.l.b16 %v2899
      %v3107 = vunpack.c.h.b16 %v2899
      %v3108 = vunpack.c.l.b16 %v2900
      %v3109 = vunpack.c.h.b16 %v2900
      %v3110 = vunpack.c.l.b16 %v2901
      %v3111 = vunpack.c.h.b16 %v2901
      %v3112 = vunpack.c.l.b16 %v2902
      %v3113 = vunpack.c.h.b16 %v2902
      %v3114 = vunpack.c.l.b16 %v2903
      %v3115 = vunpack.c.h.b16 %v2903
      %v3116 = vunpack.c.l.b16 %v2904
      %v3117 = vunpack.c.h.b16 %v2904
      %v3118 = vunpack.c.l.b16 %v2905
      %v3119 = vunpack.c.h.b16 %v2905
      %v3120 = vunpack.c.l.b16 %v2906
      %v3121 = vunpack.c.h.b16 %v2906
      %v3122 = vunpack.c.l.b16 %v2907
      %v3123 = vunpack.c.h.b16 %v2907
      %v3124 = vunpack.c.l.b16 %v2908
      %v3125 = vunpack.c.h.b16 %v2908
      %v3126 = vunpack.c.l.b16 %v2909
      %v3127 = vunpack.c.h.b16 %v2909
      %v3128 = vunpack.c.l.b16 %v2910
      %v3129 = vunpack.c.h.b16 %v2910
      %v3130 = vunpack.c.l.b16 %v2911
      %v3131 = vunpack.c.h.b16 %v2911
      %v3132 = vunpack.c.l.b16 %v2912
      %v3133 = vunpack.c.h.b16 %v2912
      %v3134 = vunpack.c.l.b16 %v2913
      %v3135 = vunpack.c.h.b16 %v2913
      %v3136 = vunpack.c.l.b16 %v2914
      %v3137 = vunpack.c.h.b16 %v2914
      %v3138 = vunpack.c.l.b16 %v2915
      %v3139 = vunpack.c.h.b16 %v2915
      %v3140 = vunpack.c.l.b16 %v2916
      %v3141 = vunpack.c.h.b16 %v2916
      %v3142 = vunpack.c.l.b16 %v2917
      %v3143 = vunpack.c.h.b16 %v2917
      %v3144 = vunpack.c.l.b16 %v2918
      %v3145 = vunpack.c.h.b16 %v2918
      %v3146 = vunpack.c.l.b16 %v2919
      %v3147 = vunpack.c.h.b16 %v2919
      %v3148 = vunpack.c.l.b16 %v2920
      %v3149 = vunpack.c.h.b16 %v2920
      %v3150 = vunpack.c.l.b16 %v2921
      %v3151 = vunpack.c.h.b16 %v2921
      %v3152 = vunpack.c.l.b16 %v2922
      %v3153 = vunpack.c.h.b16 %v2922
      %v3154 = vpack.c.b16 %v3026, %v3010
      %v3155 = vpack.c.b16 %v3027, %v3011
      %v3156 = vpack.c.b16 %v3028, %v3012
      %v3157 = vpack.c.b16 %v3029, %v3013
      %v3158 = vpack.c.b16 %v3030, %v3014
      %v3159 = vpack.c.b16 %v3031, %v3015
      %v3160 = vpack.c.b16 %v3032, %v3016
      %v3161 = vpack.c.b16 %v3033, %v3017
      %v3162 = vpack.c.b16 %v3034, %v3018
      %v3163 = vpack.c.b16 %v3035, %v3019
      %v3164 = vpack.c.b16 %v3036, %v3020
      %v3165 = vpack.c.b16 %v3037, %v3021
      %v3166 = vpack.c.b16 %v3038, %v3022
      %v3167 = vpack.c.b16 %v3039, %v3023
      %v3168 = vpack.c.b16 %v3040, %v3024
      %v3169 = vpack.c.b16 %v3041, %v3025
      %v3170 = vpack.c.b16 %v3058, %v3042
      %v3171 = vpack.c.b16 %v3059, %v3043
      %v3172 = vpack.c.b16 %v3060, %v3044
      %v3173 = vpack.c.b16 %v3061, %v3045
      %v3174 = vpack.c.b16 %v3062, %v3046
      %v3175 = vpack.c.b16 %v3063, %v3047
      %v3176 = vpack.c.b16 %v3064, %v3048
      %v3177 = vpack.c.b16 %v3065, %v3049
      %v3178 = vpack.c.b16 %v3066, %v3050
      %v3179 = vpack.c.b16 %v3067, %v3051
      %v3180 = vpack.c.b16 %v3068, %v3052
      %v3181 = vpack.c.b16 %v3069, %v3053
      %v3182 = vpack.c.b16 %v3070, %v3054
      %v3183 = vpack.c.b16 %v3071, %v3055
      %v3184 = vpack.c.b16 %v3072, %v3056
      %v3185 = vpack.c.b16 %v3073, %v3057
      %v3186 = vpack.c.b16 %v3090, %v3074
      %v3187 = vpack.c.b16 %v3091, %v3075
      %v3188 = vpack.c.b16 %v3092, %v3076
      %v3189 = vpack.c.b16 %v3093, %v3077
      %v3190 = vpack.c.b16 %v3094, %v3078
      %v3191 = vpack.c.b16 %v3095, %v3079
      %v3192 = vpack.c.b16 %v3096, %v3080
      %v3193 = vpack.c.b16 %v3097, %v3081
      %v3194 = vpack.c.b16 %v3098, %v3082
      %v3195 = vpack.c.b16 %v3099, %v3083
      %v3196 = vpack.c.b16 %v3100, %v3084
      %v3197 = vpack.c.b16 %v3101, %v3085
      %v3198 = vpack.c.b16 %v3102, %v3086
      %v3199 = vpack.c.b16 %v3103, %v3087
      %v3200 = vpack.c.b16 %v3104, %v3088
      %v3201 = vpack.c.b16 %v3105, %v3089
      %v3202 = vpack.c.b16 %v3122, %v3106
      %v3203 = vpack.c.b16 %v3123, %v3107
      %v3204 = vpack.c.b16 %v3124, %v3108
      %v3205 = vpack.c.b16 %v3125, %v3109
      %v3206 = vpack.c.b16 %v3126, %v3110
      %v3207 = vpack.c.b16 %v3127, %v3111
      %v3208 = vpack.c.b16 %v3128, %v3112
      %v3209 = vpack.c.b16 %v3129, %v3113
      %v3210 = vpack.c.b16 %v3130, %v3114
      %v3211 = vpack.c.b16 %v3131, %v3115
      %v3212 = vpack.c.b16 %v3132, %v3116
      %v3213 = vpack.c.b16 %v3133, %v3117
      %v3214 = vpack.c.b16 %v3134, %v3118
      %v3215 = vpack.c.b16 %v3135, %v3119
      %v3216 = vpack.c.b16 %v3136, %v3120
      %v3217 = vpack.c.b16 %v3137, %v3121
      %v3218 = vpack.c.b16 %v3138, %v3138
      %v3219 = vpack.c.b16 %v3139, %v3139
      %v3220 = vpack.c.b16 %v3140, %v3140
      %v3221 = vpack.c.b16 %v3141, %v3141
      %v3222 = vpack.c.b16 %v3142, %v3142
      %v3223 = vpack.c.b16 %v3143, %v3143
      %v3224 = vpack.c.b16 %v3144, %v3144
      %v3225 = vpack.c.b16 %v3145, %v3145
      %v3226 = vpack.c.b16 %v3146, %v3146
      %v3227 = vpack.c.b16 %v3147, %v3147
      %v3228 = vpack.c.b16 %v3148, %v3148
      %v3229 = vpack.c.b16 %v3149, %v3149
      %v3230 = vpack.c.b16 %v3150, %v3150
      %v3231 = vpack.c.b16 %v3151, %v3151
      %v3232 = vpack.c.b16 %v3152, %v3152
      %v3233 = vpack.c.b16 %v3153, %v3153
      %vm3298 = vcmask 588800
      %v3300 = vsel %vm3298, %v2937, 0
      %vm3302 = vcmask 1043456
      %v3304 = vsel %vm3302, %v3218, 0
      %v3307 = vsel %vm3302, %v3219, 0
      %v3310 = vsel %vm3302, %v3220, 0
      %v3313 = vsel %vm3302, %v3221, 0
      %v3316 = vsel %vm3302, %v3222, 0
      %v3319 = vsel %vm3302, %v3223, 0
      %v3322 = vsel %vm3302, %v3224, 0
      %v3325 = vsel %vm3302, %v3225, 0
      %v3328 = vsel %vm3302, %v3226, 0
      %v3331 = vsel %vm3302, %v3227, 0
      %v3334 = vsel %vm3302, %v3228, 0
      %v3337 = vsel %vm3302, %v3229, 0
      %v3340 = vsel %vm3302, %v3230, 0
      %v3343 = vsel %vm3302, %v3231, 0
      %v3346 = vsel %vm3302, %v3232, 0
      %v3349 = vsel %vm3302, %v3233, 0
      %3351 = vmatprep.subr.bf16.mxu0 0
      %3352 = vmatpush1.bf16.msra.mxu0 0
      %3353 = vmatprep.subr.bf16.mxu0 0
      %3354 = vmatpush1.bf16.msra.mxu0 0
      %3355 = vmatprep.subr.bf16.mxu0 0
      %3356 = vmatpush1.bf16.msra.mxu0 0
      %3357 = vmatprep.subr.bf16.mxu0 %v3307
      %3358 = vmatpush1.bf16.msra.mxu0 %v3304
      %3359 = vmatprep.subr.bf16.mxu0 %v3203
      %3360 = vmatpush1.bf16.msra.mxu0 %v3202
      %3361 = vmatprep.subr.bf16.mxu0 %v3187
      %3362 = vmatpush1.bf16.msra.mxu0 %v3186
      %3363 = vmatprep.subr.bf16.mxu0 %v3171
      %3364 = vmatpush1.bf16.msra.mxu0 %v3170
      %3365 = vmatprep.subr.bf16.mxu0 %v3155
      %3366 = vmatpush1.bf16.msra.mxu0 %v3154
      %3367 = vmatprep.subr.bf16.mxu0 0
      %3368 = vmatpush2.bf16.msra.mxu0 0
      %3369 = vmatprep.subr.bf16.mxu0 0
      %3370 = vmatpush2.bf16.msra.mxu0 0
      %3371 = vmatprep.subr.bf16.mxu0 0
      %3372 = vmatpush2.bf16.msra.mxu0 0
      %3373 = vmatprep.subr.bf16.mxu0 0
      %3374 = vmatpush2.bf16.msra.mxu0 0
      %3375 = vmatprep.subr.bf16.mxu0 0
      %3376 = vmatpush2.bf16.msra.mxu0 0
      %3377 = vmatprep.subr.bf16.mxu0 0
      %3378 = vmatpush2.bf16.msra.mxu0 0
      %3379 = vmatprep.subr.bf16.mxu0 0
      %3380 = vmatpush2.bf16.msra.mxu0 0
      %3381 = vmatprep.subr.bf16.mxu0 0
      %3382 = vmatpush2.bf16.msra.mxu0 0
      %3383 = vmatprep.mubr.bf16.mxu0 0
      %3384 = vmatmul.mubr.bf16.gmra.mxu0 %v3300
      %v3385 = vpop.f32.mrf.mxu0
      %v3386 = vadd.f32 %v2926, %v3385
      %v3387 = vpop.f32.mrf.mxu0
      %v3388 = vadd.f32 %v2926, %v3387
      %v3389 = vpop.f32.mrf.mxu0
      %v3390 = vadd.f32 %v2931, %v3389
      %v3391 = vpop.f32.mrf.mxu0
      %v3392 = vadd.f32 %v2931, %v3391
      %3393 = vdwg.mxu0
      %3394 = vmatprep.subr.bf16.mxu0 0
      %3395 = vmatpush1.bf16.msra.mxu0 0
      %3396 = vmatprep.subr.bf16.mxu0 0
      %3397 = vmatpush1.bf16.msra.mxu0 0
      %3398 = vmatprep.subr.bf16.mxu0 0
      %3399 = vmatpush1.bf16.msra.mxu0 0
      %3400 = vmatprep.subr.bf16.mxu0 %v3313
      %3401 = vmatpush1.bf16.msra.mxu0 %v3310
      %3402 = vmatprep.subr.bf16.mxu0 %v3205
      %3403 = vmatpush1.bf16.msra.mxu0 %v3204
      %3404 = vmatprep.subr.bf16.mxu0 %v3189
      %3405 = vmatpush1.bf16.msra.mxu0 %v3188
      %3406 = vmatprep.subr.bf16.mxu0 %v3173
      %3407 = vmatpush1.bf16.msra.mxu0 %v3172
      %3408 = vmatprep.subr.bf16.mxu0 %v3157
      %3409 = vmatpush1.bf16.msra.mxu0 %v3156
      %3410 = vmatprep.subr.bf16.mxu0 0
      %3411 = vmatpush2.bf16.msra.mxu0 0
      %3412 = vmatprep.subr.bf16.mxu0 0
      %3413 = vmatpush2.bf16.msra.mxu0 0
      %3414 = vmatprep.subr.bf16.mxu0 0
      %3415 = vmatpush2.bf16.msra.mxu0 0
      %3416 = vmatprep.subr.bf16.mxu0 0
      %3417 = vmatpush2.bf16.msra.mxu0 0
      %3418 = vmatprep.subr.bf16.mxu0 0
      %3419 = vmatpush2.bf16.msra.mxu0 0
      %3420 = vmatprep.subr.bf16.mxu0 0
      %3421 = vmatpush2.bf16.msra.mxu0 0
      %3422 = vmatprep.subr.bf16.mxu0 0
      %3423 = vmatpush2.bf16.msra.mxu0 0
      %3424 = vmatprep.subr.bf16.mxu0 0
      %3425 = vmatpush2.bf16.msra.mxu0 0
      %3426 = vmatprep.mubr.bf16.mxu0 0
      %3427 = vmatmul.mubr.bf16.gmra.mxu0 %v3300
      %v3428 = vpop.f32.mrf.mxu0
      %v3429 = vadd.f32 %v2926, %v3428
      %v3430 = vpop.f32.mrf.mxu0
      %v3431 = vadd.f32 %v2926, %v3430
      %v3432 = vpop.f32.mrf.mxu0
      %v3433 = vadd.f32 %v2931, %v3432
      %v3434 = vpop.f32.mrf.mxu0
      %v3435 = vadd.f32 %v2931, %v3434
      %3436 = vdwg.mxu0
      %3437 = vmatprep.subr.bf16.mxu0 0
      %3438 = vmatpush1.bf16.msra.mxu0 0
      %3439 = vmatprep.subr.bf16.mxu0 0
      %3440 = vmatpush1.bf16.msra.mxu0 0
      %3441 = vmatprep.subr.bf16.mxu0 0
      %3442 = vmatpush1.bf16.msra.mxu0 0
      %3443 = vmatprep.subr.bf16.mxu0 %v3319
      %3444 = vmatpush1.bf16.msra.mxu0 %v3316
      %3445 = vmatprep.subr.bf16.mxu0 %v3207
      %3446 = vmatpush1.bf16.msra.mxu0 %v3206
      %3447 = vmatprep.subr.bf16.mxu0 %v3191
      %3448 = vmatpush1.bf16.msra.mxu0 %v3190
      %3449 = vmatprep.subr.bf16.mxu0 %v3175
      %3450 = vmatpush1.bf16.msra.mxu0 %v3174
      %3451 = vmatprep.subr.bf16.mxu0 %v3159
      %3452 = vmatpush1.bf16.msra.mxu0 %v3158
      %3453 = vmatprep.subr.bf16.mxu0 0
      %3454 = vmatpush2.bf16.msra.mxu0 0
      %3455 = vmatprep.subr.bf16.mxu0 0
      %3456 = vmatpush2.bf16.msra.mxu0 0
      %3457 = vmatprep.subr.bf16.mxu0 0
      %3458 = vmatpush2.bf16.msra.mxu0 0
      %3459 = vmatprep.subr.bf16.mxu0 0
      %3460 = vmatpush2.bf16.msra.mxu0 0
      %3461 = vmatprep.subr.bf16.mxu0 0
      %3462 = vmatpush2.bf16.msra.mxu0 0
      %3463 = vmatprep.subr.bf16.mxu0 0
      %3464 = vmatpush2.bf16.msra.mxu0 0
      %3465 = vmatprep.subr.bf16.mxu0 0
      %3466 = vmatpush2.bf16.msra.mxu0 0
      %3467 = vmatprep.subr.bf16.mxu0 0
      %3468 = vmatpush2.bf16.msra.mxu0 0
      %3469 = vmatprep.mubr.bf16.mxu0 0
      %3470 = vmatmul.mubr.bf16.gmra.mxu0 %v3300
      %v3471 = vpop.f32.mrf.mxu0
      %v3472 = vadd.f32 %v2926, %v3471
      %v3473 = vpop.f32.mrf.mxu0
      %v3474 = vadd.f32 %v2926, %v3473
      %v3475 = vpop.f32.mrf.mxu0
      %v3476 = vadd.f32 %v2931, %v3475
      %v3477 = vpop.f32.mrf.mxu0
      %v3478 = vadd.f32 %v2931, %v3477
      %3479 = vdwg.mxu0
      %3480 = vmatprep.subr.bf16.mxu0 0
      %3481 = vmatpush1.bf16.msra.mxu0 0
      %3482 = vmatprep.subr.bf16.mxu0 0
      %3483 = vmatpush1.bf16.msra.mxu0 0
      %3484 = vmatprep.subr.bf16.mxu0 0
      %3485 = vmatpush1.bf16.msra.mxu0 0
      %3486 = vmatprep.subr.bf16.mxu0 %v3325
      %3487 = vmatpush1.bf16.msra.mxu0 %v3322
      %3488 = vmatprep.subr.bf16.mxu0 %v3209
      %3489 = vmatpush1.bf16.msra.mxu0 %v3208
      %3490 = vmatprep.subr.bf16.mxu0 %v3193
      %3491 = vmatpush1.bf16.msra.mxu0 %v3192
      %3492 = vmatprep.subr.bf16.mxu0 %v3177
      %3493 = vmatpush1.bf16.msra.mxu0 %v3176
      %3494 = vmatprep.subr.bf16.mxu0 %v3161
      %3495 = vmatpush1.bf16.msra.mxu0 %v3160
      %3496 = vmatprep.subr.bf16.mxu0 0
      %3497 = vmatpush2.bf16.msra.mxu0 0
      %3498 = vmatprep.subr.bf16.mxu0 0
      %3499 = vmatpush2.bf16.msra.mxu0 0
      %3500 = vmatprep.subr.bf16.mxu0 0
      %3501 = vmatpush2.bf16.msra.mxu0 0
      %3502 = vmatprep.subr.bf16.mxu0 0
      %3503 = vmatpush2.bf16.msra.mxu0 0
      %3504 = vmatprep.subr.bf16.mxu0 0
      %3505 = vmatpush2.bf16.msra.mxu0 0
      %3506 = vmatprep.subr.bf16.mxu0 0
      %3507 = vmatpush2.bf16.msra.mxu0 0
      %3508 = vmatprep.subr.bf16.mxu0 0
      %3509 = vmatpush2.bf16.msra.mxu0 0
      %3510 = vmatprep.subr.bf16.mxu0 0
      %3511 = vmatpush2.bf16.msra.mxu0 0
      %3512 = vmatprep.mubr.bf16.mxu0 0
      %3513 = vmatmul.mubr.bf16.gmra.mxu0 %v3300
      %v3514 = vpop.f32.mrf.mxu0
      %v3515 = vadd.f32 %v2926, %v3514
      %v3516 = vpop.f32.mrf.mxu0
      %v3517 = vadd.f32 %v2926, %v3516
      %v3518 = vpop.f32.mrf.mxu0
      %v3519 = vadd.f32 %v2931, %v3518
      %v3520 = vpop.f32.mrf.mxu0
      %v3521 = vadd.f32 %v2931, %v3520
      %3522 = vdwg.mxu0
      %3523 = vmatprep.subr.bf16.mxu0 0
      %3524 = vmatpush1.bf16.msra.mxu0 0
      %3525 = vmatprep.subr.bf16.mxu0 0
      %3526 = vmatpush1.bf16.msra.mxu0 0
      %3527 = vmatprep.subr.bf16.mxu0 0
      %3528 = vmatpush1.bf16.msra.mxu0 0
      %3529 = vmatprep.subr.bf16.mxu0 %v3331
      %3530 = vmatpush1.bf16.msra.mxu0 %v3328
      %3531 = vmatprep.subr.bf16.mxu0 %v3211
      %3532 = vmatpush1.bf16.msra.mxu0 %v3210
      %3533 = vmatprep.subr.bf16.mxu0 %v3195
      %3534 = vmatpush1.bf16.msra.mxu0 %v3194
      %3535 = vmatprep.subr.bf16.mxu0 %v3179
      %3536 = vmatpush1.bf16.msra.mxu0 %v3178
      %3537 = vmatprep.subr.bf16.mxu0 %v3163
      %3538 = vmatpush1.bf16.msra.mxu0 %v3162
      %3539 = vmatprep.subr.bf16.mxu0 0
      %3540 = vmatpush2.bf16.msra.mxu0 0
      %3541 = vmatprep.subr.bf16.mxu0 0
      %3542 = vmatpush2.bf16.msra.mxu0 0
      %3543 = vmatprep.subr.bf16.mxu0 0
      %3544 = vmatpush2.bf16.msra.mxu0 0
      %3545 = vmatprep.subr.bf16.mxu0 0
      %3546 = vmatpush2.bf16.msra.mxu0 0
      %3547 = vmatprep.subr.bf16.mxu0 0
      %3548 = vmatpush2.bf16.msra.mxu0 0
      %3549 = vmatprep.subr.bf16.mxu0 0
      %3550 = vmatpush2.bf16.msra.mxu0 0
      %3551 = vmatprep.subr.bf16.mxu0 0
      %3552 = vmatpush2.bf16.msra.mxu0 0
      %3553 = vmatprep.subr.bf16.mxu0 0
      %3554 = vmatpush2.bf16.msra.mxu0 0
      %3555 = vmatprep.mubr.bf16.mxu0 0
      %3556 = vmatmul.mubr.bf16.gmra.mxu0 %v3300
      %v3557 = vpop.f32.mrf.mxu0
      %v3558 = vadd.f32 %v2926, %v3557
      %v3559 = vpop.f32.mrf.mxu0
      %v3560 = vadd.f32 %v2926, %v3559
      %v3561 = vpop.f32.mrf.mxu0
      %v3562 = vadd.f32 %v2931, %v3561
      %v3563 = vpop.f32.mrf.mxu0
      %v3564 = vadd.f32 %v2931, %v3563
      %3565 = vdwg.mxu0
      %3566 = vmatprep.subr.bf16.mxu0 0
      %3567 = vmatpush1.bf16.msra.mxu0 0
      %3568 = vmatprep.subr.bf16.mxu0 0
      %3569 = vmatpush1.bf16.msra.mxu0 0
      %3570 = vmatprep.subr.bf16.mxu0 0
      %3571 = vmatpush1.bf16.msra.mxu0 0
      %3572 = vmatprep.subr.bf16.mxu0 %v3337
      %3573 = vmatpush1.bf16.msra.mxu0 %v3334
      %3574 = vmatprep.subr.bf16.mxu0 %v3213
      %3575 = vmatpush1.bf16.msra.mxu0 %v3212
      %3576 = vmatprep.subr.bf16.mxu0 %v3197
      %3577 = vmatpush1.bf16.msra.mxu0 %v3196
      %3578 = vmatprep.subr.bf16.mxu0 %v3181
      %3579 = vmatpush1.bf16.msra.mxu0 %v3180
      %3580 = vmatprep.subr.bf16.mxu0 %v3165
      %3581 = vmatpush1.bf16.msra.mxu0 %v3164
      %3582 = vmatprep.subr.bf16.mxu0 0
      %3583 = vmatpush2.bf16.msra.mxu0 0
      %3584 = vmatprep.subr.bf16.mxu0 0
      %3585 = vmatpush2.bf16.msra.mxu0 0
      %3586 = vmatprep.subr.bf16.mxu0 0
      %3587 = vmatpush2.bf16.msra.mxu0 0
      %3588 = vmatprep.subr.bf16.mxu0 0
      %3589 = vmatpush2.bf16.msra.mxu0 0
      %3590 = vmatprep.subr.bf16.mxu0 0
      %3591 = vmatpush2.bf16.msra.mxu0 0
      %3592 = vmatprep.subr.bf16.mxu0 0
      %3593 = vmatpush2.bf16.msra.mxu0 0
      %3594 = vmatprep.subr.bf16.mxu0 0
      %3595 = vmatpush2.bf16.msra.mxu0 0
      %3596 = vmatprep.subr.bf16.mxu0 0
      %3597 = vmatpush2.bf16.msra.mxu0 0
      %3598 = vmatprep.mubr.bf16.mxu0 0
      %3599 = vmatmul.mubr.bf16.gmra.mxu0 %v3300
      %v3600 = vpop.f32.mrf.mxu0
      %v3601 = vadd.f32 %v2926, %v3600
      %v3602 = vpop.f32.mrf.mxu0
      %v3603 = vadd.f32 %v2926, %v3602
      %v3604 = vpop.f32.mrf.mxu0
      %v3605 = vadd.f32 %v2931, %v3604
      %v3606 = vpop.f32.mrf.mxu0
      %v3607 = vadd.f32 %v2931, %v3606
      %3608 = vdwg.mxu0
      %3609 = vmatprep.subr.bf16.mxu0 0
      %3610 = vmatpush1.bf16.msra.mxu0 0
      %3611 = vmatprep.subr.bf16.mxu0 0
      %3612 = vmatpush1.bf16.msra.mxu0 0
      %3613 = vmatprep.subr.bf16.mxu0 0
      %3614 = vmatpush1.bf16.msra.mxu0 0
      %3615 = vmatprep.subr.bf16.mxu0 %v3343
      %3616 = vmatpush1.bf16.msra.mxu0 %v3340
      %3617 = vmatprep.subr.bf16.mxu0 %v3215
      %3618 = vmatpush1.bf16.msra.mxu0 %v3214
      %3619 = vmatprep.subr.bf16.mxu0 %v3199
      %3620 = vmatpush1.bf16.msra.mxu0 %v3198
      %3621 = vmatprep.subr.bf16.mxu0 %v3183
      %3622 = vmatpush1.bf16.msra.mxu0 %v3182
      %3623 = vmatprep.subr.bf16.mxu0 %v3167
      %3624 = vmatpush1.bf16.msra.mxu0 %v3166
      %3625 = vmatprep.subr.bf16.mxu0 0
      %3626 = vmatpush2.bf16.msra.mxu0 0
      %3627 = vmatprep.subr.bf16.mxu0 0
      %3628 = vmatpush2.bf16.msra.mxu0 0
      %3629 = vmatprep.subr.bf16.mxu0 0
      %3630 = vmatpush2.bf16.msra.mxu0 0
      %3631 = vmatprep.subr.bf16.mxu0 0
      %3632 = vmatpush2.bf16.msra.mxu0 0
      %3633 = vmatprep.subr.bf16.mxu0 0
      %3634 = vmatpush2.bf16.msra.mxu0 0
      %3635 = vmatprep.subr.bf16.mxu0 0
      %3636 = vmatpush2.bf16.msra.mxu0 0
      %3637 = vmatprep.subr.bf16.mxu0 0
      %3638 = vmatpush2.bf16.msra.mxu0 0
      %3639 = vmatprep.subr.bf16.mxu0 0
      %3640 = vmatpush2.bf16.msra.mxu0 0
      %3641 = vmatprep.mubr.bf16.mxu0 0
      %3642 = vmatmul.mubr.bf16.gmra.mxu0 %v3300
      %v3643 = vpop.f32.mrf.mxu0
      %v3644 = vadd.f32 %v2926, %v3643
      %v3645 = vpop.f32.mrf.mxu0
      %v3646 = vadd.f32 %v2926, %v3645
      %v3647 = vpop.f32.mrf.mxu0
      %v3648 = vadd.f32 %v2931, %v3647
      %v3649 = vpop.f32.mrf.mxu0
      %v3650 = vadd.f32 %v2931, %v3649
      %3651 = vdwg.mxu0
      %3652 = vmatprep.subr.bf16.mxu0 0
      %3653 = vmatpush1.bf16.msra.mxu0 0
      %3654 = vmatprep.subr.bf16.mxu0 0
      %3655 = vmatpush1.bf16.msra.mxu0 0
      %3656 = vmatprep.subr.bf16.mxu0 0
      %3657 = vmatpush1.bf16.msra.mxu0 0
      %3658 = vmatprep.subr.bf16.mxu0 %v3349
      %3659 = vmatpush1.bf16.msra.mxu0 %v3346
      %3660 = vmatprep.subr.bf16.mxu0 %v3217
      %3661 = vmatpush1.bf16.msra.mxu0 %v3216
      %3662 = vmatprep.subr.bf16.mxu0 %v3201
      %3663 = vmatpush1.bf16.msra.mxu0 %v3200
      %3664 = vmatprep.subr.bf16.mxu0 %v3185
      %3665 = vmatpush1.bf16.msra.mxu0 %v3184
      %3666 = vmatprep.subr.bf16.mxu0 %v3169
      %3667 = vmatpush1.bf16.msra.mxu0 %v3168
      %3668 = vmatprep.subr.bf16.mxu0 0
      %3669 = vmatpush2.bf16.msra.mxu0 0
      %3670 = vmatprep.subr.bf16.mxu0 0
      %3671 = vmatpush2.bf16.msra.mxu0 0
      %3672 = vmatprep.subr.bf16.mxu0 0
      %3673 = vmatpush2.bf16.msra.mxu0 0
      %3674 = vmatprep.subr.bf16.mxu0 0
      %3675 = vmatpush2.bf16.msra.mxu0 0
      %3676 = vmatprep.subr.bf16.mxu0 0
      %3677 = vmatpush2.bf16.msra.mxu0 0
      %3678 = vmatprep.subr.bf16.mxu0 0
      %3679 = vmatpush2.bf16.msra.mxu0 0
      %3680 = vmatprep.subr.bf16.mxu0 0
      %3681 = vmatpush2.bf16.msra.mxu0 0
      %3682 = vmatprep.subr.bf16.mxu0 0
      %3683 = vmatpush2.bf16.msra.mxu0 0
      %3684 = vmatprep.mubr.bf16.mxu0 0
      %3685 = vmatmul.mubr.bf16.gmra.mxu0 %v3300
      %v3686 = vpop.f32.mrf.mxu0
      %v3687 = vadd.f32 %v2926, %v3686
      %v3688 = vpop.f32.mrf.mxu0
      %v3689 = vadd.f32 %v2926, %v3688
      %v3690 = vpop.f32.mrf.mxu0
      %v3691 = vadd.f32 %v2931, %v3690
      %v3692 = vpop.f32.mrf.mxu0
      %v3693 = vadd.f32 %v2931, %v3692
      %3694 = vdwg.mxu0
      %v3695 = vmax.f32 %v3386, 0.0
      %v3696 = vmax.f32 %v3388, 0.0
      %v3697 = vmax.f32 %v3429, 0.0
      %v3698 = vmax.f32 %v3431, 0.0
      %v3699 = vmax.f32 %v3472, 0.0
      %v3700 = vmax.f32 %v3474, 0.0
      %v3701 = vmax.f32 %v3515, 0.0
      %v3702 = vmax.f32 %v3517, 0.0
      %v3703 = vmax.f32 %v3558, 0.0
      %v3704 = vmax.f32 %v3560, 0.0
      %v3705 = vmax.f32 %v3601, 0.0
      %v3706 = vmax.f32 %v3603, 0.0
      %v3707 = vmax.f32 %v3644, 0.0
      %v3708 = vmax.f32 %v3646, 0.0
      %v3709 = vmax.f32 %v3687, 0.0
      %v3710 = vmax.f32 %v3689, 0.0
      %v3711 = vmax.f32 %v3390, 0.0
      %v3712 = vmax.f32 %v3392, 0.0
      %v3713 = vmax.f32 %v3433, 0.0
      %v3714 = vmax.f32 %v3435, 0.0
      %v3715 = vmax.f32 %v3476, 0.0
      %v3716 = vmax.f32 %v3478, 0.0
      %v3717 = vmax.f32 %v3519, 0.0
      %v3718 = vmax.f32 %v3521, 0.0
      %v3719 = vmax.f32 %v3562, 0.0
      %v3720 = vmax.f32 %v3564, 0.0
      %v3721 = vmax.f32 %v3605, 0.0
      %v3722 = vmax.f32 %v3607, 0.0
      %v3723 = vmax.f32 %v3648, 0.0
      %v3724 = vmax.f32 %v3650, 0.0
      %v3725 = vmax.f32 %v3691, 0.0
      %v3726 = vmax.f32 %v3693, 0.0
      %s3727 = smul.addr %s2106, 4
      %s3728 = scalar_lea.vmem [#allocation9], %s3727
      %v3729 = vld [vmem:[%s3728] sm:$0xff]
      %v3730 = vld [vmem:[%s3728 + $0x8] sm:$0xff]
      %v3731 = vld [vmem:[%s3728 + $0x10] sm:$0xff]
      %v3732 = vld [vmem:[%s3728 + $0x18] sm:$0xff]
      %v3733 = vld [vmem:[%s3728 + $0x20] sm:$0xff]
      %v3734 = vld [vmem:[%s3728 + $0x28] sm:$0xff]
      %v3735 = vld [vmem:[%s3728 + $0x30] sm:$0xff]
      %v3736 = vld [vmem:[%s3728 + $0x38] sm:$0xff]
      %v3737 = vld [vmem:[%s3728 + $0x200] sm:$0xff]
      %v3738 = vld [vmem:[%s3728 + $0x208] sm:$0xff]
      %v3739 = vld [vmem:[%s3728 + $0x210] sm:$0xff]
      %v3740 = vld [vmem:[%s3728 + $0x218] sm:$0xff]
      %v3741 = vld [vmem:[%s3728 + $0x220] sm:$0xff]
      %v3742 = vld [vmem:[%s3728 + $0x228] sm:$0xff]
      %v3743 = vld [vmem:[%s3728 + $0x230] sm:$0xff]
      %v3744 = vld [vmem:[%s3728 + $0x238] sm:$0xff]
      %v3745 = vunpack.c.l.bf16 %v3729
      %v3746 = vunpack.c.h.bf16 %v3729
      %v3747 = vunpack.c.l.bf16 %v3730
      %v3748 = vunpack.c.h.bf16 %v3730
      %v3749 = vunpack.c.l.bf16 %v3731
      %v3750 = vunpack.c.h.bf16 %v3731
      %v3751 = vunpack.c.l.bf16 %v3732
      %v3752 = vunpack.c.h.bf16 %v3732
      %v3753 = vunpack.c.l.bf16 %v3733
      %v3754 = vunpack.c.h.bf16 %v3733
      %v3755 = vunpack.c.l.bf16 %v3734
      %v3756 = vunpack.c.h.bf16 %v3734
      %v3757 = vunpack.c.l.bf16 %v3735
      %v3758 = vunpack.c.h.bf16 %v3735
      %v3759 = vunpack.c.l.bf16 %v3736
      %v3760 = vunpack.c.h.bf16 %v3736
      %v3761 = vunpack.c.l.bf16 %v3737
      %v3762 = vunpack.c.h.bf16 %v3737
      %v3763 = vunpack.c.l.bf16 %v3738
      %v3764 = vunpack.c.h.bf16 %v3738
      %v3765 = vunpack.c.l.bf16 %v3739
      %v3766 = vunpack.c.h.bf16 %v3739
      %v3767 = vunpack.c.l.bf16 %v3740
      %v3768 = vunpack.c.h.bf16 %v3740
      %v3769 = vunpack.c.l.bf16 %v3741
      %v3770 = vunpack.c.h.bf16 %v3741
      %v3771 = vunpack.c.l.bf16 %v3742
      %v3772 = vunpack.c.h.bf16 %v3742
      %v3773 = vunpack.c.l.bf16 %v3743
      %v3774 = vunpack.c.h.bf16 %v3743
      %v3775 = vunpack.c.l.bf16 %v3744
      %v3776 = vunpack.c.h.bf16 %v3744
      %v3777 = vmul.f32 %v3695, %v3745
      %v3778 = vmul.f32 %v3696, %v3746
      %v3779 = vmul.f32 %v3697, %v3747
      %v3780 = vmul.f32 %v3698, %v3748
      %v3781 = vmul.f32 %v3699, %v3749
      %v3782 = vmul.f32 %v3700, %v3750
      %v3783 = vmul.f32 %v3701, %v3751
      %v3784 = vmul.f32 %v3702, %v3752
      %v3785 = vmul.f32 %v3703, %v3753
      %v3786 = vmul.f32 %v3704, %v3754
      %v3787 = vmul.f32 %v3705, %v3755
      %v3788 = vmul.f32 %v3706, %v3756
      %v3789 = vmul.f32 %v3707, %v3757
      %v3790 = vmul.f32 %v3708, %v3758
      %v3791 = vmul.f32 %v3709, %v3759
      %v3792 = vmul.f32 %v3710, %v3760
      %v3793 = vmul.f32 %v3711, %v3761
      %v3794 = vmul.f32 %v3712, %v3762
      %v3795 = vmul.f32 %v3713, %v3763
      %v3796 = vmul.f32 %v3714, %v3764
      %v3797 = vmul.f32 %v3715, %v3765
      %v3798 = vmul.f32 %v3716, %v3766
      %v3799 = vmul.f32 %v3717, %v3767
      %v3800 = vmul.f32 %v3718, %v3768
      %v3801 = vmul.f32 %v3719, %v3769
      %v3802 = vmul.f32 %v3720, %v3770
      %v3803 = vmul.f32 %v3721, %v3771
      %v3804 = vmul.f32 %v3722, %v3772
      %v3805 = vmul.f32 %v3723, %v3773
      %v3806 = vmul.f32 %v3724, %v3774
      %v3807 = vmul.f32 %v3725, %v3775
      %v3808 = vmul.f32 %v3726, %v3776
      %v3809 = vadd.f32 %v3777, %v3778
      %v3810 = vadd.f32 %v3809, %v3779
      %v3811 = vadd.f32 %v3810, %v3780
      %v3812 = vadd.f32 %v3811, %v3781
      %v3813 = vadd.f32 %v3812, %v3782
      %v3814 = vadd.f32 %v3813, %v3783
      %v3815 = vadd.f32 %v3814, %v3784
      %v3816 = vadd.f32 %v3815, %v3785
      %v3817 = vadd.f32 %v3816, %v3786
      %v3818 = vadd.f32 %v3817, %v3787
      %v3819 = vadd.f32 %v3818, %v3788
      %v3820 = vadd.f32 %v3819, %v3789
      %v3821 = vadd.f32 %v3820, %v3790
      %v3822 = vadd.f32 %v3821, %v3791
      %v3823 = vadd.f32 %v3822, %v3792
      %3824 = vadd.xlane.f32.xlu0 %v3823
      %v3825 = vpop.xlane.xlu0 %3824
      %v3826 = vadd.f32 %v3793, %v3794
      %v3827 = vadd.f32 %v3826, %v3795
      %v3828 = vadd.f32 %v3827, %v3796
      %v3829 = vadd.f32 %v3828, %v3797
      %v3830 = vadd.f32 %v3829, %v3798
      %v3831 = vadd.f32 %v3830, %v3799
      %v3832 = vadd.f32 %v3831, %v3800
      %v3833 = vadd.f32 %v3832, %v3801
      %v3834 = vadd.f32 %v3833, %v3802
      %v3835 = vadd.f32 %v3834, %v3803
      %v3836 = vadd.f32 %v3835, %v3804
      %v3837 = vadd.f32 %v3836, %v3805
      %v3838 = vadd.f32 %v3837, %v3806
      %v3839 = vadd.f32 %v3838, %v3807
      %v3840 = vadd.f32 %v3839, %v3808
      %3841 = vadd.xlane.f32.xlu0 %v3840
      %v3842 = vpop.xlane.xlu0 %3841
      %v3843 = vadd.f32 %v2103, %v3825
      %v3844 = vadd.f32 %v2104, %v3842
    $region45: #{tpu_custom_call.1} parent=1 // loop_footer
      %s2102 = sadd.s32 1, %s2098
    $region46: #{tpu_custom_call.1} parent=1 // loop_footer_branch
      %2097 = sbr.rel target = $region42
    $region47: #{tpu_custom_call.1} parent=1 // loop_exit
      _
    %v3845 = vadd.f32 %v2103, %v2104
    %v3846 = vrot.slane %v3845, 4
    %v3847 = vadd.f32 %v3845, %v3846
    %v3848 = vrot.slane %v3847, 2
    %v3849 = vadd.f32 %v3847, %v3848
    %v3850 = vrot.slane %v3849, 1
    %v3851 = vadd.f32 %v3849, %v3850
    %s3852 = sld [smem:[#allocation3]]
    %v3853 = vstv %s3852
    %v3854 = vadd.f32 %v3851, %v3853
    %s3855 = scalar_lea.vmem [#allocation10], 1
    %3856 = vst [vmem:[%s3855] sm:$0x1] %v3854
    // Predicated region
    $region48: #{tpu_custom_call.1} parent=1 // pred_check
      _
    $region49: #{tpu_custom_call.1} parent=1 // pred_check_branch
      %3858 = sbr.rel (0) target = $region51
    $region50: #{tpu_custom_call.1} parent=1 // pred_region
      %s3860 = ssub.s32 32, 32
      %3861 = vsyncadd [#allocation6], %s3860
      %s3862 = sshll.u32 [#allocation10], 4
      %s3863 = int_to_ptr.vmem [resolvable:$true] %s3862
      %3868 = dma.vmem_to_hbm [thread:$0]  %s3863, 32, %s5, [#allocation6], 16, 16, 1
    $region51: #{tpu_custom_call.1} parent=1 // pred_fallthru
      _
    // Predicated region
    $region52: #{tpu_custom_call.1} parent=1 // pred_check
      _
    $region53: #{tpu_custom_call.1} parent=1 // pred_check_branch
      %3870 = sbr.rel (0) target = $region55
    $region54: #{tpu_custom_call.1} parent=1 // pred_region
      %3871 = dma.done [#allocation6], 32
    $region55: #{tpu_custom_call.1} parent=1 // pred_fallthru
      _
    %3872 = vsyncpa [#allocation5], 1
    %3873 = vsyncpa [#allocation8], 1
    %3874 = vsyncpa [#allocation6], 1

</llo_original>
